<compile_context>
chip_gen: v6e
topology: v6e:2x2x1
jax: 0.10.0
libtpu: 0.0.40
codegen_flags: <defaults>
</compile_context>

<pallas_src>
import functools
import math

import jax
import jax.numpy as jnp
from jax.experimental import pallas as pl
from jax.experimental.pallas import tpu as pltpu


_VMEM_LIMIT = 64 * 1024 * 1024  # generous but <= physical on all of v5e/v6e/v7x


def _tile(dim, target, base):
    """Largest multiple of `base` that divides `dim` and is <= target, else `dim` (full)."""
    if dim <= target:
        return dim
    t = (target // base) * base
    while t >= base:
        if dim % t == 0:
            return t
        t -= base
    return dim


# --------------------------------------------------------------------------------------
# Pallas kernels
# --------------------------------------------------------------------------------------
def _linear_kernel(x_ref, w_ref, b_ref, o_ref, acc_ref, *, activation):
    """Tiled o = act(x @ w + b).  Grid = (M/tm, N/tn, K/tk); acc persists over k."""
    @pl.when(pl.program_id(2) == 0)
    def _():
        acc_ref[...] = jnp.zeros_like(acc_ref)

    acc_ref[...] += jnp.dot(
        x_ref[...].astype(jnp.bfloat16),
        w_ref[...].astype(jnp.bfloat16),
        preferred_element_type=jnp.float32,
    )

    @pl.when(pl.program_id(2) == pl.num_programs(2) - 1)
    def _():
        acc = acc_ref[...] + b_ref[...].astype(jnp.float32)
        if activation == "relu":
            acc = jnp.maximum(acc, 0.0)
        elif activation == "sigmoid":
            acc = jax.nn.sigmoid(acc)
        o_ref[...] = acc.astype(o_ref.dtype)


def linear(x, w, b, activation="none"):
    """x:(M,K) @ w:(K,N) + b:(N,) — weights stored as (in,out), i.e. PyTorch W^T."""
    M, K = x.shape
    N = w.shape[1]
    tm = _tile(M, 256, 8)
    tn = _tile(N, 256, 128)
    tk = _tile(K, 512, 128)
    return pl.pallas_call(
        functools.partial(_linear_kernel, activation=activation),
        out_shape=jax.ShapeDtypeStruct((M, N), jnp.float32),
        grid=(M // tm, N // tn, K // tk),
        in_specs=[
            pl.BlockSpec((tm, tk), lambda i, j, k: (i, k)),
            pl.BlockSpec((tk, tn), lambda i, j, k: (k, j)),
            pl.BlockSpec((1, tn), lambda i, j, k: (0, j)),
        ],
        out_specs=pl.BlockSpec((tm, tn), lambda i, j, k: (i, j)),
        scratch_shapes=[pltpu.VMEM((tm, tn), jnp.float32)],
        compiler_params=pltpu.CompilerParams(
            dimension_semantics=("parallel", "parallel", "arbitrary"),
            vmem_limit_bytes=_VMEM_LIMIT,
        ),
    )(x, w, b.reshape(1, N))


def _ffn_kernel(x_ref, w1_ref, b1_ref, w2_ref, b2_ref, o_ref, acc_ref):
    """Fused o = relu(x @ w1 + b1) @ w2 + b2, looping over the FF dimension.

    Grid = (M/tm, FF/tf).  The (tm, tf) hidden tile lives only in registers/VMEM.
    """
    f = pl.program_id(1)

    @pl.when(f == 0)
    def _():
        acc_ref[...] = jnp.zeros_like(acc_ref)

    h = jnp.dot(
        x_ref[...].astype(jnp.bfloat16),
        w1_ref[...].astype(jnp.bfloat16),
        preferred_element_type=jnp.float32,
    )
    h = jnp.maximum(h + b1_ref[...].astype(jnp.float32), 0.0)
    acc_ref[...] += jnp.dot(
        h.astype(jnp.bfloat16),
        w2_ref[...].astype(jnp.bfloat16),
        preferred_element_type=jnp.float32,
    )

    @pl.when(f == pl.num_programs(1) - 1)
    def _():
        o_ref[...] = (acc_ref[...] + b2_ref[...].astype(jnp.float32)).astype(o_ref.dtype)


def ffn(x, w1, b1, w2, b2):
    """x:(M,E) -> relu(x@w1+b1)@w2+b2 : (M,E) without materializing (M,FF) in HBM."""
    M, E = x.shape
    FF = w1.shape[1]
    tm = _tile(M, 256, 8)
    tf = _tile(FF, 256, 128)
    return pl.pallas_call(
        _ffn_kernel,
        out_shape=jax.ShapeDtypeStruct((M, E), jnp.float32),
        grid=(M // tm, FF // tf),
        in_specs=[
            pl.BlockSpec((tm, E), lambda i, f: (i, 0)),
            pl.BlockSpec((E, tf), lambda i, f: (0, f)),
            pl.BlockSpec((1, tf), lambda i, f: (0, f)),
            pl.BlockSpec((tf, E), lambda i, f: (f, 0)),
            pl.BlockSpec((1, E), lambda i, f: (0, 0)),
        ],
        out_specs=pl.BlockSpec((tm, E), lambda i, f: (i, 0)),
        scratch_shapes=[pltpu.VMEM((tm, E), jnp.float32)],
        compiler_params=pltpu.CompilerParams(
            dimension_semantics=("parallel", "arbitrary"),
            vmem_limit_bytes=_VMEM_LIMIT,
        ),
    )(x, w1, b1.reshape(1, FF), w2, b2.reshape(1, E))


def _ln_core(x, g_ref, b_ref, o_ref, eps):
    mean = jnp.mean(x, axis=-1, keepdims=True)
    xc = x - mean
    var = jnp.mean(xc * xc, axis=-1, keepdims=True)  # biased variance (PyTorch LN)
    y = xc * jax.lax.rsqrt(var + eps)
    o_ref[...] = (y * g_ref[...] + b_ref[...]).astype(o_ref.dtype)


def _add_layernorm_kernel(x_ref, r_ref, g_ref, b_ref, o_ref, *, eps):
    x = x_ref[...].astype(jnp.float32) + r_ref[...].astype(jnp.float32)
    _ln_core(x, g_ref, b_ref, o_ref, eps)


def _layernorm_kernel(x_ref, g_ref, b_ref, o_ref, *, eps):
    _ln_core(x_ref[...].astype(jnp.float32), g_ref, b_ref, o_ref, eps)


def add_layernorm(x, res, gamma, beta, eps=1e-5):
    """LayerNorm(x + res), tiled over rows."""
    M, E = x.shape
    tm = _tile(M, 512, 8)
    return pl.pallas_call(
        functools.partial(_add_layernorm_kernel, eps=eps),
        out_shape=jax.ShapeDtypeStruct((M, E), jnp.float32),
        grid=(M // tm,),
        in_specs=[
            pl.BlockSpec((tm, E), lambda i: (i, 0)),
            pl.BlockSpec((tm, E), lambda i: (i, 0)),
            pl.BlockSpec((1, E), lambda i: (0, 0)),
            pl.BlockSpec((1, E), lambda i: (0, 0)),
        ],
        out_specs=pl.BlockSpec((tm, E), lambda i: (i, 0)),
        compiler_params=pltpu.CompilerParams(
            dimension_semantics=("parallel",), vmem_limit_bytes=_VMEM_LIMIT),
    )(x, res, gamma.reshape(1, E), beta.reshape(1, E))


def layernorm(x, gamma, beta, eps=1e-5):
    """LayerNorm(x) — no residual stream read (final encoder/decoder norms)."""
    M, E = x.shape
    tm = _tile(M, 512, 8)
    return pl.pallas_call(
        functools.partial(_layernorm_kernel, eps=eps),
        out_shape=jax.ShapeDtypeStruct((M, E), jnp.float32),
        grid=(M // tm,),
        in_specs=[
            pl.BlockSpec((tm, E), lambda i: (i, 0)),
            pl.BlockSpec((1, E), lambda i: (0, 0)),
            pl.BlockSpec((1, E), lambda i: (0, 0)),
        ],
        out_specs=pl.BlockSpec((tm, E), lambda i: (i, 0)),
        compiler_params=pltpu.CompilerParams(
            dimension_semantics=("parallel",), vmem_limit_bytes=_VMEM_LIMIT),
    )(x, gamma.reshape(1, E), beta.reshape(1, E))


def _attention_kernel(q_ref, k_ref, v_ref, o_ref, *, scale, mask_kind, valid):
    """Per-(batch, head) fused softmax attention with in-kernel masks.

    q:(Sq,D) k,v:(Sk,D).  mask_kind in {"none", "causal", "keypad"}.
    """
    q = q_ref[...]
    k = k_ref[...]
    v = v_ref[...]
    # Contract last dims directly (no k.T / XLU transpose).
    s = jax.lax.dot_general(
        q.astype(jnp.bfloat16), k.astype(jnp.bfloat16),
        dimension_numbers=(((1,), (1,)), ((), ())),
        preferred_element_type=jnp.float32,
    ) * scale
    Sq, Sk = s.shape
    if mask_kind == "causal":
        qi = jax.lax.broadcasted_iota(jnp.int32, (Sq, Sk), 0)
        ki = jax.lax.broadcasted_iota(jnp.int32, (Sq, Sk), 1)
        s = jnp.where(ki > qi, -1e30, s)          # finite mask value (NaN-safe)
    elif mask_kind == "keypad":
        ki = jax.lax.broadcasted_iota(jnp.int32, (Sq, Sk), 1)
        s = jnp.where(ki >= valid, -1e30, s)
    s = s - jnp.max(s, axis=-1, keepdims=True)
    p = jnp.exp(s)
    denom = jnp.sum(p, axis=-1, keepdims=True)
    p = p * pl.reciprocal(denom, approx=True)     # EUP slot instead of VPU divide
    o = jnp.dot(p.astype(jnp.bfloat16), v.astype(jnp.bfloat16),
                preferred_element_type=jnp.float32)
    o_ref[...] = o.astype(o_ref.dtype)


def scaled_dot_attention(q, k, v, *, mask_kind, valid=0):
    """q:(B,H,Sq,D) k,v:(B,H,Sk,D) -> (B,H,Sq,D); grid over (batch, head), both parallel."""
    B, H, Sq, D = q.shape
    Sk = k.shape[2]
    scale = 1.0 / math.sqrt(D)
    # TODO(synk): for long src sequences (e.g. 400) switch to a flash-style Sq/Sk-tiled
    #             online softmax and pad D up to 128 for lane-dense stores.
    return pl.pallas_call(
        functools.partial(_attention_kernel, scale=scale, mask_kind=mask_kind, valid=valid),
        out_shape=jax.ShapeDtypeStruct((B, H, Sq, D), jnp.float32),
        grid=(B, H),
        in_specs=[
            pl.BlockSpec((None, None, Sq, D), lambda b, h: (b, h, 0, 0)),
            pl.BlockSpec((None, None, Sk, D), lambda b, h: (b, h, 0, 0)),
            pl.BlockSpec((None, None, Sk, D), lambda b, h: (b, h, 0, 0)),
        ],
        out_specs=pl.BlockSpec((None, None, Sq, D), lambda b, h: (b, h, 0, 0)),
        compiler_params=pltpu.CompilerParams(
            dimension_semantics=("parallel", "parallel"),
            vmem_limit_bytes=_VMEM_LIMIT,
        ),
    )(q, k, v)


# --------------------------------------------------------------------------------------
# Model glue (plain JAX): parameter plumbing, reshapes, gathers
# --------------------------------------------------------------------------------------
def multihead_attention(q_in, kv_in, p, *, mask_kind, valid, num_heads, fused_qkv):
    B, Sq, E = q_in.shape
    Sk = kv_in.shape[1]
    D = E // num_heads
    q2 = q_in.reshape(B * Sq, E)
    kv2 = kv_in.reshape(B * Sk, E)

    if fused_qkv:
        # Single (E, 3E) projection: one activation read, lane-dense output.
        wqkv = jnp.concatenate([p["wq"], p["wk"], p["wv"]], axis=1)
        bqkv = jnp.concatenate([p["bq"], p["bk"], p["bv"]], axis=0)
        qkv = linear(q2, wqkv, bqkv)
        q, k, v = qkv[:, :E], qkv[:, E:2 * E], qkv[:, 2 * E:]
    else:
        q = linear(q2, p["wq"], p["bq"])
        wkv = jnp.concatenate([p["wk"], p["wv"]], axis=1)
        bkv = jnp.concatenate([p["bk"], p["bv"]], axis=0)
        kv = linear(kv2, wkv, bkv)
        k, v = kv[:, :E], kv[:, E:]

    def to_heads(x, S):
        return x.reshape(B, S, num_heads, D).transpose(0, 2, 1, 3)

    oh = scaled_dot_attention(to_heads(q, Sq), to_heads(k, Sk), to_heads(v, Sk),
                              mask_kind=mask_kind, valid=valid)
    o = oh.transpose(0, 2, 1, 3).reshape(B * Sq, E)
    return linear(o, p["wo"], p["bo"]).reshape(B, Sq, E)


def encoder_layer(x, p, num_heads, valid):
    B, S, E = x.shape
    sa = multihead_attention(x, x, p["self_attn"], mask_kind="keypad", valid=valid,
                             num_heads=num_heads, fused_qkv=True)
    x = add_layernorm(x.reshape(-1, E), sa.reshape(-1, E), p["ln1_g"], p["ln1_b"]).reshape(B, S, E)
    ff = ffn(x.reshape(-1, E), p["w1"], p["b1"], p["w2"], p["b2"])
    x = add_layernorm(x.reshape(-1, E), ff, p["ln2_g"], p["ln2_b"]).reshape(B, S, E)
    return x


def decoder_layer(x, memory, p, num_heads):
    B, S, E = x.shape
    sa = multihead_attention(x, x, p["self_attn"], mask_kind="causal", valid=0,
                             num_heads=num_heads, fused_qkv=True)
    x = add_layernorm(x.reshape(-1, E), sa.reshape(-1, E), p["ln1_g"], p["ln1_b"]).reshape(B, S, E)
    ca = multihead_attention(x, memory, p["cross_attn"], mask_kind="none", valid=0,
                             num_heads=num_heads, fused_qkv=False)
    x = add_layernorm(x.reshape(-1, E), ca.reshape(-1, E), p["ln2_g"], p["ln2_b"]).reshape(B, S, E)
    ff = ffn(x.reshape(-1, E), p["w1"], p["b1"], p["w2"], p["b2"])
    x = add_layernorm(x.reshape(-1, E), ff, p["ln3_g"], p["ln3_b"]).reshape(B, S, E)
    return x


def transformer_forward(params, src, trg, cfg):
    N, E, S_src = src.shape
    S_trg = trg.shape[1]
    H = cfg["num_heads"]
    V = cfg["trg_vocab_size"]
    valid = cfg["src_valid_len"]          # stands in for the hard-coded 400

    # ---- make_embed_src: sigmoid(Linear(frame)) for idx < valid, zeros after ----------
    src_t = jnp.transpose(src, (0, 2, 1))                       # (N, S_src, E)
    src_valid = src_t[:, :valid, :].reshape(N * valid, E)
    emb_valid = linear(src_valid, params["spec_w"], params["spec_b"],
                       activation="sigmoid").reshape(N, valid, E)
    src_embed = jnp.concatenate(
        [emb_valid, jnp.zeros((N, S_src - valid, E), jnp.float32)], axis=1)

    # ---- positional / word embeddings (dropout = identity in eval) --------------------
    embed_src = src_embed + params["src_pos"][:S_src][None, :, :]              # (N,S_src,E)
    embed_trg = params["trg_word"][trg] + params["trg_pos"][:S_trg][None, :, :]  # (N,S_trg,E)

    # Masks are generated in-kernel (causal via iota, key-padding via `valid`); no
    # additive bias tensors are materialized in HBM, and cross-attention has no mask
    # (memory_key_padding_mask=None in the PyTorch module).

    # ---- encoder -----------------------------------------------------------------------
    memory = embed_src
    for lp in params["enc_layers"]:
        memory = encoder_layer(memory, lp, H, valid)
    memory = layernorm(memory.reshape(-1, E),
                       params["enc_norm_g"], params["enc_norm_b"]).reshape(N, S_src, E)

    # ---- decoder -----------------------------------------------------------------------
    x = embed_trg
    for lp in params["dec_layers"]:
        x = decoder_layer(x, memory, lp, H)
    x = layernorm(x.reshape(-1, E),
                  params["dec_norm_g"], params["dec_norm_b"]).reshape(N, S_trg, E)

    # ---- fc_out ------------------------------------------------------------------------
    logits = linear(x.reshape(-1, E), params["fc_w"], params["fc_b"]).reshape(N, S_trg, V)
    return logits


# --------------------------------------------------------------------------------------
# Deterministic parameter init (synthetic weights; shapes mirror the PyTorch module)
# --------------------------------------------------------------------------------------
def init_params(key, cfg):
    E = cfg["embedding_size"]
    V = cfg["trg_vocab_size"]
    FF = cfg["forward_expansion"]
    max_len = cfg["max_len"]
    keys = iter(jax.random.split(key, 512))

    def nrm(shape, scale=0.05):
        return (scale * jax.random.normal(next(keys), shape)).astype(jnp.float32)

    def mha():
        return dict(wq=nrm((E, E)), bq=nrm((E,)), wk=nrm((E, E)), bk=nrm((E,)),
                    wv=nrm((E, E)), bv=nrm((E,)), wo=nrm((E, E)), bo=nrm((E,)))

    def enc_layer():
        return dict(self_attn=mha(),
                    w1=nrm((E, FF)), b1=nrm((FF,)), w2=nrm((FF, E)), b2=nrm((E,)),
                    ln1_g=jnp.ones((E,), jnp.float32), ln1_b=jnp.zeros((E,), jnp.float32),
                    ln2_g=jnp.ones((E,), jnp.float32), ln2_b=jnp.zeros((E,), jnp.float32))

    def dec_layer():
        return dict(self_attn=mha(), cross_attn=mha(),
                    w1=nrm((E, FF)), b1=nrm((FF,)), w2=nrm((FF, E)), b2=nrm((E,)),
                    ln1_g=jnp.ones((E,), jnp.float32), ln1_b=jnp.zeros((E,), jnp.float32),
                    ln2_g=jnp.ones((E,), jnp.float32), ln2_b=jnp.zeros((E,), jnp.float32),
                    ln3_g=jnp.ones((E,), jnp.float32), ln3_b=jnp.zeros((E,), jnp.float32))

    return dict(
        src_pos=nrm((max_len, E)),
        trg_pos=nrm((max_len, E)),
        trg_word=nrm((V, E)),
        spec_w=nrm((E, E)), spec_b=nrm((E,)),
        enc_layers=[enc_layer() for _ in range(cfg["num_encoder_layers"])],
        enc_norm_g=jnp.ones((E,), jnp.float32), enc_norm_b=jnp.zeros((E,), jnp.float32),
        dec_layers=[dec_layer() for _ in range(cfg["num_decoder_layers"])],
        dec_norm_g=jnp.ones((E,), jnp.float32), dec_norm_b=jnp.zeros((E,), jnp.float32),
        fc_w=nrm((E, V)), fc_b=nrm((V,)),
    )


# --------------------------------------------------------------------------------------
if __name__ == "__main__":
    cfg = dict(
        embedding_size=32,
        trg_vocab_size=16,
        num_heads=2,
        num_encoder_layers=2,
        num_decoder_layers=2,
        forward_expansion=64,
        dropout=0.0,          # eval semantics: dropout is identity
        max_len=16,
        src_valid_len=6,      # stands in for the hard-coded 400 of the original module
    )
    N, S_src, S_trg = 2, 8, 8

    key = jax.random.PRNGKey(0)
    kp, ks, kt = jax.random.split(key, 3)
    params = init_params(kp, cfg)

    src = jax.random.normal(ks, (N, cfg["embedding_size"], S_src), jnp.float32)  # (N, E, S)
    trg = jax.random.randint(kt, (N, S_trg), 0, cfg["trg_vocab_size"], jnp.int32)

    fwd = jax.jit(functools.partial(transformer_forward, cfg=cfg))
    out = fwd(params, src, trg)
    jax.block_until_ready(out)

    assert out.shape == (N, S_trg, cfg["trg_vocab_size"])
    assert bool(jnp.all(jnp.isfinite(out)))
    print("KERNEL_OK")
</pallas_src>

<mosaic_0001>
module attributes {stable_mosaic.version = 11 : i64} {
  func.func @_linear_kernel(%arg0: i32, %arg1: i32, %arg2: i32, %arg3: memref<16x32xf32, #tpu.memory_space<vmem>>, %arg4: memref<32x96xf32, #tpu.memory_space<vmem>>, %arg5: memref<1x96xf32, #tpu.memory_space<vmem>>, %arg6: memref<16x96xf32, #tpu.memory_space<vmem>>, %arg7: memref<16x96xf32, #tpu.memory_space<vmem>>) attributes {dimension_semantics = [#tpu.dimension_semantics<parallel>, #tpu.dimension_semantics<parallel>, #tpu.dimension_semantics<arbitrary>], iteration_bounds = array<i64: 1, 1, 1>, scalar_prefetch = 0 : i64, scratch_operands = 1 : i64, tpu.core_type = #tpu.core_type<tc>, window_params = [{transform_indices = @transform_0, window_bounds = array<i64: 16, 32>}, {transform_indices = @transform_1, window_bounds = array<i64: 32, 96>}, {transform_indices = @transform_2, window_bounds = array<i64: 1, 96>}, {transform_indices = @transform_3, window_bounds = array<i64: 16, 96>}]} {
    %c0_i32 = arith.constant 0 : i32
    %0 = arith.cmpi eq, %arg2, %c0_i32 : i32
    %1 = arith.extui %0 : i1 to i32
    %c0_i32_0 = arith.constant 0 : i32
    %2 = arith.cmpi ne, %1, %c0_i32_0 : i32
    scf.if %2 {
      %cst_10 = arith.constant 0.000000e+00 : f32
      %14 = vector.broadcast %cst_10 : f32 to vector<16x96xf32>
      %c0_11 = arith.constant 0 : index
      %c0_12 = arith.constant 0 : index
      %15 = vector.load %arg7[%c0_11, %c0_12] : memref<16x96xf32, #tpu.memory_space<vmem>>, vector<16x96xf32>
      tpu.vector_store %arg7[%c0_11, %c0_12], %14 {strides = array<i32>} : memref<16x96xf32, #tpu.memory_space<vmem>>, vector<16x96xf32>,
    } else {
    }
    %c0 = arith.constant 0 : index
    %c0_1 = arith.constant 0 : index
    %3 = vector.load %arg7[%c0, %c0_1] : memref<16x96xf32, #tpu.memory_space<vmem>>, vector<16x96xf32>
    %c0_2 = arith.constant 0 : index
    %c0_3 = arith.constant 0 : index
    %4 = vector.load %arg3[%c0_2, %c0_3] : memref<16x32xf32, #tpu.memory_space<vmem>>, vector<16x32xf32>
    %5 = arith.truncf %4 : vector<16x32xf32> to vector<16x32xbf16>
    %c0_4 = arith.constant 0 : index
    %c0_5 = arith.constant 0 : index
    %6 = vector.load %arg4[%c0_4, %c0_5] : memref<32x96xf32, #tpu.memory_space<vmem>>, vector<32x96xf32>
    %7 = arith.truncf %6 : vector<32x96xf32> to vector<32x96xbf16>
    %cst = arith.constant dense<0.000000e+00> : vector<16x96xf32>
    %8 = tpu.matmul %5, %7, %cst {dimension_numbers = #tpu.dot_dimension_numbers<[1], [0], [0], [1], [0, 0, 1, 1], [], []>} : vector<16x32xbf16>, vector<32x96xbf16>, vector<16x96xf32> -> vector<16x96xf32>
    %9 = arith.addf %3, %8 : vector<16x96xf32>
    %c0_6 = arith.constant 0 : index
    %c0_7 = arith.constant 0 : index
    %10 = vector.load %arg7[%c0_6, %c0_7] : memref<16x96xf32, #tpu.memory_space<vmem>>, vector<16x96xf32>
    tpu.vector_store %arg7[%c0_6, %c0_7], %9 {strides = array<i32>} : memref<16x96xf32, #tpu.memory_space<vmem>>, vector<16x96xf32>,
    %c0_i32_8 = arith.constant 0 : i32
    %11 = arith.cmpi eq, %arg2, %c0_i32_8 : i32
    %12 = arith.extui %11 : i1 to i32
    %c0_i32_9 = arith.constant 0 : i32
    %13 = arith.cmpi ne, %12, %c0_i32_9 : i32
    scf.if %13 {
      %c0_10 = arith.constant 0 : index
      %c0_11 = arith.constant 0 : index
      %14 = vector.load %arg7[%c0_10, %c0_11] : memref<16x96xf32, #tpu.memory_space<vmem>>, vector<16x96xf32>
      %c0_12 = arith.constant 0 : index
      %c0_13 = arith.constant 0 : index
      %15 = vector.load %arg5[%c0_12, %c0_13] : memref<1x96xf32, #tpu.memory_space<vmem>>, vector<1x96xf32>
      %16 = vector.broadcast %15 : vector<1x96xf32> to vector<16x96xf32>
      %17 = arith.addf %14, %16 : vector<16x96xf32>
      %c0_14 = arith.constant 0 : index
      %c0_15 = arith.constant 0 : index
      %18 = vector.load %arg6[%c0_14, %c0_15] : memref<16x96xf32, #tpu.memory_space<vmem>>, vector<16x96xf32>
      tpu.vector_store %arg6[%c0_14, %c0_15], %17 {strides = array<i32>} : memref<16x96xf32, #tpu.memory_space<vmem>>, vector<16x96xf32>,
    } else {
    }
    return
  }
  func.func @transform_0(%arg0: i32, %arg1: i32, %arg2: i32) -> (i32, i32) {
    %c0_i32 = arith.constant 0 : i32
    return %arg0, %arg2 : i32, i32
  }
  func.func @transform_1(%arg0: i32, %arg1: i32, %arg2: i32) -> (i32, i32) {
    %c0_i32 = arith.constant 0 : i32
    return %arg2, %arg1 : i32, i32
  }
  func.func @transform_2(%arg0: i32, %arg1: i32, %arg2: i32) -> (i32, i32) {
    %c0_i32 = arith.constant 0 : i32
    %c0_i32_0 = arith.constant 0 : i32
    return %c0_i32, %arg1 : i32, i32
  }
  func.func @transform_3(%arg0: i32, %arg1: i32, %arg2: i32) -> (i32, i32) {
    %c0_i32 = arith.constant 0 : i32
    return %arg0, %arg1 : i32, i32
  }
}

module attributes {stable_mosaic.version = 11 : i64} {
  func.func @_attention_kernel(%arg0: i32, %arg1: i32, %arg2: memref<1x1x8x16xf32, #tpu.memory_space<vmem>>, %arg3: memref<1x1x8x16xf32, #tpu.memory_space<vmem>>, %arg4: memref<1x1x8x16xf32, #tpu.memory_space<vmem>>, %arg5: memref<1x1x8x16xf32, #tpu.memory_space<vmem>>) attributes {dimension_semantics = [#tpu.dimension_semantics<parallel>, #tpu.dimension_semantics<parallel>], iteration_bounds = array<i64: 2, 2>, scalar_prefetch = 0 : i64, scratch_operands = 0 : i64, tpu.core_type = #tpu.core_type<tc>, window_params = [{transform_indices = @transform_0, window_bounds = array<i64: 1, 1, 8, 16>}, {transform_indices = @transform_1, window_bounds = array<i64: 1, 1, 8, 16>}, {transform_indices = @transform_2, window_bounds = array<i64: 1, 1, 8, 16>}, {transform_indices = @transform_3, window_bounds = array<i64: 1, 1, 8, 16>}]} {
    %c0 = arith.constant 0 : index
    %c0_0 = arith.constant 0 : index
    %c0_1 = arith.constant 0 : index
    %c0_2 = arith.constant 0 : index
    %0 = vector.load %arg2[%c0, %c0_0, %c0_1, %c0_2] : memref<1x1x8x16xf32, #tpu.memory_space<vmem>>, vector<1x1x8x16xf32>
    %1 = vector.shape_cast %0 : vector<1x1x8x16xf32> to vector<8x16xf32>
    %c0_3 = arith.constant 0 : index
    %c0_4 = arith.constant 0 : index
    %c0_5 = arith.constant 0 : index
    %c0_6 = arith.constant 0 : index
    %2 = vector.load %arg3[%c0_3, %c0_4, %c0_5, %c0_6] : memref<1x1x8x16xf32, #tpu.memory_space<vmem>>, vector<1x1x8x16xf32>
    %3 = vector.shape_cast %2 : vector<1x1x8x16xf32> to vector<8x16xf32>
    %c0_7 = arith.constant 0 : index
    %c0_8 = arith.constant 0 : index
    %c0_9 = arith.constant 0 : index
    %c0_10 = arith.constant 0 : index
    %4 = vector.load %arg4[%c0_7, %c0_8, %c0_9, %c0_10] : memref<1x1x8x16xf32, #tpu.memory_space<vmem>>, vector<1x1x8x16xf32>
    %5 = vector.shape_cast %4 : vector<1x1x8x16xf32> to vector<8x16xf32>
    %6 = arith.truncf %1 : vector<8x16xf32> to vector<8x16xbf16>
    %7 = arith.truncf %3 : vector<8x16xf32> to vector<8x16xbf16>
    %cst = arith.constant dense<0.000000e+00> : vector<8x8xf32>
    %8 = tpu.matmul %6, %7, %cst {dimension_numbers = #tpu.dot_dimension_numbers<[1], [1], [0], [0], [0, 0, 1, 0], [], []>} : vector<8x16xbf16>, vector<8x16xbf16>, vector<8x8xf32> -> vector<8x8xf32>
    %cst_11 = arith.constant 2.500000e-01 : f32
    %9 = vector.broadcast %cst_11 : f32 to vector<8x8xf32>
    %10 = arith.mulf %8, %9 : vector<8x8xf32>
    %11 = tpu.iota {dimensions = array<i32: 0>} : vector<8x8xi32>
    %12 = tpu.iota {dimensions = array<i32: 1>} : vector<8x8xi32>
    %13 = arith.cmpi sgt, %12, %11 : vector<8x8xi32>
    %cst_12 = arith.constant -1.000000e+30 : f32
    %14 = vector.broadcast %cst_12 : f32 to vector<8x8xf32>
    %15 = arith.select %13, %14, %10 : vector<8x8xi1>, vector<8x8xf32>
    %cst_13 = arith.constant dense<0xFF800000> : vector<8xf32>
    %16 = vector.multi_reduction <maximumf>, %15, %cst_13 [1] : vector<8x8xf32> to vector<8xf32>
    %17 = vector.shape_cast %16 : vector<8xf32> to vector<8x1xf32>
    %18 = vector.broadcast %17 : vector<8x1xf32> to vector<8x8xf32>
    %19 = arith.subf %15, %18 : vector<8x8xf32>
    %20 = math.exp %19 : vector<8x8xf32>
    %cst_14 = arith.constant dense<0.000000e+00> : vector<8xf32>
    %21 = vector.multi_reduction <add>, %20, %cst_14 [1] : vector<8x8xf32> to vector<8xf32>
    %22 = vector.shape_cast %21 : vector<8xf32> to vector<8x1xf32>
    %23 = tpu.reciprocal %22 {approx = true} : vector<8x1xf32> -> vector<8x1xf32>
    %24 = vector.broadcast %23 : vector<8x1xf32> to vector<8x8xf32>
    %25 = arith.mulf %20, %24 : vector<8x8xf32>
    %26 = arith.truncf %25 : vector<8x8xf32> to vector<8x8xbf16>
    %27 = arith.truncf %5 : vector<8x16xf32> to vector<8x16xbf16>
    %cst_15 = arith.constant dense<0.000000e+00> : vector<8x16xf32>
    %28 = tpu.matmul %26, %27, %cst_15 {dimension_numbers = #tpu.dot_dimension_numbers<[1], [0], [0], [1], [0, 0, 1, 1], [], []>} : vector<8x8xbf16>, vector<8x16xbf16>, vector<8x16xf32> -> vector<8x16xf32>
    %c0_16 = arith.constant 0 : index
    %c0_17 = arith.constant 0 : index
    %c0_18 = arith.constant 0 : index
    %c0_19 = arith.constant 0 : index
    %29 = vector.load %arg5[%c0_16, %c0_17, %c0_18, %c0_19] : memref<1x1x8x16xf32, #tpu.memory_space<vmem>>, vector<1x1x8x16xf32>
    %30 = vector.shape_cast %29 : vector<1x1x8x16xf32> to vector<8x16xf32>
    %31 = vector.shape_cast %28 : vector<8x16xf32> to vector<1x1x8x16xf32>
    tpu.vector_store %arg5[%c0_16, %c0_17, %c0_18, %c0_19], %31 {strides = array<i32>} : memref<1x1x8x16xf32, #tpu.memory_space<vmem>>, vector<1x1x8x16xf32>,
    return
  }
  func.func @transform_0(%arg0: i32, %arg1: i32) -> (i32, i32, i32, i32) {
    %c0_i32 = arith.constant 0 : i32
    %c0_i32_0 = arith.constant 0 : i32
    %c0_i32_1 = arith.constant 0 : i32
    return %arg0, %arg1, %c0_i32, %c0_i32_0 : i32, i32, i32, i32
  }
  func.func @transform_1(%arg0: i32, %arg1: i32) -> (i32, i32, i32, i32) {
    %c0_i32 = arith.constant 0 : i32
    %c0_i32_0 = arith.constant 0 : i32
    %c0_i32_1 = arith.constant 0 : i32
    return %arg0, %arg1, %c0_i32, %c0_i32_0 : i32, i32, i32, i32
  }
  func.func @transform_2(%arg0: i32, %arg1: i32) -> (i32, i32, i32, i32) {
    %c0_i32 = arith.constant 0 : i32
    %c0_i32_0 = arith.constant 0 : i32
    %c0_i32_1 = arith.constant 0 : i32
    return %arg0, %arg1, %c0_i32, %c0_i32_0 : i32, i32, i32, i32
  }
  func.func @transform_3(%arg0: i32, %arg1: i32) -> (i32, i32, i32, i32) {
    %c0_i32 = arith.constant 0 : i32
    %c0_i32_0 = arith.constant 0 : i32
    %c0_i32_1 = arith.constant 0 : i32
    return %arg0, %arg1, %c0_i32, %c0_i32_0 : i32, i32, i32, i32
  }
}

module attributes {stable_mosaic.version = 11 : i64} {
  func.func @_linear_kernel(%arg0: i32, %arg1: i32, %arg2: i32, %arg3: memref<16x32xf32, #tpu.memory_space<vmem>>, %arg4: memref<32x32xf32, #tpu.memory_space<vmem>>, %arg5: memref<1x32xf32, #tpu.memory_space<vmem>>, %arg6: memref<16x32xf32, #tpu.memory_space<vmem>>, %arg7: memref<16x32xf32, #tpu.memory_space<vmem>>) attributes {dimension_semantics = [#tpu.dimension_semantics<parallel>, #tpu.dimension_semantics<parallel>, #tpu.dimension_semantics<arbitrary>], iteration_bounds = array<i64: 1, 1, 1>, scalar_prefetch = 0 : i64, scratch_operands = 1 : i64, tpu.core_type = #tpu.core_type<tc>, window_params = [{transform_indices = @transform_0, window_bounds = array<i64: 16, 32>}, {transform_indices = @transform_1, window_bounds = array<i64: 32, 32>}, {transform_indices = @transform_2, window_bounds = array<i64: 1, 32>}, {transform_indices = @transform_3, window_bounds = array<i64: 16, 32>}]} {
    %c0_i32 = arith.constant 0 : i32
    %0 = arith.cmpi eq, %arg2, %c0_i32 : i32
    %1 = arith.extui %0 : i1 to i32
    %c0_i32_0 = arith.constant 0 : i32
    %2 = arith.cmpi ne, %1, %c0_i32_0 : i32
    scf.if %2 {
      %cst_10 = arith.constant 0.000000e+00 : f32
      %14 = vector.broadcast %cst_10 : f32 to vector<16x32xf32>
      %c0_11 = arith.constant 0 : index
      %c0_12 = arith.constant 0 : index
      %15 = vector.load %arg7[%c0_11, %c0_12] : memref<16x32xf32, #tpu.memory_space<vmem>>, vector<16x32xf32>
      tpu.vector_store %arg7[%c0_11, %c0_12], %14 {strides = array<i32>} : memref<16x32xf32, #tpu.memory_space<vmem>>, vector<16x32xf32>,
    } else {
    }
    %c0 = arith.constant 0 : index
    %c0_1 = arith.constant 0 : index
    %3 = vector.load %arg7[%c0, %c0_1] : memref<16x32xf32, #tpu.memory_space<vmem>>, vector<16x32xf32>
    %c0_2 = arith.constant 0 : index
    %c0_3 = arith.constant 0 : index
    %4 = vector.load %arg3[%c0_2, %c0_3] : memref<16x32xf32, #tpu.memory_space<vmem>>, vector<16x32xf32>
    %5 = arith.truncf %4 : vector<16x32xf32> to vector<16x32xbf16>
    %c0_4 = arith.constant 0 : index
    %c0_5 = arith.constant 0 : index
    %6 = vector.load %arg4[%c0_4, %c0_5] : memref<32x32xf32, #tpu.memory_space<vmem>>, vector<32x32xf32>
    %7 = arith.truncf %6 : vector<32x32xf32> to vector<32x32xbf16>
    %cst = arith.constant dense<0.000000e+00> : vector<16x32xf32>
    %8 = tpu.matmul %5, %7, %cst {dimension_numbers = #tpu.dot_dimension_numbers<[1], [0], [0], [1], [0, 0, 1, 1], [], []>} : vector<16x32xbf16>, vector<32x32xbf16>, vector<16x32xf32> -> vector<16x32xf32>
    %9 = arith.addf %3, %8 : vector<16x32xf32>
    %c0_6 = arith.constant 0 : index
    %c0_7 = arith.constant 0 : index
    %10 = vector.load %arg7[%c0_6, %c0_7] : memref<16x32xf32, #tpu.memory_space<vmem>>, vector<16x32xf32>
    tpu.vector_store %arg7[%c0_6, %c0_7], %9 {strides = array<i32>} : memref<16x32xf32, #tpu.memory_space<vmem>>, vector<16x32xf32>,
    %c0_i32_8 = arith.constant 0 : i32
    %11 = arith.cmpi eq, %arg2, %c0_i32_8 : i32
    %12 = arith.extui %11 : i1 to i32
    %c0_i32_9 = arith.constant 0 : i32
    %13 = arith.cmpi ne, %12, %c0_i32_9 : i32
    scf.if %13 {
      %c0_10 = arith.constant 0 : index
      %c0_11 = arith.constant 0 : index
      %14 = vector.load %arg7[%c0_10, %c0_11] : memref<16x32xf32, #tpu.memory_space<vmem>>, vector<16x32xf32>
      %c0_12 = arith.constant 0 : index
      %c0_13 = arith.constant 0 : index
      %15 = vector.load %arg5[%c0_12, %c0_13] : memref<1x32xf32, #tpu.memory_space<vmem>>, vector<1x32xf32>
      %16 = vector.broadcast %15 : vector<1x32xf32> to vector<16x32xf32>
      %17 = arith.addf %14, %16 : vector<16x32xf32>
      %c0_14 = arith.constant 0 : index
      %c0_15 = arith.constant 0 : index
      %18 = vector.load %arg6[%c0_14, %c0_15] : memref<16x32xf32, #tpu.memory_space<vmem>>, vector<16x32xf32>
      tpu.vector_store %arg6[%c0_14, %c0_15], %17 {strides = array<i32>} : memref<16x32xf32, #tpu.memory_space<vmem>>, vector<16x32xf32>,
    } else {
    }
    return
  }
  func.func @transform_0(%arg0: i32, %arg1: i32, %arg2: i32) -> (i32, i32) {
    %c0_i32 = arith.constant 0 : i32
    return %arg0, %arg2 : i32, i32
  }
  func.func @transform_1(%arg0: i32, %arg1: i32, %arg2: i32) -> (i32, i32) {
    %c0_i32 = arith.constant 0 : i32
    return %arg2, %arg1 : i32, i32
  }
  func.func @transform_2(%arg0: i32, %arg1: i32, %arg2: i32) -> (i32, i32) {
    %c0_i32 = arith.constant 0 : i32
    %c0_i32_0 = arith.constant 0 : i32
    return %c0_i32, %arg1 : i32, i32
  }
  func.func @transform_3(%arg0: i32, %arg1: i32, %arg2: i32) -> (i32, i32) {
    %c0_i32 = arith.constant 0 : i32
    return %arg0, %arg1 : i32, i32
  }
}

module attributes {stable_mosaic.version = 11 : i64} {
  func.func @_add_layernorm_kernel(%arg0: i32, %arg1: memref<16x32xf32, #tpu.memory_space<vmem>>, %arg2: memref<16x32xf32, #tpu.memory_space<vmem>>, %arg3: memref<1x32xf32, #tpu.memory_space<vmem>>, %arg4: memref<1x32xf32, #tpu.memory_space<vmem>>, %arg5: memref<16x32xf32, #tpu.memory_space<vmem>>) attributes {dimension_semantics = [#tpu.dimension_semantics<parallel>], iteration_bounds = array<i64: 1>, scalar_prefetch = 0 : i64, scratch_operands = 0 : i64, tpu.core_type = #tpu.core_type<tc>, window_params = [{transform_indices = @transform_0, window_bounds = array<i64: 16, 32>}, {transform_indices = @transform_1, window_bounds = array<i64: 16, 32>}, {pipeline_mode = #tpu.pipeline_mode<synchronous>, transform_indices = @transform_2, window_bounds = array<i64: 1, 32>}, {pipeline_mode = #tpu.pipeline_mode<synchronous>, transform_indices = @transform_3, window_bounds = array<i64: 1, 32>}, {transform_indices = @transform_4, window_bounds = array<i64: 16, 32>}]} {
    %c0 = arith.constant 0 : index
    %c0_0 = arith.constant 0 : index
    %0 = vector.load %arg1[%c0, %c0_0] : memref<16x32xf32, #tpu.memory_space<vmem>>, vector<16x32xf32>
    %c0_1 = arith.constant 0 : index
    %c0_2 = arith.constant 0 : index
    %1 = vector.load %arg2[%c0_1, %c0_2] : memref<16x32xf32, #tpu.memory_space<vmem>>, vector<16x32xf32>
    %2 = arith.addf %0, %1 : vector<16x32xf32>
    %cst = arith.constant dense<0.000000e+00> : vector<16xf32>
    %3 = vector.multi_reduction <add>, %2, %cst [1] : vector<16x32xf32> to vector<16xf32>
    %4 = vector.shape_cast %3 : vector<16xf32> to vector<16x1xf32>
    %cst_3 = arith.constant 3.200000e+01 : f32
    %5 = vector.broadcast %cst_3 : f32 to vector<16x1xf32>
    %6 = arith.divf %4, %5 : vector<16x1xf32>
    %7 = vector.broadcast %6 : vector<16x1xf32> to vector<16x32xf32>
    %8 = arith.subf %2, %7 : vector<16x32xf32>
    %9 = arith.mulf %8, %8 : vector<16x32xf32>
    %cst_4 = arith.constant dense<0.000000e+00> : vector<16xf32>
    %10 = vector.multi_reduction <add>, %9, %cst_4 [1] : vector<16x32xf32> to vector<16xf32>
    %11 = vector.shape_cast %10 : vector<16xf32> to vector<16x1xf32>
    %cst_5 = arith.constant 3.200000e+01 : f32
    %12 = vector.broadcast %cst_5 : f32 to vector<16x1xf32>
    %13 = arith.divf %11, %12 : vector<16x1xf32>
    %cst_6 = arith.constant 9.99999974E-6 : f32
    %14 = vector.broadcast %cst_6 : f32 to vector<16x1xf32>
    %15 = arith.addf %13, %14 : vector<16x1xf32>
    %16 = math.rsqrt %15 : vector<16x1xf32>
    %17 = vector.broadcast %16 : vector<16x1xf32> to vector<16x32xf32>
    %18 = arith.mulf %8, %17 : vector<16x32xf32>
    %c0_7 = arith.constant 0 : index
    %c0_8 = arith.constant 0 : index
    %19 = vector.load %arg3[%c0_7, %c0_8] : memref<1x32xf32, #tpu.memory_space<vmem>>, vector<1x32xf32>
    %20 = vector.broadcast %19 : vector<1x32xf32> to vector<16x32xf32>
    %21 = arith.mulf %18, %20 : vector<16x32xf32>
    %c0_9 = arith.constant 0 : index
    %c0_10 = arith.constant 0 : index
    %22 = vector.load %arg4[%c0_9, %c0_10] : memref<1x32xf32, #tpu.memory_space<vmem>>, vector<1x32xf32>
    %23 = vector.broadcast %22 : vector<1x32xf32> to vector<16x32xf32>
    %24 = arith.addf %21, %23 : vector<16x32xf32>
    %c0_11 = arith.constant 0 : index
    %c0_12 = arith.constant 0 : index
    %25 = vector.load %arg5[%c0_11, %c0_12] : memref<16x32xf32, #tpu.memory_space<vmem>>, vector<16x32xf32>
    tpu.vector_store %arg5[%c0_11, %c0_12], %24 {strides = array<i32>} : memref<16x32xf32, #tpu.memory_space<vmem>>, vector<16x32xf32>,
    return
  }
  func.func @transform_0(%arg0: i32) -> (i32, i32) {
    %c0_i32 = arith.constant 0 : i32
    %c0_i32_0 = arith.constant 0 : i32
    return %arg0, %c0_i32 : i32, i32
  }
  func.func @transform_1(%arg0: i32) -> (i32, i32) {
    %c0_i32 = arith.constant 0 : i32
    %c0_i32_0 = arith.constant 0 : i32
    return %arg0, %c0_i32 : i32, i32
  }
  func.func @transform_2(%arg0: i32) -> (i32, i32) {
    %c0_i32 = arith.constant 0 : i32
    %c0_i32_0 = arith.constant 0 : i32
    %c0_i32_1 = arith.constant 0 : i32
    return %c0_i32, %c0_i32_0 : i32, i32
  }
  func.func @transform_3(%arg0: i32) -> (i32, i32) {
    %c0_i32 = arith.constant 0 : i32
    %c0_i32_0 = arith.constant 0 : i32
    %c0_i32_1 = arith.constant 0 : i32
    return %c0_i32, %c0_i32_0 : i32, i32
  }
  func.func @transform_4(%arg0: i32) -> (i32, i32) {
    %c0_i32 = arith.constant 0 : i32
    %c0_i32_0 = arith.constant 0 : i32
    return %arg0, %c0_i32 : i32, i32
  }
}

module attributes {stable_mosaic.version = 11 : i64} {
  func.func @_linear_kernel(%arg0: i32, %arg1: i32, %arg2: i32, %arg3: memref<12x32xf32, #tpu.memory_space<vmem>>, %arg4: memref<32x32xf32, #tpu.memory_space<vmem>>, %arg5: memref<1x32xf32, #tpu.memory_space<vmem>>, %arg6: memref<12x32xf32, #tpu.memory_space<vmem>>, %arg7: memref<12x32xf32, #tpu.memory_space<vmem>>) attributes {dimension_semantics = [#tpu.dimension_semantics<parallel>, #tpu.dimension_semantics<parallel>, #tpu.dimension_semantics<arbitrary>], iteration_bounds = array<i64: 1, 1, 1>, scalar_prefetch = 0 : i64, scratch_operands = 1 : i64, tpu.core_type = #tpu.core_type<tc>, window_params = [{transform_indices = @transform_0, window_bounds = array<i64: 12, 32>}, {transform_indices = @transform_1, window_bounds = array<i64: 32, 32>}, {transform_indices = @transform_2, window_bounds = array<i64: 1, 32>}, {transform_indices = @transform_3, window_bounds = array<i64: 12, 32>}]} {
    %c0_i32 = arith.constant 0 : i32
    %0 = arith.cmpi eq, %arg2, %c0_i32 : i32
    %1 = arith.extui %0 : i1 to i32
    %c0_i32_0 = arith.constant 0 : i32
    %2 = arith.cmpi ne, %1, %c0_i32_0 : i32
    scf.if %2 {
      %cst_10 = arith.constant 0.000000e+00 : f32
      %14 = vector.broadcast %cst_10 : f32 to vector<12x32xf32>
      %c0_11 = arith.constant 0 : index
      %c0_12 = arith.constant 0 : index
      %15 = vector.load %arg7[%c0_11, %c0_12] : memref<12x32xf32, #tpu.memory_space<vmem>>, vector<12x32xf32>
      tpu.vector_store %arg7[%c0_11, %c0_12], %14 {strides = array<i32>} : memref<12x32xf32, #tpu.memory_space<vmem>>, vector<12x32xf32>,
    } else {
    }
    %c0 = arith.constant 0 : index
    %c0_1 = arith.constant 0 : index
    %3 = vector.load %arg7[%c0, %c0_1] : memref<12x32xf32, #tpu.memory_space<vmem>>, vector<12x32xf32>
    %c0_2 = arith.constant 0 : index
    %c0_3 = arith.constant 0 : index
    %4 = vector.load %arg3[%c0_2, %c0_3] : memref<12x32xf32, #tpu.memory_space<vmem>>, vector<12x32xf32>
    %5 = arith.truncf %4 : vector<12x32xf32> to vector<12x32xbf16>
    %c0_4 = arith.constant 0 : index
    %c0_5 = arith.constant 0 : index
    %6 = vector.load %arg4[%c0_4, %c0_5] : memref<32x32xf32, #tpu.memory_space<vmem>>, vector<32x32xf32>
    %7 = arith.truncf %6 : vector<32x32xf32> to vector<32x32xbf16>
    %cst = arith.constant dense<0.000000e+00> : vector<12x32xf32>
    %8 = tpu.matmul %5, %7, %cst {dimension_numbers = #tpu.dot_dimension_numbers<[1], [0], [0], [1], [0, 0, 1, 1], [], []>} : vector<12x32xbf16>, vector<32x32xbf16>, vector<12x32xf32> -> vector<12x32xf32>
    %9 = arith.addf %3, %8 : vector<12x32xf32>
    %c0_6 = arith.constant 0 : index
    %c0_7 = arith.constant 0 : index
    %10 = vector.load %arg7[%c0_6, %c0_7] : memref<12x32xf32, #tpu.memory_space<vmem>>, vector<12x32xf32>
    tpu.vector_store %arg7[%c0_6, %c0_7], %9 {strides = array<i32>} : memref<12x32xf32, #tpu.memory_space<vmem>>, vector<12x32xf32>,
    %c0_i32_8 = arith.constant 0 : i32
    %11 = arith.cmpi eq, %arg2, %c0_i32_8 : i32
    %12 = arith.extui %11 : i1 to i32
    %c0_i32_9 = arith.constant 0 : i32
    %13 = arith.cmpi ne, %12, %c0_i32_9 : i32
    scf.if %13 {
      %c0_10 = arith.constant 0 : index
      %c0_11 = arith.constant 0 : index
      %14 = vector.load %arg7[%c0_10, %c0_11] : memref<12x32xf32, #tpu.memory_space<vmem>>, vector<12x32xf32>
      %c0_12 = arith.constant 0 : index
      %c0_13 = arith.constant 0 : index
      %15 = vector.load %arg5[%c0_12, %c0_13] : memref<1x32xf32, #tpu.memory_space<vmem>>, vector<1x32xf32>
      %16 = vector.broadcast %15 : vector<1x32xf32> to vector<12x32xf32>
      %17 = arith.addf %14, %16 : vector<12x32xf32>
      %18 = arith.negf %17 : vector<12x32xf32>
      %19 = math.exp %18 : vector<12x32xf32>
      %cst_14 = arith.constant 1.000000e+00 : f32
      %20 = vector.broadcast %cst_14 : f32 to vector<12x32xf32>
      %21 = arith.addf %20, %19 : vector<12x32xf32>
      %22 = arith.divf %20, %21 : vector<12x32xf32>
      %c0_15 = arith.constant 0 : index
      %c0_16 = arith.constant 0 : index
      %23 = vector.load %arg6[%c0_15, %c0_16] : memref<12x32xf32, #tpu.memory_space<vmem>>, vector<12x32xf32>
      tpu.vector_store %arg6[%c0_15, %c0_16], %22 {strides = array<i32>} : memref<12x32xf32, #tpu.memory_space<vmem>>, vector<12x32xf32>,
    } else {
    }
    return
  }
  func.func @transform_0(%arg0: i32, %arg1: i32, %arg2: i32) -> (i32, i32) {
    %c0_i32 = arith.constant 0 : i32
    return %arg0, %arg2 : i32, i32
  }
  func.func @transform_1(%arg0: i32, %arg1: i32, %arg2: i32) -> (i32, i32) {
    %c0_i32 = arith.constant 0 : i32
    return %arg2, %arg1 : i32, i32
  }
  func.func @transform_2(%arg0: i32, %arg1: i32, %arg2: i32) -> (i32, i32) {
    %c0_i32 = arith.constant 0 : i32
    %c0_i32_0 = arith.constant 0 : i32
    return %c0_i32, %arg1 : i32, i32
  }
  func.func @transform_3(%arg0: i32, %arg1: i32, %arg2: i32) -> (i32, i32) {
    %c0_i32 = arith.constant 0 : i32
    return %arg0, %arg1 : i32, i32
  }
}

module attributes {stable_mosaic.version = 11 : i64} {
  func.func @_attention_kernel(%arg0: i32, %arg1: i32, %arg2: memref<1x1x8x16xf32, #tpu.memory_space<vmem>>, %arg3: memref<1x1x8x16xf32, #tpu.memory_space<vmem>>, %arg4: memref<1x1x8x16xf32, #tpu.memory_space<vmem>>, %arg5: memref<1x1x8x16xf32, #tpu.memory_space<vmem>>) attributes {dimension_semantics = [#tpu.dimension_semantics<parallel>, #tpu.dimension_semantics<parallel>], iteration_bounds = array<i64: 2, 2>, scalar_prefetch = 0 : i64, scratch_operands = 0 : i64, tpu.core_type = #tpu.core_type<tc>, window_params = [{transform_indices = @transform_0, window_bounds = array<i64: 1, 1, 8, 16>}, {transform_indices = @transform_1, window_bounds = array<i64: 1, 1, 8, 16>}, {transform_indices = @transform_2, window_bounds = array<i64: 1, 1, 8, 16>}, {transform_indices = @transform_3, window_bounds = array<i64: 1, 1, 8, 16>}]} {
    %c0 = arith.constant 0 : index
    %c0_0 = arith.constant 0 : index
    %c0_1 = arith.constant 0 : index
    %c0_2 = arith.constant 0 : index
    %0 = vector.load %arg2[%c0, %c0_0, %c0_1, %c0_2] : memref<1x1x8x16xf32, #tpu.memory_space<vmem>>, vector<1x1x8x16xf32>
    %1 = vector.shape_cast %0 : vector<1x1x8x16xf32> to vector<8x16xf32>
    %c0_3 = arith.constant 0 : index
    %c0_4 = arith.constant 0 : index
    %c0_5 = arith.constant 0 : index
    %c0_6 = arith.constant 0 : index
    %2 = vector.load %arg3[%c0_3, %c0_4, %c0_5, %c0_6] : memref<1x1x8x16xf32, #tpu.memory_space<vmem>>, vector<1x1x8x16xf32>
    %3 = vector.shape_cast %2 : vector<1x1x8x16xf32> to vector<8x16xf32>
    %c0_7 = arith.constant 0 : index
    %c0_8 = arith.constant 0 : index
    %c0_9 = arith.constant 0 : index
    %c0_10 = arith.constant 0 : index
    %4 = vector.load %arg4[%c0_7, %c0_8, %c0_9, %c0_10] : memref<1x1x8x16xf32, #tpu.memory_space<vmem>>, vector<1x1x8x16xf32>
    %5 = vector.shape_cast %4 : vector<1x1x8x16xf32> to vector<8x16xf32>
    %6 = arith.truncf %1 : vector<8x16xf32> to vector<8x16xbf16>
    %7 = arith.truncf %3 : vector<8x16xf32> to vector<8x16xbf16>
    %cst = arith.constant dense<0.000000e+00> : vector<8x8xf32>
    %8 = tpu.matmul %6, %7, %cst {dimension_numbers = #tpu.dot_dimension_numbers<[1], [1], [0], [0], [0, 0, 1, 0], [], []>} : vector<8x16xbf16>, vector<8x16xbf16>, vector<8x8xf32> -> vector<8x8xf32>
    %cst_11 = arith.constant 2.500000e-01 : f32
    %9 = vector.broadcast %cst_11 : f32 to vector<8x8xf32>
    %10 = arith.mulf %8, %9 : vector<8x8xf32>
    %11 = tpu.iota {dimensions = array<i32: 1>} : vector<8x8xi32>
    %c6_i32 = arith.constant 6 : i32
    %12 = vector.broadcast %c6_i32 : i32 to vector<8x8xi32>
    %13 = arith.cmpi sge, %11, %12 : vector<8x8xi32>
    %cst_12 = arith.constant -1.000000e+30 : f32
    %14 = vector.broadcast %cst_12 : f32 to vector<8x8xf32>
    %15 = arith.select %13, %14, %10 : vector<8x8xi1>, vector<8x8xf32>
    %cst_13 = arith.constant dense<0xFF800000> : vector<8xf32>
    %16 = vector.multi_reduction <maximumf>, %15, %cst_13 [1] : vector<8x8xf32> to vector<8xf32>
    %17 = vector.shape_cast %16 : vector<8xf32> to vector<8x1xf32>
    %18 = vector.broadcast %17 : vector<8x1xf32> to vector<8x8xf32>
    %19 = arith.subf %15, %18 : vector<8x8xf32>
    %20 = math.exp %19 : vector<8x8xf32>
    %cst_14 = arith.constant dense<0.000000e+00> : vector<8xf32>
    %21 = vector.multi_reduction <add>, %20, %cst_14 [1] : vector<8x8xf32> to vector<8xf32>
    %22 = vector.shape_cast %21 : vector<8xf32> to vector<8x1xf32>
    %23 = tpu.reciprocal %22 {approx = true} : vector<8x1xf32> -> vector<8x1xf32>
    %24 = vector.broadcast %23 : vector<8x1xf32> to vector<8x8xf32>
    %25 = arith.mulf %20, %24 : vector<8x8xf32>
    %26 = arith.truncf %25 : vector<8x8xf32> to vector<8x8xbf16>
    %27 = arith.truncf %5 : vector<8x16xf32> to vector<8x16xbf16>
    %cst_15 = arith.constant dense<0.000000e+00> : vector<8x16xf32>
    %28 = tpu.matmul %26, %27, %cst_15 {dimension_numbers = #tpu.dot_dimension_numbers<[1], [0], [0], [1], [0, 0, 1, 1], [], []>} : vector<8x8xbf16>, vector<8x16xbf16>, vector<8x16xf32> -> vector<8x16xf32>
    %c0_16 = arith.constant 0 : index
    %c0_17 = arith.constant 0 : index
    %c0_18 = arith.constant 0 : index
    %c0_19 = arith.constant 0 : index
    %29 = vector.load %arg5[%c0_16, %c0_17, %c0_18, %c0_19] : memref<1x1x8x16xf32, #tpu.memory_space<vmem>>, vector<1x1x8x16xf32>
    %30 = vector.shape_cast %29 : vector<1x1x8x16xf32> to vector<8x16xf32>
    %31 = vector.shape_cast %28 : vector<8x16xf32> to vector<1x1x8x16xf32>
    tpu.vector_store %arg5[%c0_16, %c0_17, %c0_18, %c0_19], %31 {strides = array<i32>} : memref<1x1x8x16xf32, #tpu.memory_space<vmem>>, vector<1x1x8x16xf32>,
    return
  }
  func.func @transform_0(%arg0: i32, %arg1: i32) -> (i32, i32, i32, i32) {
    %c0_i32 = arith.constant 0 : i32
    %c0_i32_0 = arith.constant 0 : i32
    %c0_i32_1 = arith.constant 0 : i32
    return %arg0, %arg1, %c0_i32, %c0_i32_0 : i32, i32, i32, i32
  }
  func.func @transform_1(%arg0: i32, %arg1: i32) -> (i32, i32, i32, i32) {
    %c0_i32 = arith.constant 0 : i32
    %c0_i32_0 = arith.constant 0 : i32
    %c0_i32_1 = arith.constant 0 : i32
    return %arg0, %arg1, %c0_i32, %c0_i32_0 : i32, i32, i32, i32
  }
  func.func @transform_2(%arg0: i32, %arg1: i32) -> (i32, i32, i32, i32) {
    %c0_i32 = arith.constant 0 : i32
    %c0_i32_0 = arith.constant 0 : i32
    %c0_i32_1 = arith.constant 0 : i32
    return %arg0, %arg1, %c0_i32, %c0_i32_0 : i32, i32, i32, i32
  }
  func.func @transform_3(%arg0: i32, %arg1: i32) -> (i32, i32, i32, i32) {
    %c0_i32 = arith.constant 0 : i32
    %c0_i32_0 = arith.constant 0 : i32
    %c0_i32_1 = arith.constant 0 : i32
    return %arg0, %arg1, %c0_i32, %c0_i32_0 : i32, i32, i32, i32
  }
}

module attributes {stable_mosaic.version = 11 : i64} {
  func.func @_ffn_kernel(%arg0: i32, %arg1: i32, %arg2: memref<16x32xf32, #tpu.memory_space<vmem>>, %arg3: memref<32x64xf32, #tpu.memory_space<vmem>>, %arg4: memref<1x64xf32, #tpu.memory_space<vmem>>, %arg5: memref<64x32xf32, #tpu.memory_space<vmem>>, %arg6: memref<1x32xf32, #tpu.memory_space<vmem>>, %arg7: memref<16x32xf32, #tpu.memory_space<vmem>>, %arg8: memref<16x32xf32, #tpu.memory_space<vmem>>) attributes {dimension_semantics = [#tpu.dimension_semantics<parallel>, #tpu.dimension_semantics<arbitrary>], iteration_bounds = array<i64: 1, 1>, scalar_prefetch = 0 : i64, scratch_operands = 1 : i64, tpu.core_type = #tpu.core_type<tc>, window_params = [{transform_indices = @transform_0, window_bounds = array<i64: 16, 32>}, {transform_indices = @transform_1, window_bounds = array<i64: 32, 64>}, {transform_indices = @transform_2, window_bounds = array<i64: 1, 64>}, {transform_indices = @transform_3, window_bounds = array<i64: 64, 32>}, {pipeline_mode = #tpu.pipeline_mode<synchronous>, transform_indices = @transform_4, window_bounds = array<i64: 1, 32>}, {transform_indices = @transform_5, window_bounds = array<i64: 16, 32>}]} {
    %c0_i32 = arith.constant 0 : i32
    %0 = arith.cmpi eq, %arg1, %c0_i32 : i32
    %1 = arith.extui %0 : i1 to i32
    %c0_i32_0 = arith.constant 0 : i32
    %2 = arith.cmpi ne, %1, %c0_i32_0 : i32
    scf.if %2 {
      %cst_16 = arith.constant 0.000000e+00 : f32
      %23 = vector.broadcast %cst_16 : f32 to vector<16x32xf32>
      %c0_17 = arith.constant 0 : index
      %c0_18 = arith.constant 0 : index
      %24 = vector.load %arg8[%c0_17, %c0_18] : memref<16x32xf32, #tpu.memory_space<vmem>>, vector<16x32xf32>
      tpu.vector_store %arg8[%c0_17, %c0_18], %23 {strides = array<i32>} : memref<16x32xf32, #tpu.memory_space<vmem>>, vector<16x32xf32>,
    } else {
    }
    %c0 = arith.constant 0 : index
    %c0_1 = arith.constant 0 : index
    %3 = vector.load %arg2[%c0, %c0_1] : memref<16x32xf32, #tpu.memory_space<vmem>>, vector<16x32xf32>
    %4 = arith.truncf %3 : vector<16x32xf32> to vector<16x32xbf16>
    %c0_2 = arith.constant 0 : index
    %c0_3 = arith.constant 0 : index
    %5 = vector.load %arg3[%c0_2, %c0_3] : memref<32x64xf32, #tpu.memory_space<vmem>>, vector<32x64xf32>
    %6 = arith.truncf %5 : vector<32x64xf32> to vector<32x64xbf16>
    %cst = arith.constant dense<0.000000e+00> : vector<16x64xf32>
    %7 = tpu.matmul %4, %6, %cst {dimension_numbers = #tpu.dot_dimension_numbers<[1], [0], [0], [1], [0, 0, 1, 1], [], []>} : vector<16x32xbf16>, vector<32x64xbf16>, vector<16x64xf32> -> vector<16x64xf32>
    %c0_4 = arith.constant 0 : index
    %c0_5 = arith.constant 0 : index
    %8 = vector.load %arg4[%c0_4, %c0_5] : memref<1x64xf32, #tpu.memory_space<vmem>>, vector<1x64xf32>
    %9 = vector.broadcast %8 : vector<1x64xf32> to vector<16x64xf32>
    %10 = arith.addf %7, %9 : vector<16x64xf32>
    %cst_6 = arith.constant 0.000000e+00 : f32
    %11 = vector.broadcast %cst_6 : f32 to vector<16x64xf32>
    %12 = arith.maximumf %10, %11 : vector<16x64xf32>
    %c0_7 = arith.constant 0 : index
    %c0_8 = arith.constant 0 : index
    %13 = vector.load %arg8[%c0_7, %c0_8] : memref<16x32xf32, #tpu.memory_space<vmem>>, vector<16x32xf32>
    %14 = arith.truncf %12 : vector<16x64xf32> to vector<16x64xbf16>
    %c0_9 = arith.constant 0 : index
    %c0_10 = arith.constant 0 : index
    %15 = vector.load %arg5[%c0_9, %c0_10] : memref<64x32xf32, #tpu.memory_space<vmem>>, vector<64x32xf32>
    %16 = arith.truncf %15 : vector<64x32xf32> to vector<64x32xbf16>
    %cst_11 = arith.constant dense<0.000000e+00> : vector<16x32xf32>
    %17 = tpu.matmul %14, %16, %cst_11 {dimension_numbers = #tpu.dot_dimension_numbers<[1], [0], [0], [1], [0, 0, 1, 1], [], []>} : vector<16x64xbf16>, vector<64x32xbf16>, vector<16x32xf32> -> vector<16x32xf32>
    %18 = arith.addf %13, %17 : vector<16x32xf32>
    %c0_12 = arith.constant 0 : index
    %c0_13 = arith.constant 0 : index
    %19 = vector.load %arg8[%c0_12, %c0_13] : memref<16x32xf32, #tpu.memory_space<vmem>>, vector<16x32xf32>
    tpu.vector_store %arg8[%c0_12, %c0_13], %18 {strides = array<i32>} : memref<16x32xf32, #tpu.memory_space<vmem>>, vector<16x32xf32>,
    %c0_i32_14 = arith.constant 0 : i32
    %20 = arith.cmpi eq, %arg1, %c0_i32_14 : i32
    %21 = arith.extui %20 : i1 to i32
    %c0_i32_15 = arith.constant 0 : i32
    %22 = arith.cmpi ne, %21, %c0_i32_15 : i32
    scf.if %22 {
      %c0_16 = arith.constant 0 : index
      %c0_17 = arith.constant 0 : index
      %23 = vector.load %arg8[%c0_16, %c0_17] : memref<16x32xf32, #tpu.memory_space<vmem>>, vector<16x32xf32>
      %c0_18 = arith.constant 0 : index
      %c0_19 = arith.constant 0 : index
      %24 = vector.load %arg6[%c0_18, %c0_19] : memref<1x32xf32, #tpu.memory_space<vmem>>, vector<1x32xf32>
      %25 = vector.broadcast %24 : vector<1x32xf32> to vector<16x32xf32>
      %26 = arith.addf %23, %25 : vector<16x32xf32>
      %c0_20 = arith.constant 0 : index
      %c0_21 = arith.constant 0 : index
      %27 = vector.load %arg7[%c0_20, %c0_21] : memref<16x32xf32, #tpu.memory_space<vmem>>, vector<16x32xf32>
      tpu.vector_store %arg7[%c0_20, %c0_21], %26 {strides = array<i32>} : memref<16x32xf32, #tpu.memory_space<vmem>>, vector<16x32xf32>,
    } else {
    }
    return
  }
  func.func @transform_0(%arg0: i32, %arg1: i32) -> (i32, i32) {
    %c0_i32 = arith.constant 0 : i32
    %c0_i32_0 = arith.constant 0 : i32
    return %arg0, %c0_i32 : i32, i32
  }
  func.func @transform_1(%arg0: i32, %arg1: i32) -> (i32, i32) {
    %c0_i32 = arith.constant 0 : i32
    %c0_i32_0 = arith.constant 0 : i32
    return %c0_i32, %arg1 : i32, i32
  }
  func.func @transform_2(%arg0: i32, %arg1: i32) -> (i32, i32) {
    %c0_i32 = arith.constant 0 : i32
    %c0_i32_0 = arith.constant 0 : i32
    return %c0_i32, %arg1 : i32, i32
  }
  func.func @transform_3(%arg0: i32, %arg1: i32) -> (i32, i32) {
    %c0_i32 = arith.constant 0 : i32
    %c0_i32_0 = arith.constant 0 : i32
    return %arg1, %c0_i32 : i32, i32
  }
  func.func @transform_4(%arg0: i32, %arg1: i32) -> (i32, i32) {
    %c0_i32 = arith.constant 0 : i32
    %c0_i32_0 = arith.constant 0 : i32
    %c0_i32_1 = arith.constant 0 : i32
    return %c0_i32, %c0_i32_0 : i32, i32
  }
  func.func @transform_5(%arg0: i32, %arg1: i32) -> (i32, i32) {
    %c0_i32 = arith.constant 0 : i32
    %c0_i32_0 = arith.constant 0 : i32
    return %arg0, %c0_i32 : i32, i32
  }
}

module attributes {stable_mosaic.version = 11 : i64} {
  func.func @_layernorm_kernel(%arg0: i32, %arg1: memref<16x32xf32, #tpu.memory_space<vmem>>, %arg2: memref<1x32xf32, #tpu.memory_space<vmem>>, %arg3: memref<1x32xf32, #tpu.memory_space<vmem>>, %arg4: memref<16x32xf32, #tpu.memory_space<vmem>>) attributes {dimension_semantics = [#tpu.dimension_semantics<parallel>], iteration_bounds = array<i64: 1>, scalar_prefetch = 0 : i64, scratch_operands = 0 : i64, tpu.core_type = #tpu.core_type<tc>, window_params = [{transform_indices = @transform_0, window_bounds = array<i64: 16, 32>}, {pipeline_mode = #tpu.pipeline_mode<synchronous>, transform_indices = @transform_1, window_bounds = array<i64: 1, 32>}, {pipeline_mode = #tpu.pipeline_mode<synchronous>, transform_indices = @transform_2, window_bounds = array<i64: 1, 32>}, {transform_indices = @transform_3, window_bounds = array<i64: 16, 32>}]} {
    %c0 = arith.constant 0 : index
    %c0_0 = arith.constant 0 : index
    %0 = vector.load %arg1[%c0, %c0_0] : memref<16x32xf32, #tpu.memory_space<vmem>>, vector<16x32xf32>
    %cst = arith.constant dense<0.000000e+00> : vector<16xf32>
    %1 = vector.multi_reduction <add>, %0, %cst [1] : vector<16x32xf32> to vector<16xf32>
    %2 = vector.shape_cast %1 : vector<16xf32> to vector<16x1xf32>
    %cst_1 = arith.constant 3.200000e+01 : f32
    %3 = vector.broadcast %cst_1 : f32 to vector<16x1xf32>
    %4 = arith.divf %2, %3 : vector<16x1xf32>
    %5 = vector.broadcast %4 : vector<16x1xf32> to vector<16x32xf32>
    %6 = arith.subf %0, %5 : vector<16x32xf32>
    %7 = arith.mulf %6, %6 : vector<16x32xf32>
    %cst_2 = arith.constant dense<0.000000e+00> : vector<16xf32>
    %8 = vector.multi_reduction <add>, %7, %cst_2 [1] : vector<16x32xf32> to vector<16xf32>
    %9 = vector.shape_cast %8 : vector<16xf32> to vector<16x1xf32>
    %cst_3 = arith.constant 3.200000e+01 : f32
    %10 = vector.broadcast %cst_3 : f32 to vector<16x1xf32>
    %11 = arith.divf %9, %10 : vector<16x1xf32>
    %cst_4 = arith.constant 9.99999974E-6 : f32
    %12 = vector.broadcast %cst_4 : f32 to vector<16x1xf32>
    %13 = arith.addf %11, %12 : vector<16x1xf32>
    %14 = math.rsqrt %13 : vector<16x1xf32>
    %15 = vector.broadcast %14 : vector<16x1xf32> to vector<16x32xf32>
    %16 = arith.mulf %6, %15 : vector<16x32xf32>
    %c0_5 = arith.constant 0 : index
    %c0_6 = arith.constant 0 : index
    %17 = vector.load %arg2[%c0_5, %c0_6] : memref<1x32xf32, #tpu.memory_space<vmem>>, vector<1x32xf32>
    %18 = vector.broadcast %17 : vector<1x32xf32> to vector<16x32xf32>
    %19 = arith.mulf %16, %18 : vector<16x32xf32>
    %c0_7 = arith.constant 0 : index
    %c0_8 = arith.constant 0 : index
    %20 = vector.load %arg3[%c0_7, %c0_8] : memref<1x32xf32, #tpu.memory_space<vmem>>, vector<1x32xf32>
    %21 = vector.broadcast %20 : vector<1x32xf32> to vector<16x32xf32>
    %22 = arith.addf %19, %21 : vector<16x32xf32>
    %c0_9 = arith.constant 0 : index
    %c0_10 = arith.constant 0 : index
    %23 = vector.load %arg4[%c0_9, %c0_10] : memref<16x32xf32, #tpu.memory_space<vmem>>, vector<16x32xf32>
    tpu.vector_store %arg4[%c0_9, %c0_10], %22 {strides = array<i32>} : memref<16x32xf32, #tpu.memory_space<vmem>>, vector<16x32xf32>,
    return
  }
  func.func @transform_0(%arg0: i32) -> (i32, i32) {
    %c0_i32 = arith.constant 0 : i32
    %c0_i32_0 = arith.constant 0 : i32
    return %arg0, %c0_i32 : i32, i32
  }
  func.func @transform_1(%arg0: i32) -> (i32, i32) {
    %c0_i32 = arith.constant 0 : i32
    %c0_i32_0 = arith.constant 0 : i32
    %c0_i32_1 = arith.constant 0 : i32
    return %c0_i32, %c0_i32_0 : i32, i32
  }
  func.func @transform_2(%arg0: i32) -> (i32, i32) {
    %c0_i32 = arith.constant 0 : i32
    %c0_i32_0 = arith.constant 0 : i32
    %c0_i32_1 = arith.constant 0 : i32
    return %c0_i32, %c0_i32_0 : i32, i32
  }
  func.func @transform_3(%arg0: i32) -> (i32, i32) {
    %c0_i32 = arith.constant 0 : i32
    %c0_i32_0 = arith.constant 0 : i32
    return %arg0, %c0_i32 : i32, i32
  }
}

module attributes {stable_mosaic.version = 11 : i64} {
  func.func @_linear_kernel(%arg0: i32, %arg1: i32, %arg2: i32, %arg3: memref<16x32xf32, #tpu.memory_space<vmem>>, %arg4: memref<32x64xf32, #tpu.memory_space<vmem>>, %arg5: memref<1x64xf32, #tpu.memory_space<vmem>>, %arg6: memref<16x64xf32, #tpu.memory_space<vmem>>, %arg7: memref<16x64xf32, #tpu.memory_space<vmem>>) attributes {dimension_semantics = [#tpu.dimension_semantics<parallel>, #tpu.dimension_semantics<parallel>, #tpu.dimension_semantics<arbitrary>], iteration_bounds = array<i64: 1, 1, 1>, scalar_prefetch = 0 : i64, scratch_operands = 1 : i64, tpu.core_type = #tpu.core_type<tc>, window_params = [{transform_indices = @transform_0, window_bounds = array<i64: 16, 32>}, {transform_indices = @transform_1, window_bounds = array<i64: 32, 64>}, {transform_indices = @transform_2, window_bounds = array<i64: 1, 64>}, {transform_indices = @transform_3, window_bounds = array<i64: 16, 64>}]} {
    %c0_i32 = arith.constant 0 : i32
    %0 = arith.cmpi eq, %arg2, %c0_i32 : i32
    %1 = arith.extui %0 : i1 to i32
    %c0_i32_0 = arith.constant 0 : i32
    %2 = arith.cmpi ne, %1, %c0_i32_0 : i32
    scf.if %2 {
      %cst_10 = arith.constant 0.000000e+00 : f32
      %14 = vector.broadcast %cst_10 : f32 to vector<16x64xf32>
      %c0_11 = arith.constant 0 : index
      %c0_12 = arith.constant 0 : index
      %15 = vector.load %arg7[%c0_11, %c0_12] : memref<16x64xf32, #tpu.memory_space<vmem>>, vector<16x64xf32>
      tpu.vector_store %arg7[%c0_11, %c0_12], %14 {strides = array<i32>} : memref<16x64xf32, #tpu.memory_space<vmem>>, vector<16x64xf32>,
    } else {
    }
    %c0 = arith.constant 0 : index
    %c0_1 = arith.constant 0 : index
    %3 = vector.load %arg7[%c0, %c0_1] : memref<16x64xf32, #tpu.memory_space<vmem>>, vector<16x64xf32>
    %c0_2 = arith.constant 0 : index
    %c0_3 = arith.constant 0 : index
    %4 = vector.load %arg3[%c0_2, %c0_3] : memref<16x32xf32, #tpu.memory_space<vmem>>, vector<16x32xf32>
    %5 = arith.truncf %4 : vector<16x32xf32> to vector<16x32xbf16>
    %c0_4 = arith.constant 0 : index
    %c0_5 = arith.constant 0 : index
    %6 = vector.load %arg4[%c0_4, %c0_5] : memref<32x64xf32, #tpu.memory_space<vmem>>, vector<32x64xf32>
    %7 = arith.truncf %6 : vector<32x64xf32> to vector<32x64xbf16>
    %cst = arith.constant dense<0.000000e+00> : vector<16x64xf32>
    %8 = tpu.matmul %5, %7, %cst {dimension_numbers = #tpu.dot_dimension_numbers<[1], [0], [0], [1], [0, 0, 1, 1], [], []>} : vector<16x32xbf16>, vector<32x64xbf16>, vector<16x64xf32> -> vector<16x64xf32>
    %9 = arith.addf %3, %8 : vector<16x64xf32>
    %c0_6 = arith.constant 0 : index
    %c0_7 = arith.constant 0 : index
    %10 = vector.load %arg7[%c0_6, %c0_7] : memref<16x64xf32, #tpu.memory_space<vmem>>, vector<16x64xf32>
    tpu.vector_store %arg7[%c0_6, %c0_7], %9 {strides = array<i32>} : memref<16x64xf32, #tpu.memory_space<vmem>>, vector<16x64xf32>,
    %c0_i32_8 = arith.constant 0 : i32
    %11 = arith.cmpi eq, %arg2, %c0_i32_8 : i32
    %12 = arith.extui %11 : i1 to i32
    %c0_i32_9 = arith.constant 0 : i32
    %13 = arith.cmpi ne, %12, %c0_i32_9 : i32
    scf.if %13 {
      %c0_10 = arith.constant 0 : index
      %c0_11 = arith.constant 0 : index
      %14 = vector.load %arg7[%c0_10, %c0_11] : memref<16x64xf32, #tpu.memory_space<vmem>>, vector<16x64xf32>
      %c0_12 = arith.constant 0 : index
      %c0_13 = arith.constant 0 : index
      %15 = vector.load %arg5[%c0_12, %c0_13] : memref<1x64xf32, #tpu.memory_space<vmem>>, vector<1x64xf32>
      %16 = vector.broadcast %15 : vector<1x64xf32> to vector<16x64xf32>
      %17 = arith.addf %14, %16 : vector<16x64xf32>
      %c0_14 = arith.constant 0 : index
      %c0_15 = arith.constant 0 : index
      %18 = vector.load %arg6[%c0_14, %c0_15] : memref<16x64xf32, #tpu.memory_space<vmem>>, vector<16x64xf32>
      tpu.vector_store %arg6[%c0_14, %c0_15], %17 {strides = array<i32>} : memref<16x64xf32, #tpu.memory_space<vmem>>, vector<16x64xf32>,
    } else {
    }
    return
  }
  func.func @transform_0(%arg0: i32, %arg1: i32, %arg2: i32) -> (i32, i32) {
    %c0_i32 = arith.constant 0 : i32
    return %arg0, %arg2 : i32, i32
  }
  func.func @transform_1(%arg0: i32, %arg1: i32, %arg2: i32) -> (i32, i32) {
    %c0_i32 = arith.constant 0 : i32
    return %arg2, %arg1 : i32, i32
  }
  func.func @transform_2(%arg0: i32, %arg1: i32, %arg2: i32) -> (i32, i32) {
    %c0_i32 = arith.constant 0 : i32
    %c0_i32_0 = arith.constant 0 : i32
    return %c0_i32, %arg1 : i32, i32
  }
  func.func @transform_3(%arg0: i32, %arg1: i32, %arg2: i32) -> (i32, i32) {
    %c0_i32 = arith.constant 0 : i32
    return %arg0, %arg1 : i32, i32
  }
}

module attributes {stable_mosaic.version = 11 : i64} {
  func.func @_attention_kernel(%arg0: i32, %arg1: i32, %arg2: memref<1x1x8x16xf32, #tpu.memory_space<vmem>>, %arg3: memref<1x1x8x16xf32, #tpu.memory_space<vmem>>, %arg4: memref<1x1x8x16xf32, #tpu.memory_space<vmem>>, %arg5: memref<1x1x8x16xf32, #tpu.memory_space<vmem>>) attributes {dimension_semantics = [#tpu.dimension_semantics<parallel>, #tpu.dimension_semantics<parallel>], iteration_bounds = array<i64: 2, 2>, scalar_prefetch = 0 : i64, scratch_operands = 0 : i64, tpu.core_type = #tpu.core_type<tc>, window_params = [{transform_indices = @transform_0, window_bounds = array<i64: 1, 1, 8, 16>}, {transform_indices = @transform_1, window_bounds = array<i64: 1, 1, 8, 16>}, {transform_indices = @transform_2, window_bounds = array<i64: 1, 1, 8, 16>}, {transform_indices = @transform_3, window_bounds = array<i64: 1, 1, 8, 16>}]} {
    %c0 = arith.constant 0 : index
    %c0_0 = arith.constant 0 : index
    %c0_1 = arith.constant 0 : index
    %c0_2 = arith.constant 0 : index
    %0 = vector.load %arg2[%c0, %c0_0, %c0_1, %c0_2] : memref<1x1x8x16xf32, #tpu.memory_space<vmem>>, vector<1x1x8x16xf32>
    %1 = vector.shape_cast %0 : vector<1x1x8x16xf32> to vector<8x16xf32>
    %c0_3 = arith.constant 0 : index
    %c0_4 = arith.constant 0 : index
    %c0_5 = arith.constant 0 : index
    %c0_6 = arith.constant 0 : index
    %2 = vector.load %arg3[%c0_3, %c0_4, %c0_5, %c0_6] : memref<1x1x8x16xf32, #tpu.memory_space<vmem>>, vector<1x1x8x16xf32>
    %3 = vector.shape_cast %2 : vector<1x1x8x16xf32> to vector<8x16xf32>
    %c0_7 = arith.constant 0 : index
    %c0_8 = arith.constant 0 : index
    %c0_9 = arith.constant 0 : index
    %c0_10 = arith.constant 0 : index
    %4 = vector.load %arg4[%c0_7, %c0_8, %c0_9, %c0_10] : memref<1x1x8x16xf32, #tpu.memory_space<vmem>>, vector<1x1x8x16xf32>
    %5 = vector.shape_cast %4 : vector<1x1x8x16xf32> to vector<8x16xf32>
    %6 = arith.truncf %1 : vector<8x16xf32> to vector<8x16xbf16>
    %7 = arith.truncf %3 : vector<8x16xf32> to vector<8x16xbf16>
    %cst = arith.constant dense<0.000000e+00> : vector<8x8xf32>
    %8 = tpu.matmul %6, %7, %cst {dimension_numbers = #tpu.dot_dimension_numbers<[1], [1], [0], [0], [0, 0, 1, 0], [], []>} : vector<8x16xbf16>, vector<8x16xbf16>, vector<8x8xf32> -> vector<8x8xf32>
    %cst_11 = arith.constant 2.500000e-01 : f32
    %9 = vector.broadcast %cst_11 : f32 to vector<8x8xf32>
    %10 = arith.mulf %8, %9 : vector<8x8xf32>
    %cst_12 = arith.constant dense<0xFF800000> : vector<8xf32>
    %11 = vector.multi_reduction <maximumf>, %10, %cst_12 [1] : vector<8x8xf32> to vector<8xf32>
    %12 = vector.shape_cast %11 : vector<8xf32> to vector<8x1xf32>
    %13 = vector.broadcast %12 : vector<8x1xf32> to vector<8x8xf32>
    %14 = arith.subf %10, %13 : vector<8x8xf32>
    %15 = math.exp %14 : vector<8x8xf32>
    %cst_13 = arith.constant dense<0.000000e+00> : vector<8xf32>
    %16 = vector.multi_reduction <add>, %15, %cst_13 [1] : vector<8x8xf32> to vector<8xf32>
    %17 = vector.shape_cast %16 : vector<8xf32> to vector<8x1xf32>
    %18 = tpu.reciprocal %17 {approx = true} : vector<8x1xf32> -> vector<8x1xf32>
    %19 = vector.broadcast %18 : vector<8x1xf32> to vector<8x8xf32>
    %20 = arith.mulf %15, %19 : vector<8x8xf32>
    %21 = arith.truncf %20 : vector<8x8xf32> to vector<8x8xbf16>
    %22 = arith.truncf %5 : vector<8x16xf32> to vector<8x16xbf16>
    %cst_14 = arith.constant dense<0.000000e+00> : vector<8x16xf32>
    %23 = tpu.matmul %21, %22, %cst_14 {dimension_numbers = #tpu.dot_dimension_numbers<[1], [0], [0], [1], [0, 0, 1, 1], [], []>} : vector<8x8xbf16>, vector<8x16xbf16>, vector<8x16xf32> -> vector<8x16xf32>
    %c0_15 = arith.constant 0 : index
    %c0_16 = arith.constant 0 : index
    %c0_17 = arith.constant 0 : index
    %c0_18 = arith.constant 0 : index
    %24 = vector.load %arg5[%c0_15, %c0_16, %c0_17, %c0_18] : memref<1x1x8x16xf32, #tpu.memory_space<vmem>>, vector<1x1x8x16xf32>
    %25 = vector.shape_cast %24 : vector<1x1x8x16xf32> to vector<8x16xf32>
    %26 = vector.shape_cast %23 : vector<8x16xf32> to vector<1x1x8x16xf32>
    tpu.vector_store %arg5[%c0_15, %c0_16, %c0_17, %c0_18], %26 {strides = array<i32>} : memref<1x1x8x16xf32, #tpu.memory_space<vmem>>, vector<1x1x8x16xf32>,
    return
  }
  func.func @transform_0(%arg0: i32, %arg1: i32) -> (i32, i32, i32, i32) {
    %c0_i32 = arith.constant 0 : i32
    %c0_i32_0 = arith.constant 0 : i32
    %c0_i32_1 = arith.constant 0 : i32
    return %arg0, %arg1, %c0_i32, %c0_i32_0 : i32, i32, i32, i32
  }
  func.func @transform_1(%arg0: i32, %arg1: i32) -> (i32, i32, i32, i32) {
    %c0_i32 = arith.constant 0 : i32
    %c0_i32_0 = arith.constant 0 : i32
    %c0_i32_1 = arith.constant 0 : i32
    return %arg0, %arg1, %c0_i32, %c0_i32_0 : i32, i32, i32, i32
  }
  func.func @transform_2(%arg0: i32, %arg1: i32) -> (i32, i32, i32, i32) {
    %c0_i32 = arith.constant 0 : i32
    %c0_i32_0 = arith.constant 0 : i32
    %c0_i32_1 = arith.constant 0 : i32
    return %arg0, %arg1, %c0_i32, %c0_i32_0 : i32, i32, i32, i32
  }
  func.func @transform_3(%arg0: i32, %arg1: i32) -> (i32, i32, i32, i32) {
    %c0_i32 = arith.constant 0 : i32
    %c0_i32_0 = arith.constant 0 : i32
    %c0_i32_1 = arith.constant 0 : i32
    return %arg0, %arg1, %c0_i32, %c0_i32_0 : i32, i32, i32, i32
  }
}

module attributes {stable_mosaic.version = 11 : i64} {
  func.func @_linear_kernel(%arg0: i32, %arg1: i32, %arg2: i32, %arg3: memref<16x32xf32, #tpu.memory_space<vmem>>, %arg4: memref<32x16xf32, #tpu.memory_space<vmem>>, %arg5: memref<1x16xf32, #tpu.memory_space<vmem>>, %arg6: memref<16x16xf32, #tpu.memory_space<vmem>>, %arg7: memref<16x16xf32, #tpu.memory_space<vmem>>) attributes {dimension_semantics = [#tpu.dimension_semantics<parallel>, #tpu.dimension_semantics<parallel>, #tpu.dimension_semantics<arbitrary>], iteration_bounds = array<i64: 1, 1, 1>, scalar_prefetch = 0 : i64, scratch_operands = 1 : i64, tpu.core_type = #tpu.core_type<tc>, window_params = [{transform_indices = @transform_0, window_bounds = array<i64: 16, 32>}, {transform_indices = @transform_1, window_bounds = array<i64: 32, 16>}, {transform_indices = @transform_2, window_bounds = array<i64: 1, 16>}, {transform_indices = @transform_3, window_bounds = array<i64: 16, 16>}]} {
    %c0_i32 = arith.constant 0 : i32
    %0 = arith.cmpi eq, %arg2, %c0_i32 : i32
    %1 = arith.extui %0 : i1 to i32
    %c0_i32_0 = arith.constant 0 : i32
    %2 = arith.cmpi ne, %1, %c0_i32_0 : i32
    scf.if %2 {
      %cst_10 = arith.constant 0.000000e+00 : f32
      %14 = vector.broadcast %cst_10 : f32 to vector<16x16xf32>
      %c0_11 = arith.constant 0 : index
      %c0_12 = arith.constant 0 : index
      %15 = vector.load %arg7[%c0_11, %c0_12] : memref<16x16xf32, #tpu.memory_space<vmem>>, vector<16x16xf32>
      tpu.vector_store %arg7[%c0_11, %c0_12], %14 {strides = array<i32>} : memref<16x16xf32, #tpu.memory_space<vmem>>, vector<16x16xf32>,
    } else {
    }
    %c0 = arith.constant 0 : index
    %c0_1 = arith.constant 0 : index
    %3 = vector.load %arg7[%c0, %c0_1] : memref<16x16xf32, #tpu.memory_space<vmem>>, vector<16x16xf32>
    %c0_2 = arith.constant 0 : index
    %c0_3 = arith.constant 0 : index
    %4 = vector.load %arg3[%c0_2, %c0_3] : memref<16x32xf32, #tpu.memory_space<vmem>>, vector<16x32xf32>
    %5 = arith.truncf %4 : vector<16x32xf32> to vector<16x32xbf16>
    %c0_4 = arith.constant 0 : index
    %c0_5 = arith.constant 0 : index
    %6 = vector.load %arg4[%c0_4, %c0_5] : memref<32x16xf32, #tpu.memory_space<vmem>>, vector<32x16xf32>
    %7 = arith.truncf %6 : vector<32x16xf32> to vector<32x16xbf16>
    %cst = arith.constant dense<0.000000e+00> : vector<16x16xf32>
    %8 = tpu.matmul %5, %7, %cst {dimension_numbers = #tpu.dot_dimension_numbers<[1], [0], [0], [1], [0, 0, 1, 1], [], []>} : vector<16x32xbf16>, vector<32x16xbf16>, vector<16x16xf32> -> vector<16x16xf32>
    %9 = arith.addf %3, %8 : vector<16x16xf32>
    %c0_6 = arith.constant 0 : index
    %c0_7 = arith.constant 0 : index
    %10 = vector.load %arg7[%c0_6, %c0_7] : memref<16x16xf32, #tpu.memory_space<vmem>>, vector<16x16xf32>
    tpu.vector_store %arg7[%c0_6, %c0_7], %9 {strides = array<i32>} : memref<16x16xf32, #tpu.memory_space<vmem>>, vector<16x16xf32>,
    %c0_i32_8 = arith.constant 0 : i32
    %11 = arith.cmpi eq, %arg2, %c0_i32_8 : i32
    %12 = arith.extui %11 : i1 to i32
    %c0_i32_9 = arith.constant 0 : i32
    %13 = arith.cmpi ne, %12, %c0_i32_9 : i32
    scf.if %13 {
      %c0_10 = arith.constant 0 : index
      %c0_11 = arith.constant 0 : index
      %14 = vector.load %arg7[%c0_10, %c0_11] : memref<16x16xf32, #tpu.memory_space<vmem>>, vector<16x16xf32>
      %c0_12 = arith.constant 0 : index
      %c0_13 = arith.constant 0 : index
      %15 = vector.load %arg5[%c0_12, %c0_13] : memref<1x16xf32, #tpu.memory_space<vmem>>, vector<1x16xf32>
      %16 = vector.broadcast %15 : vector<1x16xf32> to vector<16x16xf32>
      %17 = arith.addf %14, %16 : vector<16x16xf32>
      %c0_14 = arith.constant 0 : index
      %c0_15 = arith.constant 0 : index
      %18 = vector.load %arg6[%c0_14, %c0_15] : memref<16x16xf32, #tpu.memory_space<vmem>>, vector<16x16xf32>
      tpu.vector_store %arg6[%c0_14, %c0_15], %17 {strides = array<i32>} : memref<16x16xf32, #tpu.memory_space<vmem>>, vector<16x16xf32>,
    } else {
    }
    return
  }
  func.func @transform_0(%arg0: i32, %arg1: i32, %arg2: i32) -> (i32, i32) {
    %c0_i32 = arith.constant 0 : i32
    return %arg0, %arg2 : i32, i32
  }
  func.func @transform_1(%arg0: i32, %arg1: i32, %arg2: i32) -> (i32, i32) {
    %c0_i32 = arith.constant 0 : i32
    return %arg2, %arg1 : i32, i32
  }
  func.func @transform_2(%arg0: i32, %arg1: i32, %arg2: i32) -> (i32, i32) {
    %c0_i32 = arith.constant 0 : i32
    %c0_i32_0 = arith.constant 0 : i32
    return %c0_i32, %arg1 : i32, i32
  }
  func.func @transform_3(%arg0: i32, %arg1: i32, %arg2: i32) -> (i32, i32) {
    %c0_i32 = arith.constant 0 : i32
    return %arg0, %arg1 : i32, i32
  }
}

</mosaic_0001>

<llo_original>
// kernel: transformer_forward.52
$region0: #{transformer_forward.52}
  #allocation0 [shape = 'u32[]', space=smem, size = 0x4, offset = 0x4, fixed_abs, tag = 'smem constant byte address 0x4 - core index']
  #allocation1 [shape = 'u32[144,128]{1,0:T(1,128)}', space=vmem, size = 0x12000, scoped, tag = 'internal scratch']
  #allocation2 [shape = 'f32[16,96]{1,0:T(8,128)}', space=vmem, size = 0x2000, scoped, tag = 'scratch operand']
  %s0 = inlined_call_operand.vmem [shape: f32[16,32], index: 0, kind: input, shape index: {}]
  %s1 = inlined_call_operand.vmem [shape: f32[32,96], index: 1, kind: input, shape index: {}]
  %s2 = inlined_call_operand.vmem [shape: f32[1,96], index: 2, kind: input, shape index: {}]
  %s3 = inlined_call_operand.vmem [shape: f32[16,96], index: 3, kind: output, shape index: {}]
  %s4 = sld [smem:[#allocation0]]
  $region30: #{transformer_forward.52} parent=0
    _
  %s6 = ssub.s32 1, %s4
  %s7 = scalar_select 0, %s6, %s4
  // Predicated region
  $region2: #{transformer_forward.52} parent=0 // pred_check
    _
  $region3: #{transformer_forward.52} parent=0 // pred_check_branch
    %9 = sbr.rel (0) target = $region5
  $region4: #{transformer_forward.52} parent=0 // pred_region
    _
  $region5: #{transformer_forward.52} parent=0 // pred_fallthru
    _
  // Predicated region
  $region6: #{transformer_forward.52} parent=0 // pred_check
    _
  $region7: #{transformer_forward.52} parent=0 // pred_check_branch
    %11 = sbr.rel (0) target = $region9
  $region8: #{transformer_forward.52} parent=0 // pred_region
    _
  $region9: #{transformer_forward.52} parent=0 // pred_fallthru
    _
  // Predicated region
  $region10: #{transformer_forward.52} parent=0 // pred_check
    _
  $region11: #{transformer_forward.52} parent=0 // pred_check_branch
    %13 = sbr.rel (0) target = $region13
  $region12: #{transformer_forward.52} parent=0 // pred_region
    _
  $region13: #{transformer_forward.52} parent=0 // pred_fallthru
    _
  %p15 = scmp.eq.s32.totalorder 0, 0
  // Predicated region
  $region14: #{transformer_forward.52} parent=0 // pred_check
    %p16 = pneg %p15
  $region15: #{transformer_forward.52} parent=0 // pred_check_branch
    %18 = sbr.rel (%p16) target = $region17
  $region16: #{transformer_forward.52} parent=0 // pred_region
    %vm19 = vcmask 785408
    %20 = vst.msk [vmem:[#allocation2] sm:$0xff] %vm19, 0.0
    %21 = vst.msk [vmem:[#allocation2 + $0x8] sm:$0xff] %vm19, 0.0
  $region17: #{transformer_forward.52} parent=0 // pred_fallthru
    _
  %v22 = vld [vmem:[#allocation2] sm:$0xff]
  %v23 = vld [vmem:[#allocation2 + $0x8] sm:$0xff]
  %v24 = vld [vmem:[%s0] sm:$0xff]
  %v25 = vld [vmem:[%s0 + $0x8] sm:$0xff]
  %v26 = vpack.c.bf16 %v25, %v24
  %v27 = vld [vmem:[%s1] sm:$0xff]
  %v28 = vld [vmem:[%s1 + $0x8] sm:$0xff]
  %v29 = vld [vmem:[%s1 + $0x10] sm:$0xff]
  %v30 = vld [vmem:[%s1 + $0x18] sm:$0xff]
  %v31 = vpack.c.bf16 %v28, %v27
  %v32 = vpack.c.bf16 %v30, %v29
  %vm33 = vcmask 261120
  %v35 = vsel %vm33, %v26, 0
  %37 = vmatprep.subr.bf16.mxu0 0
  %38 = vmatpush1.bf16.msra.mxu0 0
  %39 = vmatprep.subr.bf16.mxu0 0
  %40 = vmatpush1.bf16.msra.mxu0 0
  %41 = vmatprep.subr.bf16.mxu0 0
  %42 = vmatpush1.bf16.msra.mxu0 0
  %43 = vmatprep.subr.bf16.mxu0 0
  %44 = vmatpush1.bf16.msra.mxu0 0
  %45 = vmatprep.subr.bf16.mxu0 0
  %46 = vmatpush1.bf16.msra.mxu0 0
  %47 = vmatprep.subr.bf16.mxu0 0
  %48 = vmatpush1.bf16.msra.mxu0 0
  %49 = vmatprep.subr.bf16.mxu0 0
  %50 = vmatpush1.bf16.msra.mxu0 %v32
  %51 = vmatprep.subr.bf16.mxu0 0
  %52 = vmatpush1.bf16.msra.mxu0 %v31
  %53 = vmatprep.subr.bf16.mxu0 0
  %54 = vmatpush2.bf16.msra.mxu0 0
  %55 = vmatprep.subr.bf16.mxu0 0
  %56 = vmatpush2.bf16.msra.mxu0 0
  %57 = vmatprep.subr.bf16.mxu0 0
  %58 = vmatpush2.bf16.msra.mxu0 0
  %59 = vmatprep.subr.bf16.mxu0 0
  %60 = vmatpush2.bf16.msra.mxu0 0
  %61 = vmatprep.subr.bf16.mxu0 0
  %62 = vmatpush2.bf16.msra.mxu0 0
  %63 = vmatprep.subr.bf16.mxu0 0
  %64 = vmatpush2.bf16.msra.mxu0 0
  %65 = vmatprep.subr.bf16.mxu0 0
  %66 = vmatpush2.bf16.msra.mxu0 0
  %67 = vmatprep.subr.bf16.mxu0 0
  %68 = vmatpush2.bf16.msra.mxu0 0
  %69 = vmatprep.mubr.bf16.mxu0 0
  %70 = vmatmul.mubr.bf16.gmra.mxu0 %v35
  %v71 = vpop.f32.mrf.mxu0
  %v72 = vadd.f32 0.0, %v71
  %v73 = vpop.f32.mrf.mxu0
  %v74 = vpop.f32.mrf.mxu0
  %v75 = vadd.f32 0.0, %v74
  %v76 = vpop.f32.mrf.mxu0
  %77 = vdwg.mxu0
  %v78 = vadd.f32 %v22, %v72
  %v79 = vadd.f32 %v23, %v75
  %vm80 = vcmask 785408
  %81 = vst.msk [vmem:[#allocation2] sm:$0xff] %vm80, %v78
  %82 = vst.msk [vmem:[#allocation2 + $0x8] sm:$0xff] %vm80, %v79
  // Predicated region
  $region18: #{transformer_forward.52} parent=0 // pred_check
    %p83 = pneg %p15
  $region19: #{transformer_forward.52} parent=0 // pred_check_branch
    %85 = sbr.rel (%p83) target = $region21
  $region20: #{transformer_forward.52} parent=0 // pred_region
    %v86 = vld [vmem:[#allocation2] sm:$0xff]
    %v87 = vld [vmem:[#allocation2 + $0x8] sm:$0xff]
    %v88 = vld [vmem:[%s2] sm:$0x1]
    %v90 = vlaneseq
    %v91 = vshrl.u32 %v90, 7
    %v92 = vsub.s32 0, %v91
    %v93 = vrot.slane %v88, %v92
    %v95 = vadd.f32 %v86, %v93
    %v96 = vadd.f32 %v87, %v93
    %97 = vst.msk [vmem:[%s3] sm:$0xff] %vm80, %v95
    %98 = vst.msk [vmem:[%s3 + $0x8] sm:$0xff] %vm80, %v96
  $region21: #{transformer_forward.52} parent=0 // pred_fallthru
    _
  // Predicated region
  $region22: #{transformer_forward.52} parent=0 // pred_check
    _
  $region23: #{transformer_forward.52} parent=0 // pred_check_branch
    %100 = sbr.rel (0) target = $region25
  $region24: #{transformer_forward.52} parent=0 // pred_region
    _
  $region25: #{transformer_forward.52} parent=0 // pred_fallthru
    _
  // Predicated region
  $region26: #{transformer_forward.52} parent=0 // pred_check
    _
  $region27: #{transformer_forward.52} parent=0 // pred_check_branch
    %102 = sbr.rel (0) target = $region29
  $region28: #{transformer_forward.52} parent=0 // pred_region
    _
  $region29: #{transformer_forward.52} parent=0 // pred_fallthru
    _

// kernel: transformer_forward.54
$region0: #{transformer_forward.54}
  #allocation0 [shape = 'u32[]', space=smem, size = 0x4, offset = 0x4, fixed_abs, tag = 'smem constant byte address 0x4 - core index']
  #allocation1 [shape = 'u32[144,128]{1,0:T(1,128)}', space=vmem, size = 0x12000, scoped, tag = 'internal scratch']
  #allocation2 [shape = 'f32[16,32]{1,0:T(8,128)}', space=vmem, size = 0x2000, scoped, tag = 'scratch operand']
  %s0 = inlined_call_operand.vmem [shape: f32[16,32], index: 0, kind: input, shape index: {}]
  %s1 = inlined_call_operand.vmem [shape: f32[32,32], index: 1, kind: input, shape index: {}]
  %s2 = inlined_call_operand.vmem [shape: f32[1,32], index: 2, kind: input, shape index: {}]
  %s3 = inlined_call_operand.vmem [shape: f32[16,32], index: 3, kind: output, shape index: {}]
  %s4 = sld [smem:[#allocation0]]
  $region30: #{transformer_forward.54} parent=0
    _
  %s6 = ssub.s32 1, %s4
  %s7 = scalar_select 0, %s6, %s4
  // Predicated region
  $region2: #{transformer_forward.54} parent=0 // pred_check
    _
  $region3: #{transformer_forward.54} parent=0 // pred_check_branch
    %9 = sbr.rel (0) target = $region5
  $region4: #{transformer_forward.54} parent=0 // pred_region
    _
  $region5: #{transformer_forward.54} parent=0 // pred_fallthru
    _
  // Predicated region
  $region6: #{transformer_forward.54} parent=0 // pred_check
    _
  $region7: #{transformer_forward.54} parent=0 // pred_check_branch
    %11 = sbr.rel (0) target = $region9
  $region8: #{transformer_forward.54} parent=0 // pred_region
    _
  $region9: #{transformer_forward.54} parent=0 // pred_fallthru
    _
  // Predicated region
  $region10: #{transformer_forward.54} parent=0 // pred_check
    _
  $region11: #{transformer_forward.54} parent=0 // pred_check_branch
    %13 = sbr.rel (0) target = $region13
  $region12: #{transformer_forward.54} parent=0 // pred_region
    _
  $region13: #{transformer_forward.54} parent=0 // pred_fallthru
    _
  %p15 = scmp.eq.s32.totalorder 0, 0
  // Predicated region
  $region14: #{transformer_forward.54} parent=0 // pred_check
    %p16 = pneg %p15
  $region15: #{transformer_forward.54} parent=0 // pred_check_branch
    %18 = sbr.rel (%p16) target = $region17
  $region16: #{transformer_forward.54} parent=0 // pred_region
    %vm19 = vcmask 261120
    %20 = vst.msk [vmem:[#allocation2] sm:$0xff] %vm19, 0.0
    %21 = vst.msk [vmem:[#allocation2 + $0x8] sm:$0xff] %vm19, 0.0
  $region17: #{transformer_forward.54} parent=0 // pred_fallthru
    _
  %v22 = vld [vmem:[#allocation2] sm:$0xff]
  %v23 = vld [vmem:[#allocation2 + $0x8] sm:$0xff]
  %v24 = vld [vmem:[%s0] sm:$0xff]
  %v25 = vld [vmem:[%s0 + $0x8] sm:$0xff]
  %v26 = vpack.c.bf16 %v25, %v24
  %v27 = vld [vmem:[%s1] sm:$0xff]
  %v28 = vld [vmem:[%s1 + $0x8] sm:$0xff]
  %v29 = vld [vmem:[%s1 + $0x10] sm:$0xff]
  %v30 = vld [vmem:[%s1 + $0x18] sm:$0xff]
  %v31 = vpack.c.bf16 %v28, %v27
  %v32 = vpack.c.bf16 %v30, %v29
  %vm33 = vcmask 261120
  %v35 = vsel %vm33, %v26, 0
  %37 = vmatprep.subr.bf16.mxu0 0
  %38 = vmatpush1.bf16.msra.mxu0 0
  %39 = vmatprep.subr.bf16.mxu0 0
  %40 = vmatpush1.bf16.msra.mxu0 0
  %41 = vmatprep.subr.bf16.mxu0 0
  %42 = vmatpush1.bf16.msra.mxu0 0
  %43 = vmatprep.subr.bf16.mxu0 0
  %44 = vmatpush1.bf16.msra.mxu0 0
  %45 = vmatprep.subr.bf16.mxu0 0
  %46 = vmatpush1.bf16.msra.mxu0 0
  %47 = vmatprep.subr.bf16.mxu0 0
  %48 = vmatpush1.bf16.msra.mxu0 0
  %49 = vmatprep.subr.bf16.mxu0 0
  %50 = vmatpush1.bf16.msra.mxu0 %v32
  %51 = vmatprep.subr.bf16.mxu0 0
  %52 = vmatpush1.bf16.msra.mxu0 %v31
  %53 = vmatprep.subr.bf16.mxu0 0
  %54 = vmatpush2.bf16.msra.mxu0 0
  %55 = vmatprep.subr.bf16.mxu0 0
  %56 = vmatpush2.bf16.msra.mxu0 0
  %57 = vmatprep.subr.bf16.mxu0 0
  %58 = vmatpush2.bf16.msra.mxu0 0
  %59 = vmatprep.subr.bf16.mxu0 0
  %60 = vmatpush2.bf16.msra.mxu0 0
  %61 = vmatprep.subr.bf16.mxu0 0
  %62 = vmatpush2.bf16.msra.mxu0 0
  %63 = vmatprep.subr.bf16.mxu0 0
  %64 = vmatpush2.bf16.msra.mxu0 0
  %65 = vmatprep.subr.bf16.mxu0 0
  %66 = vmatpush2.bf16.msra.mxu0 0
  %67 = vmatprep.subr.bf16.mxu0 0
  %68 = vmatpush2.bf16.msra.mxu0 0
  %69 = vmatprep.mubr.bf16.mxu0 0
  %70 = vmatmul.mubr.bf16.gmra.mxu0 %v35
  %v71 = vpop.f32.mrf.mxu0
  %v72 = vadd.f32 0.0, %v71
  %v73 = vpop.f32.mrf.mxu0
  %v74 = vpop.f32.mrf.mxu0
  %v75 = vadd.f32 0.0, %v74
  %v76 = vpop.f32.mrf.mxu0
  %77 = vdwg.mxu0
  %v78 = vadd.f32 %v22, %v72
  %v79 = vadd.f32 %v23, %v75
  %80 = vst.msk [vmem:[#allocation2] sm:$0xff] %vm33, %v78
  %81 = vst.msk [vmem:[#allocation2 + $0x8] sm:$0xff] %vm33, %v79
  // Predicated region
  $region18: #{transformer_forward.54} parent=0 // pred_check
    %p82 = pneg %p15
  $region19: #{transformer_forward.54} parent=0 // pred_check_branch
    %84 = sbr.rel (%p82) target = $region21
  $region20: #{transformer_forward.54} parent=0 // pred_region
    %v85 = vld [vmem:[#allocation2] sm:$0xff]
    %v86 = vld [vmem:[#allocation2 + $0x8] sm:$0xff]
    %v87 = vld [vmem:[%s2] sm:$0x1]
    %v89 = vlaneseq
    %v90 = vshrl.u32 %v89, 7
    %v91 = vsub.s32 0, %v90
    %v92 = vrot.slane %v87, %v91
    %v94 = vadd.f32 %v85, %v92
    %v95 = vadd.f32 %v86, %v92
    %96 = vst.msk [vmem:[%s3] sm:$0xff] %vm33, %v94
    %97 = vst.msk [vmem:[%s3 + $0x8] sm:$0xff] %vm33, %v95
  $region21: #{transformer_forward.54} parent=0 // pred_fallthru
    _
  // Predicated region
  $region22: #{transformer_forward.54} parent=0 // pred_check
    _
  $region23: #{transformer_forward.54} parent=0 // pred_check_branch
    %99 = sbr.rel (0) target = $region25
  $region24: #{transformer_forward.54} parent=0 // pred_region
    _
  $region25: #{transformer_forward.54} parent=0 // pred_fallthru
    _
  // Predicated region
  $region26: #{transformer_forward.54} parent=0 // pred_check
    _
  $region27: #{transformer_forward.54} parent=0 // pred_check_branch
    %101 = sbr.rel (0) target = $region29
  $region28: #{transformer_forward.54} parent=0 // pred_region
    _
  $region29: #{transformer_forward.54} parent=0 // pred_fallthru
    _

// kernel: transformer_forward.55
$region0: #{transformer_forward.55}
  #allocation0 [shape = 'u32[]', space=smem, size = 0x4, offset = 0x4, fixed_abs, tag = 'smem constant byte address 0x4 - core index']
  #allocation1 [shape = 'u32[144,128]{1,0:T(1,128)}', space=vmem, size = 0x12000, scoped, tag = 'internal scratch']
  %s0 = inlined_call_operand.vmem [shape: f32[16,32], index: 0, kind: input, shape index: {}]
  %s1 = inlined_call_operand.vmem [shape: f32[16,32], index: 1, kind: input, shape index: {}]
  %s2 = inlined_call_operand.vmem [shape: f32[1,32], index: 2, kind: input, shape index: {}]
  %s3 = inlined_call_operand.vmem [shape: f32[1,32], index: 3, kind: input, shape index: {}]
  %s4 = inlined_call_operand.vmem [shape: f32[16,32], index: 4, kind: output, shape index: {}]
  %s5 = sld [smem:[#allocation0]]
  $region26: #{transformer_forward.55} parent=0
    _
  %s7 = ssub.s32 1, %s5
  %s8 = scalar_select 0, %s7, %s5
  // Predicated region
  $region2: #{transformer_forward.55} parent=0 // pred_check
    _
  $region3: #{transformer_forward.55} parent=0 // pred_check_branch
    %10 = sbr.rel (0) target = $region5
  $region4: #{transformer_forward.55} parent=0 // pred_region
    _
  $region5: #{transformer_forward.55} parent=0 // pred_fallthru
    _
  // Predicated region
  $region6: #{transformer_forward.55} parent=0 // pred_check
    _
  $region7: #{transformer_forward.55} parent=0 // pred_check_branch
    %12 = sbr.rel (0) target = $region9
  $region8: #{transformer_forward.55} parent=0 // pred_region
    _
  $region9: #{transformer_forward.55} parent=0 // pred_fallthru
    _
  // Predicated region
  $region10: #{transformer_forward.55} parent=0 // pred_check
    _
  $region11: #{transformer_forward.55} parent=0 // pred_check_branch
    %14 = sbr.rel (0) target = $region13
  $region12: #{transformer_forward.55} parent=0 // pred_region
    _
  $region13: #{transformer_forward.55} parent=0 // pred_fallthru
    _
  // Predicated region
  $region14: #{transformer_forward.55} parent=0 // pred_check
    _
  $region15: #{transformer_forward.55} parent=0 // pred_check_branch
    %16 = sbr.rel (0) target = $region17
  $region16: #{transformer_forward.55} parent=0 // pred_region
    _
  $region17: #{transformer_forward.55} parent=0 // pred_fallthru
    _
  %v17 = vld [vmem:[%s0] sm:$0xff]
  %v18 = vld [vmem:[%s0 + $0x8] sm:$0xff]
  %v19 = vld [vmem:[%s1] sm:$0xff]
  %v20 = vld [vmem:[%s1 + $0x8] sm:$0xff]
  %v21 = vadd.f32 %v17, %v19
  %v22 = vadd.f32 %v18, %v20
  %vm23 = vcmask 261120
  %v24 = vsel %vm23, %v21, 0.0
  %25 = vadd.xlane.f32.xlu0 %v24
  %v26 = vpop.xlane.xlu0 %25
  %v27 = vsel %vm23, %v22, 0.0
  %28 = vadd.xlane.f32.xlu0 %v27
  %v29 = vpop.xlane.xlu0 %28
  %v30 = vrcp.pop 32.0
  %v31 = vmul.f32 %v26, %v30
  %v32 = vmul.f32 %v29, %v30
  %v33 = vsub.f32 %v21, %v31
  %v34 = vsub.f32 %v22, %v32
  %v35 = vmul.f32 %v33, %v33
  %v36 = vmul.f32 %v34, %v34
  %v37 = vsel %vm23, %v35, 0.0
  %38 = vadd.xlane.f32.xlu0 %v37
  %v39 = vpop.xlane.xlu0 %38
  %v40 = vsel %vm23, %v36, 0.0
  %41 = vadd.xlane.f32.xlu0 %v40
  %v42 = vpop.xlane.xlu0 %41
  %v43 = vmul.f32 %v39, %v30
  %v44 = vmul.f32 %v42, %v30
  %v45 = vadd.f32 %v43, 1e-05
  %v46 = vadd.f32 %v44, 1e-05
  %v47 = vrsqrt.pop %v45
  %v48 = vrsqrt.pop %v46
  %v49 = vmul.f32 %v33, %v47
  %v50 = vmul.f32 %v34, %v48
  %v51 = vld [vmem:[%s2] sm:$0x1]
  %v53 = vlaneseq
  %v54 = vshrl.u32 %v53, 7
  %v55 = vsub.s32 0, %v54
  %v56 = vrot.slane %v51, %v55
  %v58 = vmul.f32 %v49, %v56
  %v59 = vmul.f32 %v50, %v56
  %v60 = vld [vmem:[%s3] sm:$0x1]
  %v62 = vlaneseq
  %v63 = vshrl.u32 %v62, 7
  %v64 = vsub.s32 0, %v63
  %v65 = vrot.slane %v60, %v64
  %v67 = vadd.f32 %v58, %v65
  %v68 = vadd.f32 %v59, %v65
  %69 = vst.msk [vmem:[%s4] sm:$0xff] %vm23, %v67
  %70 = vst.msk [vmem:[%s4 + $0x8] sm:$0xff] %vm23, %v68
  // Predicated region
  $region18: #{transformer_forward.55} parent=0 // pred_check
    _
  $region19: #{transformer_forward.55} parent=0 // pred_check_branch
    %72 = sbr.rel (0) target = $region21
  $region20: #{transformer_forward.55} parent=0 // pred_region
    _
  $region21: #{transformer_forward.55} parent=0 // pred_fallthru
    _
  // Predicated region
  $region22: #{transformer_forward.55} parent=0 // pred_check
    _
  $region23: #{transformer_forward.55} parent=0 // pred_check_branch
    %74 = sbr.rel (0) target = $region25
  $region24: #{transformer_forward.55} parent=0 // pred_region
    _
  $region25: #{transformer_forward.55} parent=0 // pred_fallthru
    _

// kernel: transformer_forward.53
$region0: #{transformer_forward.53}
  #allocation0 [shape = 'u32[]', space=smem, size = 0x4, offset = 0x4, fixed_abs, tag = 'smem constant byte address 0x4 - core index']
  #allocation1 [shape = 'u32[144,128]{1,0:T(1,128)}', space=vmem, size = 0x12000, scoped, tag = 'internal scratch']
  %s0 = inlined_call_operand.vmem [shape: f32[2,2,8,16], index: 0, kind: input, shape index: {}]
  %s1 = inlined_call_operand.vmem [shape: f32[2,2,8,16], index: 1, kind: input, shape index: {}]
  %s2 = inlined_call_operand.vmem [shape: f32[2,2,8,16], index: 2, kind: input, shape index: {}]
  %s3 = inlined_call_operand.vmem [shape: f32[2,2,8,16], index: 3, kind: output, shape index: {}]
  %s4 = sld [smem:[#allocation0]]
  $region45: #{transformer_forward.53} parent=0
    _
  %s6 = ssub.s32 1, %s4
  %s7 = scalar_select 0, %s6, %s4
  loop: start=0, step=1, limit=6
  $region2: #{transformer_forward.53} parent=0 // loop_pre_header
    _
  $region3: #{transformer_forward.53} parent=0 // loop_header
    %s9 = sphi 0, %s13
    %p10 = scmp.ge.s32.totalorder %s9, 6
    %s16 = sphi 0, %s28
    %s17 = sphi 0, %s24
    %s18 = sphi 0, %s16
    %s19 = sphi 0, %s17
    %s20 = sphi 0, %s18
    %s21 = sphi 0, %s19
    %s33 = sphi 0, %s35
    %s36 = sphi 0, %s33
    %s37 = sphi 0, %s36
    %s53 = sphi 0, %s37
    %s61 = sphi 0, %s63
    %s64 = sphi 0, %s61
    %s65 = sphi 0, %s64
    %s81 = sphi 0, %s65
    %s89 = sphi 0, %s91
    %s92 = sphi 0, %s89
    %s93 = sphi 0, %s92
    %s109 = sphi 0, %s93
    %s117 = sphi 0, %s119
    %s120 = sphi 0, %s117
    %s121 = sphi 0, %s120
    %s137 = sphi 0, %s121
  $region4: #{transformer_forward.53} parent=0 // loop_header_branch
    %12 = sbr.rel (%p10) target = $region8
  $region5: #{transformer_forward.53} parent=0 // loop_body
    %s14 = ssub.s32 %s9, 1
    %s15 = ssub.s32 %s9, 2
    %s22 = sadd.s32 1, %s17
    %p23 = scmp.ge.s32.totalorder %s22, 2
    %s24 = scalar_select %p23, 0, %s22
    %s25 = sadd.s32 1, %s16
    %s26 = scalar_select %p23, %s25, %s16
    %p27 = scmp.ge.s32.totalorder %s26, 2
    %s28 = scalar_select %p27, 0, %s26
    %s29 = ssub.s32 %s16, %s28
    %s30 = ssub.s32 %s17, %s24
    %s31 = sor.u32 %s29, %s30
    %p32 = scmp.eq.s32.totalorder %s31, 0
    %s34 = sadd.s32 %s33, 1
    %s35 = scalar_select %p32, %s33, %s34
    %p38 = pneg %p32
    %p39 = scmp.eq.s32.totalorder %s9, 3
    %p40 = por %p38, %p39
    %p41 = scmp.ne.s32.totalorder %s33, %s36
    %p42 = scmp.eq.s32.totalorder %s9, 0
    %p43 = por %p41, %p42
    %p44 = scmp.ne.s32.totalorder %s33, %s36
    %p45 = scmp.eq.s32.totalorder %s14, 3
    %p46 = por %p44, %p45
    %p47 = scmp.ne.s32.totalorder %s36, %s37
    %p48 = scmp.eq.s32.totalorder %s14, 0
    %p49 = por %p47, %p48
    %p50 = scmp.ne.s32.totalorder %s36, %s37
    %p51 = scmp.eq.s32.totalorder %s15, 3
    %p52 = por %p50, %p51
    %p54 = scmp.ne.s32.totalorder %s37, %s53
    %p55 = scmp.eq.s32.totalorder %s15, 0
    %p56 = por %p54, %p55
    %s57 = ssub.s32 %s16, %s28
    %s58 = ssub.s32 %s17, %s24
    %s59 = sor.u32 %s57, %s58
    %p60 = scmp.eq.s32.totalorder %s59, 0
    %s62 = sadd.s32 %s61, 1
    %s63 = scalar_select %p60, %s61, %s62
    %p66 = pneg %p60
    %p67 = scmp.eq.s32.totalorder %s9, 3
    %p68 = por %p66, %p67
    %p69 = scmp.ne.s32.totalorder %s61, %s64
    %p70 = scmp.eq.s32.totalorder %s9, 0
    %p71 = por %p69, %p70
    %p72 = scmp.ne.s32.totalorder %s61, %s64
    %p73 = scmp.eq.s32.totalorder %s14, 3
    %p74 = por %p72, %p73
    %p75 = scmp.ne.s32.totalorder %s64, %s65
    %p76 = scmp.eq.s32.totalorder %s14, 0
    %p77 = por %p75, %p76
    %p78 = scmp.ne.s32.totalorder %s64, %s65
    %p79 = scmp.eq.s32.totalorder %s15, 3
    %p80 = por %p78, %p79
    %p82 = scmp.ne.s32.totalorder %s65, %s81
    %p83 = scmp.eq.s32.totalorder %s15, 0
    %p84 = por %p82, %p83
    %s85 = ssub.s32 %s16, %s28
    %s86 = ssub.s32 %s17, %s24
    %s87 = sor.u32 %s85, %s86
    %p88 = scmp.eq.s32.totalorder %s87, 0
    %s90 = sadd.s32 %s89, 1
    %s91 = scalar_select %p88, %s89, %s90
    %p94 = pneg %p88
    %p95 = scmp.eq.s32.totalorder %s9, 3
    %p96 = por %p94, %p95
    %p97 = scmp.ne.s32.totalorder %s89, %s92
    %p98 = scmp.eq.s32.totalorder %s9, 0
    %p99 = por %p97, %p98
    %p100 = scmp.ne.s32.totalorder %s89, %s92
    %p101 = scmp.eq.s32.totalorder %s14, 3
    %p102 = por %p100, %p101
    %p103 = scmp.ne.s32.totalorder %s92, %s93
    %p104 = scmp.eq.s32.totalorder %s14, 0
    %p105 = por %p103, %p104
    %p106 = scmp.ne.s32.totalorder %s92, %s93
    %p107 = scmp.eq.s32.totalorder %s15, 3
    %p108 = por %p106, %p107
    %p110 = scmp.ne.s32.totalorder %s93, %s109
    %p111 = scmp.eq.s32.totalorder %s15, 0
    %p112 = por %p110, %p111
    %s113 = ssub.s32 %s16, %s28
    %s114 = ssub.s32 %s17, %s24
    %s115 = sor.u32 %s113, %s114
    %p116 = scmp.eq.s32.totalorder %s115, 0
    %s118 = sadd.s32 %s117, 1
    %s119 = scalar_select %p116, %s117, %s118
    %p122 = pneg %p116
    %p123 = scmp.eq.s32.totalorder %s9, 3
    %p124 = por %p122, %p123
    %p125 = scmp.ne.s32.totalorder %s117, %s120
    %p126 = scmp.eq.s32.totalorder %s9, 0
    %p127 = por %p125, %p126
    %p128 = scmp.ne.s32.totalorder %s117, %s120
    %p129 = scmp.eq.s32.totalorder %s14, 3
    %p130 = por %p128, %p129
    %p131 = scmp.ne.s32.totalorder %s120, %s121
    %p132 = scmp.eq.s32.totalorder %s14, 0
    %p133 = por %p131, %p132
    %p134 = scmp.ne.s32.totalorder %s120, %s121
    %p135 = scmp.eq.s32.totalorder %s15, 3
    %p136 = por %p134, %p135
    %p138 = scmp.ne.s32.totalorder %s121, %s137
    %p139 = scmp.eq.s32.totalorder %s15, 0
    %p140 = por %p138, %p139
    %p141 = scmp.le.s32.totalorder 1, %s9
    %p142 = scmp.lt.s32.totalorder %s9, 5
    %p143 = pnand %p141, %p142
    %p144 = pneg %p143
    // Predicated region
    $region9: #{transformer_forward.53} parent=5 // pred_check
      _
    $region10: #{transformer_forward.53} parent=5 // pred_check_branch
      %146 = sbr.rel (%p143) target = $region12
    $region11: #{transformer_forward.53} parent=5 // pred_region
      %s147 = ssub.s32 %s9, 1
    $region12: #{transformer_forward.53} parent=5 // pred_fallthru
      _
    %p148 = scmp.lt.s32.totalorder %s9, 4
    // Predicated region
    $region13: #{transformer_forward.53} parent=5 // pred_check
      %p149 = pneg %p148
    $region14: #{transformer_forward.53} parent=5 // pred_check_branch
      %151 = sbr.rel (%p149) target = $region16
    $region15: #{transformer_forward.53} parent=5 // pred_region
      // Predicated region
      $region17: #{transformer_forward.53} parent=15 // pred_check
        %p152 = pneg %p43
      $region18: #{transformer_forward.53} parent=15 // pred_check_branch
        %154 = sbr.rel (%p152) target = $region20
      $region19: #{transformer_forward.53} parent=15 // pred_region
        %p155 = scmp.lt.s32.totalorder %s16, 1
        %s156 = scalar_select %p155, %s16, 1
        %p157 = scmp.lt.s32.totalorder %s17, 1
        %s158 = scalar_select %p157, %s17, 1
        %s159 = smul.addr %s156, 2
        %s160 = sadd.s32 %s158, %s159
        %s161 = smul.addr %s160, 8
        %s162 = scalar_lea.vmem %s0, %s161
      $region20: #{transformer_forward.53} parent=15 // pred_fallthru
        _
      // Predicated region
      $region21: #{transformer_forward.53} parent=15 // pred_check
        %p163 = pneg %p71
      $region22: #{transformer_forward.53} parent=15 // pred_check_branch
        %165 = sbr.rel (%p163) target = $region24
      $region23: #{transformer_forward.53} parent=15 // pred_region
        %p166 = scmp.lt.s32.totalorder %s16, 1
        %s167 = scalar_select %p166, %s16, 1
        %p168 = scmp.lt.s32.totalorder %s17, 1
        %s169 = scalar_select %p168, %s17, 1
        %s170 = smul.addr %s167, 2
        %s171 = sadd.s32 %s169, %s170
        %s172 = smul.addr %s171, 8
        %s173 = scalar_lea.vmem %s1, %s172
      $region24: #{transformer_forward.53} parent=15 // pred_fallthru
        _
      // Predicated region
      $region25: #{transformer_forward.53} parent=15 // pred_check
        %p174 = pneg %p99
      $region26: #{transformer_forward.53} parent=15 // pred_check_branch
        %176 = sbr.rel (%p174) target = $region28
      $region27: #{transformer_forward.53} parent=15 // pred_region
        %p177 = scmp.lt.s32.totalorder %s16, 1
        %s178 = scalar_select %p177, %s16, 1
        %p179 = scmp.lt.s32.totalorder %s17, 1
        %s180 = scalar_select %p179, %s17, 1
        %s181 = smul.addr %s178, 2
        %s182 = sadd.s32 %s180, %s181
        %s183 = smul.addr %s182, 8
        %s184 = scalar_lea.vmem %s2, %s183
      $region28: #{transformer_forward.53} parent=15 // pred_fallthru
        _
    $region16: #{transformer_forward.53} parent=5 // pred_fallthru
      _
    %p185 = scmp.le.s32.totalorder 1, %s9
    %p186 = scmp.lt.s32.totalorder %s9, 5
    %p187 = pnand %p185, %p186
    %p188 = pneg %p187
    // Predicated region
    $region29: #{transformer_forward.53} parent=5 // pred_check
      _
    $region30: #{transformer_forward.53} parent=5 // pred_check_branch
      %190 = sbr.rel (%p187) target = $region32
    $region31: #{transformer_forward.53} parent=5 // pred_region
      %s191 = ssub.s32 %s9, 1
      %p192 = scmp.lt.s32.totalorder %s18, 1
      %s193 = scalar_select %p192, %s18, 1
      %p194 = scmp.lt.s32.totalorder %s19, 1
      %s195 = scalar_select %p194, %s19, 1
      %s196 = smul.addr %s193, 2
      %s197 = sadd.s32 %s195, %s196
      %s198 = smul.addr %s197, 8
      %s199 = scalar_lea.vmem %s0, %s198
      %p200 = pneg %p49
      %p201 = pneg %p46
      %p202 = scmp.lt.s32.totalorder %s18, 1
      %s203 = scalar_select %p202, %s18, 1
      %p204 = scmp.lt.s32.totalorder %s19, 1
      %s205 = scalar_select %p204, %s19, 1
      %s206 = smul.addr %s203, 2
      %s207 = sadd.s32 %s205, %s206
      %s208 = smul.addr %s207, 8
      %s209 = scalar_lea.vmem %s1, %s208
      %p210 = pneg %p77
      %p211 = pneg %p74
      %p212 = scmp.lt.s32.totalorder %s18, 1
      %s213 = scalar_select %p212, %s18, 1
      %p214 = scmp.lt.s32.totalorder %s19, 1
      %s215 = scalar_select %p214, %s19, 1
      %s216 = smul.addr %s213, 2
      %s217 = sadd.s32 %s215, %s216
      %s218 = smul.addr %s217, 8
      %s219 = scalar_lea.vmem %s2, %s218
      %p220 = pneg %p105
      %p221 = pneg %p102
      %p222 = pneg %p133
      %p223 = pneg %p130
      %p224 = scmp.lt.s32.totalorder %s18, 1
      %s225 = scalar_select %p224, %s18, 1
      %p226 = scmp.lt.s32.totalorder %s19, 1
      %s227 = scalar_select %p226, %s19, 1
      %s228 = smul.addr %s225, 2
      %s229 = sadd.s32 %s227, %s228
      %s230 = smul.addr %s229, 8
      %s231 = scalar_lea.vmem %s3, %s230
      %p232 = scmp.lt.s32.totalorder %s18, 1
      %s233 = scalar_select %p232, %s18, 1
      %p234 = scmp.lt.s32.totalorder %s19, 1
      %s235 = scalar_select %p234, %s19, 1
      %s236 = smul.addr %s233, 2
      %s237 = sadd.s32 %s235, %s236
      %s238 = smul.addr %s237, 8
      %s239 = scalar_lea.vmem %s0, %s238
      %p240 = scmp.lt.s32.totalorder %s18, 1
      %s241 = scalar_select %p240, %s18, 1
      %p242 = scmp.lt.s32.totalorder %s19, 1
      %s243 = scalar_select %p242, %s19, 1
      %s244 = smul.addr %s241, 2
      %s245 = sadd.s32 %s243, %s244
      %s246 = smul.addr %s245, 8
      %s247 = scalar_lea.vmem %s1, %s246
      %p248 = scmp.lt.s32.totalorder %s18, 1
      %s249 = scalar_select %p248, %s18, 1
      %p250 = scmp.lt.s32.totalorder %s19, 1
      %s251 = scalar_select %p250, %s19, 1
      %s252 = smul.addr %s249, 2
      %s253 = sadd.s32 %s251, %s252
      %s254 = smul.addr %s253, 8
      %s255 = scalar_lea.vmem %s2, %s254
      %p256 = scmp.lt.s32.totalorder %s18, 1
      %s257 = scalar_select %p256, %s18, 1
      %p258 = scmp.lt.s32.totalorder %s19, 1
      %s259 = scalar_select %p258, %s19, 1
      %s260 = smul.addr %s257, 2
      %s261 = sadd.s32 %s259, %s260
      %s262 = smul.addr %s261, 8
      %s263 = scalar_lea.vmem %s3, %s262
      %v265 = vld [vmem:[%s239] sm:$0xff]
      %v266 = vld [vmem:[%s247] sm:$0xff]
      %v267 = vld [vmem:[%s255] sm:$0xff]
      %v268 = vpack.c.bf16 %v265, %v265
      %v269 = vpack.c.bf16 %v266, %v266
      %vm270 = vcmask 130048
      %v272 = vsel %vm270, %v268, 0
      %v275 = vsel %vm270, %v269, 0
      %277 = vmatprep.subr.bf16.mxu0 0
      %278 = vmatpush1.bf16.xpose.msra.mxu0 0
      %279 = vmatprep.subr.bf16.mxu0 0
      %280 = vmatpush1.bf16.xpose.msra.mxu0 0
      %281 = vmatprep.subr.bf16.mxu0 0
      %282 = vmatpush1.bf16.xpose.msra.mxu0 0
      %283 = vmatprep.subr.bf16.mxu0 0
      %284 = vmatpush1.bf16.xpose.msra.mxu0 0
      %285 = vmatprep.subr.bf16.mxu0 0
      %286 = vmatpush1.bf16.xpose.msra.mxu0 0
      %287 = vmatprep.subr.bf16.mxu0 0
      %288 = vmatpush1.bf16.xpose.msra.mxu0 0
      %289 = vmatprep.subr.bf16.mxu0 0
      %290 = vmatpush1.bf16.xpose.msra.mxu0 0
      %291 = vmatprep.subr.bf16.mxu0 0
      %292 = vmatpush1.bf16.xpose.msra.mxu0 %v275
      %293 = vmatprep.subr.bf16.mxu0 0
      %294 = vmatpush2.bf16.xpose.msra.mxu0 0
      %295 = vmatprep.subr.bf16.mxu0 0
      %296 = vmatpush2.bf16.xpose.msra.mxu0 0
      %297 = vmatprep.subr.bf16.mxu0 0
      %298 = vmatpush2.bf16.xpose.msra.mxu0 0
      %299 = vmatprep.subr.bf16.mxu0 0
      %300 = vmatpush2.bf16.xpose.msra.mxu0 0
      %301 = vmatprep.subr.bf16.mxu0 0
      %302 = vmatpush2.bf16.xpose.msra.mxu0 0
      %303 = vmatprep.subr.bf16.mxu0 0
      %304 = vmatpush2.bf16.xpose.msra.mxu0 0
      %305 = vmatprep.subr.bf16.mxu0 0
      %306 = vmatpush2.bf16.xpose.msra.mxu0 0
      %307 = vmatprep.subr.bf16.mxu0 0
      %308 = vmatpush2.bf16.xpose.msra.mxu0 0
      %309 = vmatprep.mubr.bf16.mxu0 0
      %310 = vmatmul.mubr.bf16.gmra.mxu0 %v272
      %v311 = vpop.f32.mrf.mxu0
      %v312 = vadd.f32 0.0, %v311
      %v313 = vpop.f32.mrf.mxu0
      %v314 = vpop.f32.mrf.mxu0
      %v315 = vpop.f32.mrf.mxu0
      %316 = vdwg.mxu0
      %v317 = vmul.f32 %v312, 0.25
      %v318 = vlaneseq
      %v319 = vshrl.u32 %v318, 7
      %v320 = vlaneseq
      %v321 = vand.u32 %v320, 127
      %vm322 = vcmp.gt.s32.totalorder %v321, %v319
      %v323 = vsel %vm322, -1e+30, %v317
      %vm324 = vcmask 64512
      %v325 = vsel %vm324, %v323, -inf
      %326 = vmax.xlane.f32.xlu0 %v325
      %v327 = vpop.xlane.xlu0 %326
      %v328 = vsub.f32 %v323, %v327
      %v329 = vmul.f32 %v328, 1.442695
      %v330 = vpow.pop %v329
      %v331 = vsel %vm324, %v330, 0.0
      %332 = vadd.xlane.f32.xlu0 %v331
      %v333 = vpop.xlane.xlu0 %332
      %v334 = vrcp.pop %v333
      %v335 = vmul.f32 %v330, %v334
      %v336 = vpack.c.bf16 %v335, %v335
      %v337 = vpack.c.bf16 %v267, %v267
      %v339 = vsel %vm324, %v336, 0
      %vm341 = vcmask 1043456
      %v343 = vsel %vm341, %v337, 0
      %345 = vmatprep.subr.bf16.mxu0 0
      %346 = vmatpush1.bf16.msra.mxu0 0
      %347 = vmatprep.subr.bf16.mxu0 0
      %348 = vmatpush1.bf16.msra.mxu0 0
      %349 = vmatprep.subr.bf16.mxu0 0
      %350 = vmatpush1.bf16.msra.mxu0 0
      %351 = vmatprep.subr.bf16.mxu0 0
      %352 = vmatpush1.bf16.msra.mxu0 0
      %353 = vmatprep.subr.bf16.mxu0 0
      %354 = vmatpush1.bf16.msra.mxu0 0
      %355 = vmatprep.subr.bf16.mxu0 0
      %356 = vmatpush1.bf16.msra.mxu0 0
      %357 = vmatprep.subr.bf16.mxu0 0
      %358 = vmatpush1.bf16.msra.mxu0 0
      %359 = vmatprep.subr.bf16.mxu0 0
      %360 = vmatpush1.bf16.msra.mxu0 %v343
      %361 = vmatprep.subr.bf16.mxu0 0
      %362 = vmatpush2.bf16.msra.mxu0 0
      %363 = vmatprep.subr.bf16.mxu0 0
      %364 = vmatpush2.bf16.msra.mxu0 0
      %365 = vmatprep.subr.bf16.mxu0 0
      %366 = vmatpush2.bf16.msra.mxu0 0
      %367 = vmatprep.subr.bf16.mxu0 0
      %368 = vmatpush2.bf16.msra.mxu0 0
      %369 = vmatprep.subr.bf16.mxu0 0
      %370 = vmatpush2.bf16.msra.mxu0 0
      %371 = vmatprep.subr.bf16.mxu0 0
      %372 = vmatpush2.bf16.msra.mxu0 0
      %373 = vmatprep.subr.bf16.mxu0 0
      %374 = vmatpush2.bf16.msra.mxu0 0
      %375 = vmatprep.subr.bf16.mxu0 0
      %376 = vmatpush2.bf16.msra.mxu0 0
      %377 = vmatprep.mubr.bf16.mxu0 0
      %378 = vmatmul.mubr.bf16.gmra.mxu0 %v339
      %v379 = vpop.f32.mrf.mxu0
      %v380 = vadd.f32 0.0, %v379
      %v381 = vpop.f32.mrf.mxu0
      %v382 = vpop.f32.mrf.mxu0
      %v383 = vpop.f32.mrf.mxu0
      %384 = vdwg.mxu0
      %385 = vst.msk [vmem:[%s263] sm:$0xff] %vm270, %v380
      %p386 = scmp.lt.s32.totalorder %s18, 1
      %s387 = scalar_select %p386, %s18, 1
      %p388 = scmp.lt.s32.totalorder %s19, 1
      %s389 = scalar_select %p388, %s19, 1
      %s390 = smul.addr %s387, 2
      %s391 = sadd.s32 %s389, %s390
      %s392 = smul.addr %s391, 8
      %s393 = scalar_lea.vmem %s3, %s392
      // Predicated region
      $region33: #{transformer_forward.53} parent=31 // pred_check
        %p394 = pneg %p130
      $region34: #{transformer_forward.53} parent=31 // pred_check_branch
        %396 = sbr.rel (%p394) target = $region36
      $region35: #{transformer_forward.53} parent=31 // pred_region
        _
      $region36: #{transformer_forward.53} parent=31 // pred_fallthru
        _
    $region32: #{transformer_forward.53} parent=5 // pred_fallthru
      _
    %p397 = scmp.le.s32.totalorder 2, %s9
    // Predicated region
    $region37: #{transformer_forward.53} parent=5 // pred_check
      %p398 = pneg %p397
    $region38: #{transformer_forward.53} parent=5 // pred_check_branch
      %400 = sbr.rel (%p398) target = $region40
    $region39: #{transformer_forward.53} parent=5 // pred_region
      %s401 = ssub.s32 %s9, 2
      // Predicated region
      $region41: #{transformer_forward.53} parent=39 // pred_check
        %p402 = pneg %p136
      $region42: #{transformer_forward.53} parent=39 // pred_check_branch
        %404 = sbr.rel (%p402) target = $region44
      $region43: #{transformer_forward.53} parent=39 // pred_region
        %p405 = scmp.lt.s32.totalorder %s20, 1
        %s406 = scalar_select %p405, %s20, 1
        %p407 = scmp.lt.s32.totalorder %s21, 1
        %s408 = scalar_select %p407, %s21, 1
        %s409 = smul.addr %s406, 2
        %s410 = sadd.s32 %s408, %s409
        %s411 = smul.addr %s410, 8
        %s412 = scalar_lea.vmem %s3, %s411
      $region44: #{transformer_forward.53} parent=39 // pred_fallthru
        _
    $region40: #{transformer_forward.53} parent=5 // pred_fallthru
      _
  $region6: #{transformer_forward.53} parent=0 // loop_footer
    %s13 = sadd.s32 1, %s9
  $region7: #{transformer_forward.53} parent=0 // loop_footer_branch
    %8 = sbr.rel target = $region3
  $region8: #{transformer_forward.53} parent=0 // loop_exit
    _

// kernel: transformer_forward.38
$region0: #{transformer_forward.38}
  #allocation0 [shape = 'u32[]', space=smem, size = 0x4, offset = 0x4, fixed_abs, tag = 'smem constant byte address 0x4 - core index']
  #allocation1 [shape = 'u32[144,128]{1,0:T(1,128)}', space=vmem, size = 0x12000, scoped, tag = 'internal scratch']
  #allocation2 [shape = 'f32[12,32]{1,0:T(8,128)}', space=vmem, size = 0x2000, scoped, tag = 'scratch operand']
  %s0 = inlined_call_operand.vmem [shape: f32[12,32], index: 0, kind: input, shape index: {}]
  %s1 = inlined_call_operand.vmem [shape: f32[32,32], index: 1, kind: input, shape index: {}]
  %s2 = inlined_call_operand.vmem [shape: f32[1,32], index: 2, kind: input, shape index: {}]
  %s3 = inlined_call_operand.vmem [shape: f32[12,32], index: 3, kind: output, shape index: {}]
  %s4 = sld [smem:[#allocation0]]
  $region30: #{transformer_forward.38} parent=0
    _
  %s6 = ssub.s32 1, %s4
  %s7 = scalar_select 0, %s6, %s4
  // Predicated region
  $region2: #{transformer_forward.38} parent=0 // pred_check
    _
  $region3: #{transformer_forward.38} parent=0 // pred_check_branch
    %9 = sbr.rel (0) target = $region5
  $region4: #{transformer_forward.38} parent=0 // pred_region
    _
  $region5: #{transformer_forward.38} parent=0 // pred_fallthru
    _
  // Predicated region
  $region6: #{transformer_forward.38} parent=0 // pred_check
    _
  $region7: #{transformer_forward.38} parent=0 // pred_check_branch
    %11 = sbr.rel (0) target = $region9
  $region8: #{transformer_forward.38} parent=0 // pred_region
    _
  $region9: #{transformer_forward.38} parent=0 // pred_fallthru
    _
  // Predicated region
  $region10: #{transformer_forward.38} parent=0 // pred_check
    _
  $region11: #{transformer_forward.38} parent=0 // pred_check_branch
    %13 = sbr.rel (0) target = $region13
  $region12: #{transformer_forward.38} parent=0 // pred_region
    _
  $region13: #{transformer_forward.38} parent=0 // pred_fallthru
    _
  %p15 = scmp.eq.s32.totalorder 0, 0
  // Predicated region
  $region14: #{transformer_forward.38} parent=0 // pred_check
    %p16 = pneg %p15
  $region15: #{transformer_forward.38} parent=0 // pred_check_branch
    %18 = sbr.rel (%p16) target = $region17
  $region16: #{transformer_forward.38} parent=0 // pred_region
    %vm19 = vcmask 261120
    %20 = vst.msk [vmem:[#allocation2] sm:$0xff] %vm19, 0.0
    %vm21 = vcmask 257024
    %22 = vst.msk [vmem:[#allocation2 + $0x8] sm:$0xf] %vm21, 0.0
  $region17: #{transformer_forward.38} parent=0 // pred_fallthru
    _
  %v23 = vld [vmem:[#allocation2] sm:$0xff]
  %v24 = vld [vmem:[#allocation2 + $0x8] sm:$0xf]
  %v25 = vld [vmem:[%s0] sm:$0xff]
  %v26 = vld [vmem:[%s0 + $0x8] sm:$0xf]
  %v27 = vpack.c.bf16 %v26, %v25
  %v28 = vld [vmem:[%s1] sm:$0xff]
  %v29 = vld [vmem:[%s1 + $0x8] sm:$0xff]
  %v30 = vld [vmem:[%s1 + $0x10] sm:$0xff]
  %v31 = vld [vmem:[%s1 + $0x18] sm:$0xff]
  %v32 = vpack.c.bf16 %v29, %v28
  %v33 = vpack.c.bf16 %v31, %v30
  %vm34 = vcmask 261120
  %v36 = vsel %vm34, %v27, 0
  %38 = vmatprep.subr.bf16.mxu0 0
  %39 = vmatpush1.bf16.msra.mxu0 0
  %40 = vmatprep.subr.bf16.mxu0 0
  %41 = vmatpush1.bf16.msra.mxu0 0
  %42 = vmatprep.subr.bf16.mxu0 0
  %43 = vmatpush1.bf16.msra.mxu0 0
  %44 = vmatprep.subr.bf16.mxu0 0
  %45 = vmatpush1.bf16.msra.mxu0 0
  %46 = vmatprep.subr.bf16.mxu0 0
  %47 = vmatpush1.bf16.msra.mxu0 0
  %48 = vmatprep.subr.bf16.mxu0 0
  %49 = vmatpush1.bf16.msra.mxu0 0
  %50 = vmatprep.subr.bf16.mxu0 0
  %51 = vmatpush1.bf16.msra.mxu0 %v33
  %52 = vmatprep.subr.bf16.mxu0 0
  %53 = vmatpush1.bf16.msra.mxu0 %v32
  %54 = vmatprep.subr.bf16.mxu0 0
  %55 = vmatpush2.bf16.msra.mxu0 0
  %56 = vmatprep.subr.bf16.mxu0 0
  %57 = vmatpush2.bf16.msra.mxu0 0
  %58 = vmatprep.subr.bf16.mxu0 0
  %59 = vmatpush2.bf16.msra.mxu0 0
  %60 = vmatprep.subr.bf16.mxu0 0
  %61 = vmatpush2.bf16.msra.mxu0 0
  %62 = vmatprep.subr.bf16.mxu0 0
  %63 = vmatpush2.bf16.msra.mxu0 0
  %64 = vmatprep.subr.bf16.mxu0 0
  %65 = vmatpush2.bf16.msra.mxu0 0
  %66 = vmatprep.subr.bf16.mxu0 0
  %67 = vmatpush2.bf16.msra.mxu0 0
  %68 = vmatprep.subr.bf16.mxu0 0
  %69 = vmatpush2.bf16.msra.mxu0 0
  %70 = vmatprep.mubr.bf16.mxu0 0
  %71 = vmatmul.mubr.bf16.gmra.mxu0 %v36
  %v72 = vpop.f32.mrf.mxu0
  %v73 = vadd.f32 0.0, %v72
  %v74 = vpop.f32.mrf.mxu0
  %v75 = vpop.f32.mrf.mxu0
  %v76 = vadd.f32 0.0, %v75
  %v77 = vpop.f32.mrf.mxu0
  %78 = vdwg.mxu0
  %v79 = vadd.f32 %v23, %v73
  %v80 = vadd.f32 %v24, %v76
  %81 = vst.msk [vmem:[#allocation2] sm:$0xff] %vm34, %v79
  %vm82 = vcmask 257024
  %83 = vst.msk [vmem:[#allocation2 + $0x8] sm:$0xf] %vm82, %v80
  // Predicated region
  $region18: #{transformer_forward.38} parent=0 // pred_check
    %p84 = pneg %p15
  $region19: #{transformer_forward.38} parent=0 // pred_check_branch
    %86 = sbr.rel (%p84) target = $region21
  $region20: #{transformer_forward.38} parent=0 // pred_region
    %v87 = vld [vmem:[#allocation2] sm:$0xff]
    %v88 = vld [vmem:[#allocation2 + $0x8] sm:$0xf]
    %v89 = vld [vmem:[%s2] sm:$0x1]
    %v91 = vlaneseq
    %v92 = vshrl.u32 %v91, 7
    %v93 = vsub.s32 0, %v92
    %v94 = vrot.slane %v89, %v93
    %v96 = vadd.f32 %v87, %v94
    %v97 = vadd.f32 %v88, %v94
    %v98 = vxor.u32 %v96, 2147483648
    %v99 = vxor.u32 %v97, 2147483648
    %v100 = vmul.f32 %v98, 1.442695
    %v101 = vpow.pop %v100
    %v102 = vmul.f32 %v99, 1.442695
    %v103 = vpow.pop %v102
    %v104 = vadd.f32 %v101, 1.0
    %v105 = vadd.f32 %v103, 1.0
    %v106 = vrcp.pop %v104
    %v107 = vmul.f32 1.0, %v106
    %v108 = vrcp.pop %v105
    %v109 = vmul.f32 1.0, %v108
    %110 = vst.msk [vmem:[%s3] sm:$0xff] %vm34, %v107
    %111 = vst.msk [vmem:[%s3 + $0x8] sm:$0xf] %vm82, %v109
  $region21: #{transformer_forward.38} parent=0 // pred_fallthru
    _
  // Predicated region
  $region22: #{transformer_forward.38} parent=0 // pred_check
    _
  $region23: #{transformer_forward.38} parent=0 // pred_check_branch
    %113 = sbr.rel (0) target = $region25
  $region24: #{transformer_forward.38} parent=0 // pred_region
    _
  $region25: #{transformer_forward.38} parent=0 // pred_fallthru
    _
  // Predicated region
  $region26: #{transformer_forward.38} parent=0 // pred_check
    _
  $region27: #{transformer_forward.38} parent=0 // pred_check_branch
    %115 = sbr.rel (0) target = $region29
  $region28: #{transformer_forward.38} parent=0 // pred_region
    _
  $region29: #{transformer_forward.38} parent=0 // pred_fallthru
    _

// kernel: transformer_forward.40
$region0: #{transformer_forward.40}
  #allocation0 [shape = 'u32[]', space=smem, size = 0x4, offset = 0x4, fixed_abs, tag = 'smem constant byte address 0x4 - core index']
  #allocation1 [shape = 'u32[144,128]{1,0:T(1,128)}', space=vmem, size = 0x12000, scoped, tag = 'internal scratch']
  %s0 = inlined_call_operand.vmem [shape: f32[2,2,8,16], index: 0, kind: input, shape index: {}]
  %s1 = inlined_call_operand.vmem [shape: f32[2,2,8,16], index: 1, kind: input, shape index: {}]
  %s2 = inlined_call_operand.vmem [shape: f32[2,2,8,16], index: 2, kind: input, shape index: {}]
  %s3 = inlined_call_operand.vmem [shape: f32[2,2,8,16], index: 3, kind: output, shape index: {}]
  %s4 = sld [smem:[#allocation0]]
  $region45: #{transformer_forward.40} parent=0
    _
  %s6 = ssub.s32 1, %s4
  %s7 = scalar_select 0, %s6, %s4
  loop: start=0, step=1, limit=6
  $region2: #{transformer_forward.40} parent=0 // loop_pre_header
    _
  $region3: #{transformer_forward.40} parent=0 // loop_header
    %s9 = sphi 0, %s13
    %p10 = scmp.ge.s32.totalorder %s9, 6
    %s16 = sphi 0, %s28
    %s17 = sphi 0, %s24
    %s18 = sphi 0, %s16
    %s19 = sphi 0, %s17
    %s20 = sphi 0, %s18
    %s21 = sphi 0, %s19
    %s33 = sphi 0, %s35
    %s36 = sphi 0, %s33
    %s37 = sphi 0, %s36
    %s53 = sphi 0, %s37
    %s61 = sphi 0, %s63
    %s64 = sphi 0, %s61
    %s65 = sphi 0, %s64
    %s81 = sphi 0, %s65
    %s89 = sphi 0, %s91
    %s92 = sphi 0, %s89
    %s93 = sphi 0, %s92
    %s109 = sphi 0, %s93
    %s117 = sphi 0, %s119
    %s120 = sphi 0, %s117
    %s121 = sphi 0, %s120
    %s137 = sphi 0, %s121
  $region4: #{transformer_forward.40} parent=0 // loop_header_branch
    %12 = sbr.rel (%p10) target = $region8
  $region5: #{transformer_forward.40} parent=0 // loop_body
    %s14 = ssub.s32 %s9, 1
    %s15 = ssub.s32 %s9, 2
    %s22 = sadd.s32 1, %s17
    %p23 = scmp.ge.s32.totalorder %s22, 2
    %s24 = scalar_select %p23, 0, %s22
    %s25 = sadd.s32 1, %s16
    %s26 = scalar_select %p23, %s25, %s16
    %p27 = scmp.ge.s32.totalorder %s26, 2
    %s28 = scalar_select %p27, 0, %s26
    %s29 = ssub.s32 %s16, %s28
    %s30 = ssub.s32 %s17, %s24
    %s31 = sor.u32 %s29, %s30
    %p32 = scmp.eq.s32.totalorder %s31, 0
    %s34 = sadd.s32 %s33, 1
    %s35 = scalar_select %p32, %s33, %s34
    %p38 = pneg %p32
    %p39 = scmp.eq.s32.totalorder %s9, 3
    %p40 = por %p38, %p39
    %p41 = scmp.ne.s32.totalorder %s33, %s36
    %p42 = scmp.eq.s32.totalorder %s9, 0
    %p43 = por %p41, %p42
    %p44 = scmp.ne.s32.totalorder %s33, %s36
    %p45 = scmp.eq.s32.totalorder %s14, 3
    %p46 = por %p44, %p45
    %p47 = scmp.ne.s32.totalorder %s36, %s37
    %p48 = scmp.eq.s32.totalorder %s14, 0
    %p49 = por %p47, %p48
    %p50 = scmp.ne.s32.totalorder %s36, %s37
    %p51 = scmp.eq.s32.totalorder %s15, 3
    %p52 = por %p50, %p51
    %p54 = scmp.ne.s32.totalorder %s37, %s53
    %p55 = scmp.eq.s32.totalorder %s15, 0
    %p56 = por %p54, %p55
    %s57 = ssub.s32 %s16, %s28
    %s58 = ssub.s32 %s17, %s24
    %s59 = sor.u32 %s57, %s58
    %p60 = scmp.eq.s32.totalorder %s59, 0
    %s62 = sadd.s32 %s61, 1
    %s63 = scalar_select %p60, %s61, %s62
    %p66 = pneg %p60
    %p67 = scmp.eq.s32.totalorder %s9, 3
    %p68 = por %p66, %p67
    %p69 = scmp.ne.s32.totalorder %s61, %s64
    %p70 = scmp.eq.s32.totalorder %s9, 0
    %p71 = por %p69, %p70
    %p72 = scmp.ne.s32.totalorder %s61, %s64
    %p73 = scmp.eq.s32.totalorder %s14, 3
    %p74 = por %p72, %p73
    %p75 = scmp.ne.s32.totalorder %s64, %s65
    %p76 = scmp.eq.s32.totalorder %s14, 0
    %p77 = por %p75, %p76
    %p78 = scmp.ne.s32.totalorder %s64, %s65
    %p79 = scmp.eq.s32.totalorder %s15, 3
    %p80 = por %p78, %p79
    %p82 = scmp.ne.s32.totalorder %s65, %s81
    %p83 = scmp.eq.s32.totalorder %s15, 0
    %p84 = por %p82, %p83
    %s85 = ssub.s32 %s16, %s28
    %s86 = ssub.s32 %s17, %s24
    %s87 = sor.u32 %s85, %s86
    %p88 = scmp.eq.s32.totalorder %s87, 0
    %s90 = sadd.s32 %s89, 1
    %s91 = scalar_select %p88, %s89, %s90
    %p94 = pneg %p88
    %p95 = scmp.eq.s32.totalorder %s9, 3
    %p96 = por %p94, %p95
    %p97 = scmp.ne.s32.totalorder %s89, %s92
    %p98 = scmp.eq.s32.totalorder %s9, 0
    %p99 = por %p97, %p98
    %p100 = scmp.ne.s32.totalorder %s89, %s92
    %p101 = scmp.eq.s32.totalorder %s14, 3
    %p102 = por %p100, %p101
    %p103 = scmp.ne.s32.totalorder %s92, %s93
    %p104 = scmp.eq.s32.totalorder %s14, 0
    %p105 = por %p103, %p104
    %p106 = scmp.ne.s32.totalorder %s92, %s93
    %p107 = scmp.eq.s32.totalorder %s15, 3
    %p108 = por %p106, %p107
    %p110 = scmp.ne.s32.totalorder %s93, %s109
    %p111 = scmp.eq.s32.totalorder %s15, 0
    %p112 = por %p110, %p111
    %s113 = ssub.s32 %s16, %s28
    %s114 = ssub.s32 %s17, %s24
    %s115 = sor.u32 %s113, %s114
    %p116 = scmp.eq.s32.totalorder %s115, 0
    %s118 = sadd.s32 %s117, 1
    %s119 = scalar_select %p116, %s117, %s118
    %p122 = pneg %p116
    %p123 = scmp.eq.s32.totalorder %s9, 3
    %p124 = por %p122, %p123
    %p125 = scmp.ne.s32.totalorder %s117, %s120
    %p126 = scmp.eq.s32.totalorder %s9, 0
    %p127 = por %p125, %p126
    %p128 = scmp.ne.s32.totalorder %s117, %s120
    %p129 = scmp.eq.s32.totalorder %s14, 3
    %p130 = por %p128, %p129
    %p131 = scmp.ne.s32.totalorder %s120, %s121
    %p132 = scmp.eq.s32.totalorder %s14, 0
    %p133 = por %p131, %p132
    %p134 = scmp.ne.s32.totalorder %s120, %s121
    %p135 = scmp.eq.s32.totalorder %s15, 3
    %p136 = por %p134, %p135
    %p138 = scmp.ne.s32.totalorder %s121, %s137
    %p139 = scmp.eq.s32.totalorder %s15, 0
    %p140 = por %p138, %p139
    %p141 = scmp.le.s32.totalorder 1, %s9
    %p142 = scmp.lt.s32.totalorder %s9, 5
    %p143 = pnand %p141, %p142
    %p144 = pneg %p143
    // Predicated region
    $region9: #{transformer_forward.40} parent=5 // pred_check
      _
    $region10: #{transformer_forward.40} parent=5 // pred_check_branch
      %146 = sbr.rel (%p143) target = $region12
    $region11: #{transformer_forward.40} parent=5 // pred_region
      %s147 = ssub.s32 %s9, 1
    $region12: #{transformer_forward.40} parent=5 // pred_fallthru
      _
    %p148 = scmp.lt.s32.totalorder %s9, 4
    // Predicated region
    $region13: #{transformer_forward.40} parent=5 // pred_check
      %p149 = pneg %p148
    $region14: #{transformer_forward.40} parent=5 // pred_check_branch
      %151 = sbr.rel (%p149) target = $region16
    $region15: #{transformer_forward.40} parent=5 // pred_region
      // Predicated region
      $region17: #{transformer_forward.40} parent=15 // pred_check
        %p152 = pneg %p43
      $region18: #{transformer_forward.40} parent=15 // pred_check_branch
        %154 = sbr.rel (%p152) target = $region20
      $region19: #{transformer_forward.40} parent=15 // pred_region
        %p155 = scmp.lt.s32.totalorder %s16, 1
        %s156 = scalar_select %p155, %s16, 1
        %p157 = scmp.lt.s32.totalorder %s17, 1
        %s158 = scalar_select %p157, %s17, 1
        %s159 = smul.addr %s156, 2
        %s160 = sadd.s32 %s158, %s159
        %s161 = smul.addr %s160, 8
        %s162 = scalar_lea.vmem %s0, %s161
      $region20: #{transformer_forward.40} parent=15 // pred_fallthru
        _
      // Predicated region
      $region21: #{transformer_forward.40} parent=15 // pred_check
        %p163 = pneg %p71
      $region22: #{transformer_forward.40} parent=15 // pred_check_branch
        %165 = sbr.rel (%p163) target = $region24
      $region23: #{transformer_forward.40} parent=15 // pred_region
        %p166 = scmp.lt.s32.totalorder %s16, 1
        %s167 = scalar_select %p166, %s16, 1
        %p168 = scmp.lt.s32.totalorder %s17, 1
        %s169 = scalar_select %p168, %s17, 1
        %s170 = smul.addr %s167, 2
        %s171 = sadd.s32 %s169, %s170
        %s172 = smul.addr %s171, 8
        %s173 = scalar_lea.vmem %s1, %s172
      $region24: #{transformer_forward.40} parent=15 // pred_fallthru
        _
      // Predicated region
      $region25: #{transformer_forward.40} parent=15 // pred_check
        %p174 = pneg %p99
      $region26: #{transformer_forward.40} parent=15 // pred_check_branch
        %176 = sbr.rel (%p174) target = $region28
      $region27: #{transformer_forward.40} parent=15 // pred_region
        %p177 = scmp.lt.s32.totalorder %s16, 1
        %s178 = scalar_select %p177, %s16, 1
        %p179 = scmp.lt.s32.totalorder %s17, 1
        %s180 = scalar_select %p179, %s17, 1
        %s181 = smul.addr %s178, 2
        %s182 = sadd.s32 %s180, %s181
        %s183 = smul.addr %s182, 8
        %s184 = scalar_lea.vmem %s2, %s183
      $region28: #{transformer_forward.40} parent=15 // pred_fallthru
        _
    $region16: #{transformer_forward.40} parent=5 // pred_fallthru
      _
    %p185 = scmp.le.s32.totalorder 1, %s9
    %p186 = scmp.lt.s32.totalorder %s9, 5
    %p187 = pnand %p185, %p186
    %p188 = pneg %p187
    // Predicated region
    $region29: #{transformer_forward.40} parent=5 // pred_check
      _
    $region30: #{transformer_forward.40} parent=5 // pred_check_branch
      %190 = sbr.rel (%p187) target = $region32
    $region31: #{transformer_forward.40} parent=5 // pred_region
      %s191 = ssub.s32 %s9, 1
      %p192 = scmp.lt.s32.totalorder %s18, 1
      %s193 = scalar_select %p192, %s18, 1
      %p194 = scmp.lt.s32.totalorder %s19, 1
      %s195 = scalar_select %p194, %s19, 1
      %s196 = smul.addr %s193, 2
      %s197 = sadd.s32 %s195, %s196
      %s198 = smul.addr %s197, 8
      %s199 = scalar_lea.vmem %s0, %s198
      %p200 = pneg %p49
      %p201 = pneg %p46
      %p202 = scmp.lt.s32.totalorder %s18, 1
      %s203 = scalar_select %p202, %s18, 1
      %p204 = scmp.lt.s32.totalorder %s19, 1
      %s205 = scalar_select %p204, %s19, 1
      %s206 = smul.addr %s203, 2
      %s207 = sadd.s32 %s205, %s206
      %s208 = smul.addr %s207, 8
      %s209 = scalar_lea.vmem %s1, %s208
      %p210 = pneg %p77
      %p211 = pneg %p74
      %p212 = scmp.lt.s32.totalorder %s18, 1
      %s213 = scalar_select %p212, %s18, 1
      %p214 = scmp.lt.s32.totalorder %s19, 1
      %s215 = scalar_select %p214, %s19, 1
      %s216 = smul.addr %s213, 2
      %s217 = sadd.s32 %s215, %s216
      %s218 = smul.addr %s217, 8
      %s219 = scalar_lea.vmem %s2, %s218
      %p220 = pneg %p105
      %p221 = pneg %p102
      %p222 = pneg %p133
      %p223 = pneg %p130
      %p224 = scmp.lt.s32.totalorder %s18, 1
      %s225 = scalar_select %p224, %s18, 1
      %p226 = scmp.lt.s32.totalorder %s19, 1
      %s227 = scalar_select %p226, %s19, 1
      %s228 = smul.addr %s225, 2
      %s229 = sadd.s32 %s227, %s228
      %s230 = smul.addr %s229, 8
      %s231 = scalar_lea.vmem %s3, %s230
      %p232 = scmp.lt.s32.totalorder %s18, 1
      %s233 = scalar_select %p232, %s18, 1
      %p234 = scmp.lt.s32.totalorder %s19, 1
      %s235 = scalar_select %p234, %s19, 1
      %s236 = smul.addr %s233, 2
      %s237 = sadd.s32 %s235, %s236
      %s238 = smul.addr %s237, 8
      %s239 = scalar_lea.vmem %s0, %s238
      %p240 = scmp.lt.s32.totalorder %s18, 1
      %s241 = scalar_select %p240, %s18, 1
      %p242 = scmp.lt.s32.totalorder %s19, 1
      %s243 = scalar_select %p242, %s19, 1
      %s244 = smul.addr %s241, 2
      %s245 = sadd.s32 %s243, %s244
      %s246 = smul.addr %s245, 8
      %s247 = scalar_lea.vmem %s1, %s246
      %p248 = scmp.lt.s32.totalorder %s18, 1
      %s249 = scalar_select %p248, %s18, 1
      %p250 = scmp.lt.s32.totalorder %s19, 1
      %s251 = scalar_select %p250, %s19, 1
      %s252 = smul.addr %s249, 2
      %s253 = sadd.s32 %s251, %s252
      %s254 = smul.addr %s253, 8
      %s255 = scalar_lea.vmem %s2, %s254
      %p256 = scmp.lt.s32.totalorder %s18, 1
      %s257 = scalar_select %p256, %s18, 1
      %p258 = scmp.lt.s32.totalorder %s19, 1
      %s259 = scalar_select %p258, %s19, 1
      %s260 = smul.addr %s257, 2
      %s261 = sadd.s32 %s259, %s260
      %s262 = smul.addr %s261, 8
      %s263 = scalar_lea.vmem %s3, %s262
      %v265 = vld [vmem:[%s239] sm:$0xff]
      %v266 = vld [vmem:[%s247] sm:$0xff]
      %v267 = vld [vmem:[%s255] sm:$0xff]
      %v268 = vpack.c.bf16 %v265, %v265
      %v269 = vpack.c.bf16 %v266, %v266
      %vm270 = vcmask 130048
      %v272 = vsel %vm270, %v268, 0
      %v275 = vsel %vm270, %v269, 0
      %277 = vmatprep.subr.bf16.mxu0 0
      %278 = vmatpush1.bf16.xpose.msra.mxu0 0
      %279 = vmatprep.subr.bf16.mxu0 0
      %280 = vmatpush1.bf16.xpose.msra.mxu0 0
      %281 = vmatprep.subr.bf16.mxu0 0
      %282 = vmatpush1.bf16.xpose.msra.mxu0 0
      %283 = vmatprep.subr.bf16.mxu0 0
      %284 = vmatpush1.bf16.xpose.msra.mxu0 0
      %285 = vmatprep.subr.bf16.mxu0 0
      %286 = vmatpush1.bf16.xpose.msra.mxu0 0
      %287 = vmatprep.subr.bf16.mxu0 0
      %288 = vmatpush1.bf16.xpose.msra.mxu0 0
      %289 = vmatprep.subr.bf16.mxu0 0
      %290 = vmatpush1.bf16.xpose.msra.mxu0 0
      %291 = vmatprep.subr.bf16.mxu0 0
      %292 = vmatpush1.bf16.xpose.msra.mxu0 %v275
      %293 = vmatprep.subr.bf16.mxu0 0
      %294 = vmatpush2.bf16.xpose.msra.mxu0 0
      %295 = vmatprep.subr.bf16.mxu0 0
      %296 = vmatpush2.bf16.xpose.msra.mxu0 0
      %297 = vmatprep.subr.bf16.mxu0 0
      %298 = vmatpush2.bf16.xpose.msra.mxu0 0
      %299 = vmatprep.subr.bf16.mxu0 0
      %300 = vmatpush2.bf16.xpose.msra.mxu0 0
      %301 = vmatprep.subr.bf16.mxu0 0
      %302 = vmatpush2.bf16.xpose.msra.mxu0 0
      %303 = vmatprep.subr.bf16.mxu0 0
      %304 = vmatpush2.bf16.xpose.msra.mxu0 0
      %305 = vmatprep.subr.bf16.mxu0 0
      %306 = vmatpush2.bf16.xpose.msra.mxu0 0
      %307 = vmatprep.subr.bf16.mxu0 0
      %308 = vmatpush2.bf16.xpose.msra.mxu0 0
      %309 = vmatprep.mubr.bf16.mxu0 0
      %310 = vmatmul.mubr.bf16.gmra.mxu0 %v272
      %v311 = vpop.f32.mrf.mxu0
      %v312 = vadd.f32 0.0, %v311
      %v313 = vpop.f32.mrf.mxu0
      %v314 = vpop.f32.mrf.mxu0
      %v315 = vpop.f32.mrf.mxu0
      %316 = vdwg.mxu0
      %v317 = vmul.f32 %v312, 0.25
      %v318 = vlaneseq
      %v319 = vand.u32 %v318, 127
      %vm320 = vcmp.ge.s32.totalorder %v319, 6
      %v321 = vsel %vm320, -1e+30, %v317
      %vm322 = vcmask 64512
      %v323 = vsel %vm322, %v321, -inf
      %324 = vmax.xlane.f32.xlu0 %v323
      %v325 = vpop.xlane.xlu0 %324
      %v326 = vsub.f32 %v321, %v325
      %v327 = vmul.f32 %v326, 1.442695
      %v328 = vpow.pop %v327
      %v329 = vsel %vm322, %v328, 0.0
      %330 = vadd.xlane.f32.xlu0 %v329
      %v331 = vpop.xlane.xlu0 %330
      %v332 = vrcp.pop %v331
      %v333 = vmul.f32 %v328, %v332
      %v334 = vpack.c.bf16 %v333, %v333
      %v335 = vpack.c.bf16 %v267, %v267
      %v337 = vsel %vm322, %v334, 0
      %vm339 = vcmask 1043456
      %v341 = vsel %vm339, %v335, 0
      %343 = vmatprep.subr.bf16.mxu0 0
      %344 = vmatpush1.bf16.msra.mxu0 0
      %345 = vmatprep.subr.bf16.mxu0 0
      %346 = vmatpush1.bf16.msra.mxu0 0
      %347 = vmatprep.subr.bf16.mxu0 0
      %348 = vmatpush1.bf16.msra.mxu0 0
      %349 = vmatprep.subr.bf16.mxu0 0
      %350 = vmatpush1.bf16.msra.mxu0 0
      %351 = vmatprep.subr.bf16.mxu0 0
      %352 = vmatpush1.bf16.msra.mxu0 0
      %353 = vmatprep.subr.bf16.mxu0 0
      %354 = vmatpush1.bf16.msra.mxu0 0
      %355 = vmatprep.subr.bf16.mxu0 0
      %356 = vmatpush1.bf16.msra.mxu0 0
      %357 = vmatprep.subr.bf16.mxu0 0
      %358 = vmatpush1.bf16.msra.mxu0 %v341
      %359 = vmatprep.subr.bf16.mxu0 0
      %360 = vmatpush2.bf16.msra.mxu0 0
      %361 = vmatprep.subr.bf16.mxu0 0
      %362 = vmatpush2.bf16.msra.mxu0 0
      %363 = vmatprep.subr.bf16.mxu0 0
      %364 = vmatpush2.bf16.msra.mxu0 0
      %365 = vmatprep.subr.bf16.mxu0 0
      %366 = vmatpush2.bf16.msra.mxu0 0
      %367 = vmatprep.subr.bf16.mxu0 0
      %368 = vmatpush2.bf16.msra.mxu0 0
      %369 = vmatprep.subr.bf16.mxu0 0
      %370 = vmatpush2.bf16.msra.mxu0 0
      %371 = vmatprep.subr.bf16.mxu0 0
      %372 = vmatpush2.bf16.msra.mxu0 0
      %373 = vmatprep.subr.bf16.mxu0 0
      %374 = vmatpush2.bf16.msra.mxu0 0
      %375 = vmatprep.mubr.bf16.mxu0 0
      %376 = vmatmul.mubr.bf16.gmra.mxu0 %v337
      %v377 = vpop.f32.mrf.mxu0
      %v378 = vadd.f32 0.0, %v377
      %v379 = vpop.f32.mrf.mxu0
      %v380 = vpop.f32.mrf.mxu0
      %v381 = vpop.f32.mrf.mxu0
      %382 = vdwg.mxu0
      %383 = vst.msk [vmem:[%s263] sm:$0xff] %vm270, %v378
      %p384 = scmp.lt.s32.totalorder %s18, 1
      %s385 = scalar_select %p384, %s18, 1
      %p386 = scmp.lt.s32.totalorder %s19, 1
      %s387 = scalar_select %p386, %s19, 1
      %s388 = smul.addr %s385, 2
      %s389 = sadd.s32 %s387, %s388
      %s390 = smul.addr %s389, 8
      %s391 = scalar_lea.vmem %s3, %s390
      // Predicated region
      $region33: #{transformer_forward.40} parent=31 // pred_check
        %p392 = pneg %p130
      $region34: #{transformer_forward.40} parent=31 // pred_check_branch
        %394 = sbr.rel (%p392) target = $region36
      $region35: #{transformer_forward.40} parent=31 // pred_region
        _
      $region36: #{transformer_forward.40} parent=31 // pred_fallthru
        _
    $region32: #{transformer_forward.40} parent=5 // pred_fallthru
      _
    %p395 = scmp.le.s32.totalorder 2, %s9
    // Predicated region
    $region37: #{transformer_forward.40} parent=5 // pred_check
      %p396 = pneg %p395
    $region38: #{transformer_forward.40} parent=5 // pred_check_branch
      %398 = sbr.rel (%p396) target = $region40
    $region39: #{transformer_forward.40} parent=5 // pred_region
      %s399 = ssub.s32 %s9, 2
      // Predicated region
      $region41: #{transformer_forward.40} parent=39 // pred_check
        %p400 = pneg %p136
      $region42: #{transformer_forward.40} parent=39 // pred_check_branch
        %402 = sbr.rel (%p400) target = $region44
      $region43: #{transformer_forward.40} parent=39 // pred_region
        %p403 = scmp.lt.s32.totalorder %s20, 1
        %s404 = scalar_select %p403, %s20, 1
        %p405 = scmp.lt.s32.totalorder %s21, 1
        %s406 = scalar_select %p405, %s21, 1
        %s407 = smul.addr %s404, 2
        %s408 = sadd.s32 %s406, %s407
        %s409 = smul.addr %s408, 8
        %s410 = scalar_lea.vmem %s3, %s409
      $region44: #{transformer_forward.40} parent=39 // pred_fallthru
        _
    $region40: #{transformer_forward.40} parent=5 // pred_fallthru
      _
  $region6: #{transformer_forward.40} parent=0 // loop_footer
    %s13 = sadd.s32 1, %s9
  $region7: #{transformer_forward.40} parent=0 // loop_footer_branch
    %8 = sbr.rel target = $region3
  $region8: #{transformer_forward.40} parent=0 // loop_exit
    _

// kernel: transformer_forward.51
$region0: #{transformer_forward.51}
  #allocation0 [shape = 'u32[]', space=smem, size = 0x4, offset = 0x4, fixed_abs, tag = 'smem constant byte address 0x4 - core index']
  #allocation1 [shape = 'u32[144,128]{1,0:T(1,128)}', space=vmem, size = 0x12000, scoped, tag = 'internal scratch']
  %s0 = inlined_call_operand.vmem [shape: f32[16,32], index: 0, kind: input, shape index: {}]
  %s1 = inlined_call_operand.vmem [shape: f32[1,32], index: 1, kind: input, shape index: {}]
  %s2 = inlined_call_operand.vmem [shape: f32[1,32], index: 2, kind: input, shape index: {}]
  %s3 = inlined_call_operand.vmem [shape: f32[16,32], index: 3, kind: output, shape index: {}]
  %s4 = sld [smem:[#allocation0]]
  $region22: #{transformer_forward.51} parent=0
    _
  %s6 = ssub.s32 1, %s4
  %s7 = scalar_select 0, %s6, %s4
  // Predicated region
  $region2: #{transformer_forward.51} parent=0 // pred_check
    _
  $region3: #{transformer_forward.51} parent=0 // pred_check_branch
    %9 = sbr.rel (0) target = $region5
  $region4: #{transformer_forward.51} parent=0 // pred_region
    _
  $region5: #{transformer_forward.51} parent=0 // pred_fallthru
    _
  // Predicated region
  $region6: #{transformer_forward.51} parent=0 // pred_check
    _
  $region7: #{transformer_forward.51} parent=0 // pred_check_branch
    %11 = sbr.rel (0) target = $region9
  $region8: #{transformer_forward.51} parent=0 // pred_region
    _
  $region9: #{transformer_forward.51} parent=0 // pred_fallthru
    _
  // Predicated region
  $region10: #{transformer_forward.51} parent=0 // pred_check
    _
  $region11: #{transformer_forward.51} parent=0 // pred_check_branch
    %13 = sbr.rel (0) target = $region13
  $region12: #{transformer_forward.51} parent=0 // pred_region
    _
  $region13: #{transformer_forward.51} parent=0 // pred_fallthru
    _
  %v14 = vld [vmem:[%s0] sm:$0xff]
  %v15 = vld [vmem:[%s0 + $0x8] sm:$0xff]
  %vm16 = vcmask 261120
  %v17 = vsel %vm16, %v14, 0.0
  %18 = vadd.xlane.f32.xlu0 %v17
  %v19 = vpop.xlane.xlu0 %18
  %v20 = vsel %vm16, %v15, 0.0
  %21 = vadd.xlane.f32.xlu0 %v20
  %v22 = vpop.xlane.xlu0 %21
  %v23 = vrcp.pop 32.0
  %v24 = vmul.f32 %v19, %v23
  %v25 = vmul.f32 %v22, %v23
  %v26 = vsub.f32 %v14, %v24
  %v27 = vsub.f32 %v15, %v25
  %v28 = vmul.f32 %v26, %v26
  %v29 = vmul.f32 %v27, %v27
  %v30 = vsel %vm16, %v28, 0.0
  %31 = vadd.xlane.f32.xlu0 %v30
  %v32 = vpop.xlane.xlu0 %31
  %v33 = vsel %vm16, %v29, 0.0
  %34 = vadd.xlane.f32.xlu0 %v33
  %v35 = vpop.xlane.xlu0 %34
  %v36 = vmul.f32 %v32, %v23
  %v37 = vmul.f32 %v35, %v23
  %v38 = vadd.f32 %v36, 1e-05
  %v39 = vadd.f32 %v37, 1e-05
  %v40 = vrsqrt.pop %v38
  %v41 = vrsqrt.pop %v39
  %v42 = vmul.f32 %v26, %v40
  %v43 = vmul.f32 %v27, %v41
  %v44 = vld [vmem:[%s1] sm:$0x1]
  %v46 = vlaneseq
  %v47 = vshrl.u32 %v46, 7
  %v48 = vsub.s32 0, %v47
  %v49 = vrot.slane %v44, %v48
  %v51 = vmul.f32 %v42, %v49
  %v52 = vmul.f32 %v43, %v49
  %v53 = vld [vmem:[%s2] sm:$0x1]
  %v55 = vlaneseq
  %v56 = vshrl.u32 %v55, 7
  %v57 = vsub.s32 0, %v56
  %v58 = vrot.slane %v53, %v57
  %v60 = vadd.f32 %v51, %v58
  %v61 = vadd.f32 %v52, %v58
  %62 = vst.msk [vmem:[%s3] sm:$0xff] %vm16, %v60
  %63 = vst.msk [vmem:[%s3 + $0x8] sm:$0xff] %vm16, %v61
  // Predicated region
  $region14: #{transformer_forward.51} parent=0 // pred_check
    _
  $region15: #{transformer_forward.51} parent=0 // pred_check_branch
    %65 = sbr.rel (0) target = $region17
  $region16: #{transformer_forward.51} parent=0 // pred_region
    _
  $region17: #{transformer_forward.51} parent=0 // pred_fallthru
    _
  // Predicated region
  $region18: #{transformer_forward.51} parent=0 // pred_check
    _
  $region19: #{transformer_forward.51} parent=0 // pred_check_branch
    %67 = sbr.rel (0) target = $region21
  $region20: #{transformer_forward.51} parent=0 // pred_region
    _
  $region21: #{transformer_forward.51} parent=0 // pred_fallthru
    _

// kernel: transformer_forward.43
$region0: #{transformer_forward.43}
  #allocation0 [shape = 'u32[]', space=smem, size = 0x4, offset = 0x4, fixed_abs, tag = 'smem constant byte address 0x4 - core index']
  #allocation1 [shape = 'u32[144,128]{1,0:T(1,128)}', space=vmem, size = 0x12000, scoped, tag = 'internal scratch']
  #allocation2 [shape = 'f32[16,32]{1,0:T(8,128)}', space=vmem, size = 0x2000, scoped, tag = 'scratch operand']
  %s0 = inlined_call_operand.vmem [shape: f32[16,32], index: 0, kind: input, shape index: {}]
  %s1 = inlined_call_operand.vmem [shape: f32[32,64], index: 1, kind: input, shape index: {}]
  %s2 = inlined_call_operand.vmem [shape: f32[1,64], index: 2, kind: input, shape index: {}]
  %s3 = inlined_call_operand.vmem [shape: f32[64,32], index: 3, kind: input, shape index: {}]
  %s4 = inlined_call_operand.vmem [shape: f32[1,32], index: 4, kind: input, shape index: {}]
  %s5 = inlined_call_operand.vmem [shape: f32[16,32], index: 5, kind: output, shape index: {}]
  %s6 = sld [smem:[#allocation0]]
  $region38: #{transformer_forward.43} parent=0
    _
  %s8 = ssub.s32 1, %s6
  %s9 = scalar_select 0, %s8, %s6
  // Predicated region
  $region2: #{transformer_forward.43} parent=0 // pred_check
    _
  $region3: #{transformer_forward.43} parent=0 // pred_check_branch
    %11 = sbr.rel (0) target = $region5
  $region4: #{transformer_forward.43} parent=0 // pred_region
    _
  $region5: #{transformer_forward.43} parent=0 // pred_fallthru
    _
  // Predicated region
  $region6: #{transformer_forward.43} parent=0 // pred_check
    _
  $region7: #{transformer_forward.43} parent=0 // pred_check_branch
    %13 = sbr.rel (0) target = $region9
  $region8: #{transformer_forward.43} parent=0 // pred_region
    _
  $region9: #{transformer_forward.43} parent=0 // pred_fallthru
    _
  // Predicated region
  $region10: #{transformer_forward.43} parent=0 // pred_check
    _
  $region11: #{transformer_forward.43} parent=0 // pred_check_branch
    %15 = sbr.rel (0) target = $region13
  $region12: #{transformer_forward.43} parent=0 // pred_region
    _
  $region13: #{transformer_forward.43} parent=0 // pred_fallthru
    _
  // Predicated region
  $region14: #{transformer_forward.43} parent=0 // pred_check
    _
  $region15: #{transformer_forward.43} parent=0 // pred_check_branch
    %17 = sbr.rel (0) target = $region17
  $region16: #{transformer_forward.43} parent=0 // pred_region
    _
  $region17: #{transformer_forward.43} parent=0 // pred_fallthru
    _
  // Predicated region
  $region18: #{transformer_forward.43} parent=0 // pred_check
    _
  $region19: #{transformer_forward.43} parent=0 // pred_check_branch
    %19 = sbr.rel (0) target = $region21
  $region20: #{transformer_forward.43} parent=0 // pred_region
    _
  $region21: #{transformer_forward.43} parent=0 // pred_fallthru
    _
  %p21 = scmp.eq.s32.totalorder 0, 0
  // Predicated region
  $region22: #{transformer_forward.43} parent=0 // pred_check
    %p22 = pneg %p21
  $region23: #{transformer_forward.43} parent=0 // pred_check_branch
    %24 = sbr.rel (%p22) target = $region25
  $region24: #{transformer_forward.43} parent=0 // pred_region
    %vm25 = vcmask 261120
    %26 = vst.msk [vmem:[#allocation2] sm:$0xff] %vm25, 0.0
    %27 = vst.msk [vmem:[#allocation2 + $0x8] sm:$0xff] %vm25, 0.0
  $region25: #{transformer_forward.43} parent=0 // pred_fallthru
    _
  %v28 = vld [vmem:[%s0] sm:$0xff]
  %v29 = vld [vmem:[%s0 + $0x8] sm:$0xff]
  %v30 = vpack.c.bf16 %v29, %v28
  %v31 = vld [vmem:[%s1] sm:$0xff]
  %v32 = vld [vmem:[%s1 + $0x8] sm:$0xff]
  %v33 = vld [vmem:[%s1 + $0x10] sm:$0xff]
  %v34 = vld [vmem:[%s1 + $0x18] sm:$0xff]
  %v35 = vpack.c.bf16 %v32, %v31
  %v36 = vpack.c.bf16 %v34, %v33
  %v37 = vld [vmem:[%s2] sm:$0x1]
  %v39 = vlaneseq
  %v40 = vshrl.u32 %v39, 7
  %v41 = vsub.s32 0, %v40
  %v42 = vrot.slane %v37, %v41
  %vm44 = vcmask 261120
  %v46 = vsel %vm44, %v30, 0
  %48 = vmatprep.subr.bf16.mxu0 0
  %49 = vmatpush1.bf16.msra.mxu0 0
  %50 = vmatprep.subr.bf16.mxu0 0
  %51 = vmatpush1.bf16.msra.mxu0 0
  %52 = vmatprep.subr.bf16.mxu0 0
  %53 = vmatpush1.bf16.msra.mxu0 0
  %54 = vmatprep.subr.bf16.mxu0 0
  %55 = vmatpush1.bf16.msra.mxu0 0
  %56 = vmatprep.subr.bf16.mxu0 0
  %57 = vmatpush1.bf16.msra.mxu0 0
  %58 = vmatprep.subr.bf16.mxu0 0
  %59 = vmatpush1.bf16.msra.mxu0 0
  %60 = vmatprep.subr.bf16.mxu0 0
  %61 = vmatpush1.bf16.msra.mxu0 %v36
  %62 = vmatprep.subr.bf16.mxu0 0
  %63 = vmatpush1.bf16.msra.mxu0 %v35
  %64 = vmatprep.subr.bf16.mxu0 0
  %65 = vmatpush2.bf16.msra.mxu0 0
  %66 = vmatprep.subr.bf16.mxu0 0
  %67 = vmatpush2.bf16.msra.mxu0 0
  %68 = vmatprep.subr.bf16.mxu0 0
  %69 = vmatpush2.bf16.msra.mxu0 0
  %70 = vmatprep.subr.bf16.mxu0 0
  %71 = vmatpush2.bf16.msra.mxu0 0
  %72 = vmatprep.subr.bf16.mxu0 0
  %73 = vmatpush2.bf16.msra.mxu0 0
  %74 = vmatprep.subr.bf16.mxu0 0
  %75 = vmatpush2.bf16.msra.mxu0 0
  %76 = vmatprep.subr.bf16.mxu0 0
  %77 = vmatpush2.bf16.msra.mxu0 0
  %78 = vmatprep.subr.bf16.mxu0 0
  %79 = vmatpush2.bf16.msra.mxu0 0
  %80 = vmatprep.mubr.bf16.mxu0 0
  %81 = vmatmul.mubr.bf16.gmra.mxu0 %v46
  %v82 = vpop.f32.mrf.mxu0
  %v83 = vadd.f32 %v42, %v82
  %v84 = vpop.f32.mrf.mxu0
  %v85 = vpop.f32.mrf.mxu0
  %v86 = vadd.f32 %v42, %v85
  %v87 = vpop.f32.mrf.mxu0
  %88 = vdwg.mxu0
  %v89 = vmax.f32 %v83, 0.0
  %v90 = vmax.f32 %v86, 0.0
  %v91 = vld [vmem:[#allocation2] sm:$0xff]
  %v92 = vld [vmem:[#allocation2 + $0x8] sm:$0xff]
  %v93 = vpack.c.bf16 %v90, %v89
  %v94 = vld [vmem:[%s3] sm:$0xff]
  %v95 = vld [vmem:[%s3 + $0x8] sm:$0xff]
  %v96 = vld [vmem:[%s3 + $0x10] sm:$0xff]
  %v97 = vld [vmem:[%s3 + $0x18] sm:$0xff]
  %v98 = vld [vmem:[%s3 + $0x20] sm:$0xff]
  %v99 = vld [vmem:[%s3 + $0x28] sm:$0xff]
  %v100 = vld [vmem:[%s3 + $0x30] sm:$0xff]
  %v101 = vld [vmem:[%s3 + $0x38] sm:$0xff]
  %v102 = vpack.c.bf16 %v95, %v94
  %v103 = vpack.c.bf16 %v97, %v96
  %v104 = vpack.c.bf16 %v99, %v98
  %v105 = vpack.c.bf16 %v101, %v100
  %vm106 = vcmask 523264
  %v108 = vsel %vm106, %v93, 0
  %110 = vmatprep.subr.bf16.mxu0 0
  %111 = vmatpush1.bf16.msra.mxu0 0
  %112 = vmatprep.subr.bf16.mxu0 0
  %113 = vmatpush1.bf16.msra.mxu0 0
  %114 = vmatprep.subr.bf16.mxu0 0
  %115 = vmatpush1.bf16.msra.mxu0 0
  %116 = vmatprep.subr.bf16.mxu0 0
  %117 = vmatpush1.bf16.msra.mxu0 0
  %118 = vmatprep.subr.bf16.mxu0 0
  %119 = vmatpush1.bf16.msra.mxu0 %v105
  %120 = vmatprep.subr.bf16.mxu0 0
  %121 = vmatpush1.bf16.msra.mxu0 %v104
  %122 = vmatprep.subr.bf16.mxu0 0
  %123 = vmatpush1.bf16.msra.mxu0 %v103
  %124 = vmatprep.subr.bf16.mxu0 0
  %125 = vmatpush1.bf16.msra.mxu0 %v102
  %126 = vmatprep.subr.bf16.mxu0 0
  %127 = vmatpush2.bf16.msra.mxu0 0
  %128 = vmatprep.subr.bf16.mxu0 0
  %129 = vmatpush2.bf16.msra.mxu0 0
  %130 = vmatprep.subr.bf16.mxu0 0
  %131 = vmatpush2.bf16.msra.mxu0 0
  %132 = vmatprep.subr.bf16.mxu0 0
  %133 = vmatpush2.bf16.msra.mxu0 0
  %134 = vmatprep.subr.bf16.mxu0 0
  %135 = vmatpush2.bf16.msra.mxu0 0
  %136 = vmatprep.subr.bf16.mxu0 0
  %137 = vmatpush2.bf16.msra.mxu0 0
  %138 = vmatprep.subr.bf16.mxu0 0
  %139 = vmatpush2.bf16.msra.mxu0 0
  %140 = vmatprep.subr.bf16.mxu0 0
  %141 = vmatpush2.bf16.msra.mxu0 0
  %142 = vmatprep.mubr.bf16.mxu0 0
  %143 = vmatmul.mubr.bf16.gmra.mxu0 %v108
  %v144 = vpop.f32.mrf.mxu0
  %v145 = vadd.f32 0.0, %v144
  %v146 = vpop.f32.mrf.mxu0
  %v147 = vpop.f32.mrf.mxu0
  %v148 = vadd.f32 0.0, %v147
  %v149 = vpop.f32.mrf.mxu0
  %150 = vdwg.mxu0
  %v151 = vadd.f32 %v91, %v145
  %v152 = vadd.f32 %v92, %v148
  %153 = vst.msk [vmem:[#allocation2] sm:$0xff] %vm44, %v151
  %154 = vst.msk [vmem:[#allocation2 + $0x8] sm:$0xff] %vm44, %v152
  // Predicated region
  $region26: #{transformer_forward.43} parent=0 // pred_check
    %p155 = pneg %p21
  $region27: #{transformer_forward.43} parent=0 // pred_check_branch
    %157 = sbr.rel (%p155) target = $region29
  $region28: #{transformer_forward.43} parent=0 // pred_region
    %v158 = vld [vmem:[#allocation2] sm:$0xff]
    %v159 = vld [vmem:[#allocation2 + $0x8] sm:$0xff]
    %v160 = vld [vmem:[%s4] sm:$0x1]
    %v162 = vlaneseq
    %v163 = vshrl.u32 %v162, 7
    %v164 = vsub.s32 0, %v163
    %v165 = vrot.slane %v160, %v164
    %v167 = vadd.f32 %v158, %v165
    %v168 = vadd.f32 %v159, %v165
    %169 = vst.msk [vmem:[%s5] sm:$0xff] %vm44, %v167
    %170 = vst.msk [vmem:[%s5 + $0x8] sm:$0xff] %vm44, %v168
  $region29: #{transformer_forward.43} parent=0 // pred_fallthru
    _
  // Predicated region
  $region30: #{transformer_forward.43} parent=0 // pred_check
    _
  $region31: #{transformer_forward.43} parent=0 // pred_check_branch
    %172 = sbr.rel (0) target = $region33
  $region32: #{transformer_forward.43} parent=0 // pred_region
    _
  $region33: #{transformer_forward.43} parent=0 // pred_fallthru
    _
  // Predicated region
  $region34: #{transformer_forward.43} parent=0 // pred_check
    _
  $region35: #{transformer_forward.43} parent=0 // pred_check_branch
    %174 = sbr.rel (0) target = $region37
  $region36: #{transformer_forward.43} parent=0 // pred_region
    _
  $region37: #{transformer_forward.43} parent=0 // pred_fallthru
    _

// kernel: transformer_forward.57
$region0: #{transformer_forward.57}
  #allocation0 [shape = 'u32[]', space=smem, size = 0x4, offset = 0x4, fixed_abs, tag = 'smem constant byte address 0x4 - core index']
  #allocation1 [shape = 'u32[144,128]{1,0:T(1,128)}', space=vmem, size = 0x12000, scoped, tag = 'internal scratch']
  #allocation2 [shape = 'f32[16,64]{1,0:T(8,128)}', space=vmem, size = 0x2000, scoped, tag = 'scratch operand']
  %s0 = inlined_call_operand.vmem [shape: f32[16,32], index: 0, kind: input, shape index: {}]
  %s1 = inlined_call_operand.vmem [shape: f32[32,64], index: 1, kind: input, shape index: {}]
  %s2 = inlined_call_operand.vmem [shape: f32[1,64], index: 2, kind: input, shape index: {}]
  %s3 = inlined_call_operand.vmem [shape: f32[16,64], index: 3, kind: output, shape index: {}]
  %s4 = sld [smem:[#allocation0]]
  $region30: #{transformer_forward.57} parent=0
    _
  %s6 = ssub.s32 1, %s4
  %s7 = scalar_select 0, %s6, %s4
  // Predicated region
  $region2: #{transformer_forward.57} parent=0 // pred_check
    _
  $region3: #{transformer_forward.57} parent=0 // pred_check_branch
    %9 = sbr.rel (0) target = $region5
  $region4: #{transformer_forward.57} parent=0 // pred_region
    _
  $region5: #{transformer_forward.57} parent=0 // pred_fallthru
    _
  // Predicated region
  $region6: #{transformer_forward.57} parent=0 // pred_check
    _
  $region7: #{transformer_forward.57} parent=0 // pred_check_branch
    %11 = sbr.rel (0) target = $region9
  $region8: #{transformer_forward.57} parent=0 // pred_region
    _
  $region9: #{transformer_forward.57} parent=0 // pred_fallthru
    _
  // Predicated region
  $region10: #{transformer_forward.57} parent=0 // pred_check
    _
  $region11: #{transformer_forward.57} parent=0 // pred_check_branch
    %13 = sbr.rel (0) target = $region13
  $region12: #{transformer_forward.57} parent=0 // pred_region
    _
  $region13: #{transformer_forward.57} parent=0 // pred_fallthru
    _
  %p15 = scmp.eq.s32.totalorder 0, 0
  // Predicated region
  $region14: #{transformer_forward.57} parent=0 // pred_check
    %p16 = pneg %p15
  $region15: #{transformer_forward.57} parent=0 // pred_check_branch
    %18 = sbr.rel (%p16) target = $region17
  $region16: #{transformer_forward.57} parent=0 // pred_region
    %vm19 = vcmask 523264
    %20 = vst.msk [vmem:[#allocation2] sm:$0xff] %vm19, 0.0
    %21 = vst.msk [vmem:[#allocation2 + $0x8] sm:$0xff] %vm19, 0.0
  $region17: #{transformer_forward.57} parent=0 // pred_fallthru
    _
  %v22 = vld [vmem:[#allocation2] sm:$0xff]
  %v23 = vld [vmem:[#allocation2 + $0x8] sm:$0xff]
  %v24 = vld [vmem:[%s0] sm:$0xff]
  %v25 = vld [vmem:[%s0 + $0x8] sm:$0xff]
  %v26 = vpack.c.bf16 %v25, %v24
  %v27 = vld [vmem:[%s1] sm:$0xff]
  %v28 = vld [vmem:[%s1 + $0x8] sm:$0xff]
  %v29 = vld [vmem:[%s1 + $0x10] sm:$0xff]
  %v30 = vld [vmem:[%s1 + $0x18] sm:$0xff]
  %v31 = vpack.c.bf16 %v28, %v27
  %v32 = vpack.c.bf16 %v30, %v29
  %vm33 = vcmask 261120
  %v35 = vsel %vm33, %v26, 0
  %37 = vmatprep.subr.bf16.mxu0 0
  %38 = vmatpush1.bf16.msra.mxu0 0
  %39 = vmatprep.subr.bf16.mxu0 0
  %40 = vmatpush1.bf16.msra.mxu0 0
  %41 = vmatprep.subr.bf16.mxu0 0
  %42 = vmatpush1.bf16.msra.mxu0 0
  %43 = vmatprep.subr.bf16.mxu0 0
  %44 = vmatpush1.bf16.msra.mxu0 0
  %45 = vmatprep.subr.bf16.mxu0 0
  %46 = vmatpush1.bf16.msra.mxu0 0
  %47 = vmatprep.subr.bf16.mxu0 0
  %48 = vmatpush1.bf16.msra.mxu0 0
  %49 = vmatprep.subr.bf16.mxu0 0
  %50 = vmatpush1.bf16.msra.mxu0 %v32
  %51 = vmatprep.subr.bf16.mxu0 0
  %52 = vmatpush1.bf16.msra.mxu0 %v31
  %53 = vmatprep.subr.bf16.mxu0 0
  %54 = vmatpush2.bf16.msra.mxu0 0
  %55 = vmatprep.subr.bf16.mxu0 0
  %56 = vmatpush2.bf16.msra.mxu0 0
  %57 = vmatprep.subr.bf16.mxu0 0
  %58 = vmatpush2.bf16.msra.mxu0 0
  %59 = vmatprep.subr.bf16.mxu0 0
  %60 = vmatpush2.bf16.msra.mxu0 0
  %61 = vmatprep.subr.bf16.mxu0 0
  %62 = vmatpush2.bf16.msra.mxu0 0
  %63 = vmatprep.subr.bf16.mxu0 0
  %64 = vmatpush2.bf16.msra.mxu0 0
  %65 = vmatprep.subr.bf16.mxu0 0
  %66 = vmatpush2.bf16.msra.mxu0 0
  %67 = vmatprep.subr.bf16.mxu0 0
  %68 = vmatpush2.bf16.msra.mxu0 0
  %69 = vmatprep.mubr.bf16.mxu0 0
  %70 = vmatmul.mubr.bf16.gmra.mxu0 %v35
  %v71 = vpop.f32.mrf.mxu0
  %v72 = vadd.f32 0.0, %v71
  %v73 = vpop.f32.mrf.mxu0
  %v74 = vpop.f32.mrf.mxu0
  %v75 = vadd.f32 0.0, %v74
  %v76 = vpop.f32.mrf.mxu0
  %77 = vdwg.mxu0
  %v78 = vadd.f32 %v22, %v72
  %v79 = vadd.f32 %v23, %v75
  %vm80 = vcmask 523264
  %81 = vst.msk [vmem:[#allocation2] sm:$0xff] %vm80, %v78
  %82 = vst.msk [vmem:[#allocation2 + $0x8] sm:$0xff] %vm80, %v79
  // Predicated region
  $region18: #{transformer_forward.57} parent=0 // pred_check
    %p83 = pneg %p15
  $region19: #{transformer_forward.57} parent=0 // pred_check_branch
    %85 = sbr.rel (%p83) target = $region21
  $region20: #{transformer_forward.57} parent=0 // pred_region
    %v86 = vld [vmem:[#allocation2] sm:$0xff]
    %v87 = vld [vmem:[#allocation2 + $0x8] sm:$0xff]
    %v88 = vld [vmem:[%s2] sm:$0x1]
    %v90 = vlaneseq
    %v91 = vshrl.u32 %v90, 7
    %v92 = vsub.s32 0, %v91
    %v93 = vrot.slane %v88, %v92
    %v95 = vadd.f32 %v86, %v93
    %v96 = vadd.f32 %v87, %v93
    %97 = vst.msk [vmem:[%s3] sm:$0xff] %vm80, %v95
    %98 = vst.msk [vmem:[%s3 + $0x8] sm:$0xff] %vm80, %v96
  $region21: #{transformer_forward.57} parent=0 // pred_fallthru
    _
  // Predicated region
  $region22: #{transformer_forward.57} parent=0 // pred_check
    _
  $region23: #{transformer_forward.57} parent=0 // pred_check_branch
    %100 = sbr.rel (0) target = $region25
  $region24: #{transformer_forward.57} parent=0 // pred_region
    _
  $region25: #{transformer_forward.57} parent=0 // pred_fallthru
    _
  // Predicated region
  $region26: #{transformer_forward.57} parent=0 // pred_check
    _
  $region27: #{transformer_forward.57} parent=0 // pred_check_branch
    %102 = sbr.rel (0) target = $region29
  $region28: #{transformer_forward.57} parent=0 // pred_region
    _
  $region29: #{transformer_forward.57} parent=0 // pred_fallthru
    _

// kernel: transformer_forward.58
$region0: #{transformer_forward.58}
  #allocation0 [shape = 'u32[]', space=smem, size = 0x4, offset = 0x4, fixed_abs, tag = 'smem constant byte address 0x4 - core index']
  #allocation1 [shape = 'u32[144,128]{1,0:T(1,128)}', space=vmem, size = 0x12000, scoped, tag = 'internal scratch']
  %s0 = inlined_call_operand.vmem [shape: f32[2,2,8,16], index: 0, kind: input, shape index: {}]
  %s1 = inlined_call_operand.vmem [shape: f32[2,2,8,16], index: 1, kind: input, shape index: {}]
  %s2 = inlined_call_operand.vmem [shape: f32[2,2,8,16], index: 2, kind: input, shape index: {}]
  %s3 = inlined_call_operand.vmem [shape: f32[2,2,8,16], index: 3, kind: output, shape index: {}]
  %s4 = sld [smem:[#allocation0]]
  $region45: #{transformer_forward.58} parent=0
    _
  %s6 = ssub.s32 1, %s4
  %s7 = scalar_select 0, %s6, %s4
  loop: start=0, step=1, limit=6
  $region2: #{transformer_forward.58} parent=0 // loop_pre_header
    _
  $region3: #{transformer_forward.58} parent=0 // loop_header
    %s9 = sphi 0, %s13
    %p10 = scmp.ge.s32.totalorder %s9, 6
    %s16 = sphi 0, %s28
    %s17 = sphi 0, %s24
    %s18 = sphi 0, %s16
    %s19 = sphi 0, %s17
    %s20 = sphi 0, %s18
    %s21 = sphi 0, %s19
    %s33 = sphi 0, %s35
    %s36 = sphi 0, %s33
    %s37 = sphi 0, %s36
    %s53 = sphi 0, %s37
    %s61 = sphi 0, %s63
    %s64 = sphi 0, %s61
    %s65 = sphi 0, %s64
    %s81 = sphi 0, %s65
    %s89 = sphi 0, %s91
    %s92 = sphi 0, %s89
    %s93 = sphi 0, %s92
    %s109 = sphi 0, %s93
    %s117 = sphi 0, %s119
    %s120 = sphi 0, %s117
    %s121 = sphi 0, %s120
    %s137 = sphi 0, %s121
  $region4: #{transformer_forward.58} parent=0 // loop_header_branch
    %12 = sbr.rel (%p10) target = $region8
  $region5: #{transformer_forward.58} parent=0 // loop_body
    %s14 = ssub.s32 %s9, 1
    %s15 = ssub.s32 %s9, 2
    %s22 = sadd.s32 1, %s17
    %p23 = scmp.ge.s32.totalorder %s22, 2
    %s24 = scalar_select %p23, 0, %s22
    %s25 = sadd.s32 1, %s16
    %s26 = scalar_select %p23, %s25, %s16
    %p27 = scmp.ge.s32.totalorder %s26, 2
    %s28 = scalar_select %p27, 0, %s26
    %s29 = ssub.s32 %s16, %s28
    %s30 = ssub.s32 %s17, %s24
    %s31 = sor.u32 %s29, %s30
    %p32 = scmp.eq.s32.totalorder %s31, 0
    %s34 = sadd.s32 %s33, 1
    %s35 = scalar_select %p32, %s33, %s34
    %p38 = pneg %p32
    %p39 = scmp.eq.s32.totalorder %s9, 3
    %p40 = por %p38, %p39
    %p41 = scmp.ne.s32.totalorder %s33, %s36
    %p42 = scmp.eq.s32.totalorder %s9, 0
    %p43 = por %p41, %p42
    %p44 = scmp.ne.s32.totalorder %s33, %s36
    %p45 = scmp.eq.s32.totalorder %s14, 3
    %p46 = por %p44, %p45
    %p47 = scmp.ne.s32.totalorder %s36, %s37
    %p48 = scmp.eq.s32.totalorder %s14, 0
    %p49 = por %p47, %p48
    %p50 = scmp.ne.s32.totalorder %s36, %s37
    %p51 = scmp.eq.s32.totalorder %s15, 3
    %p52 = por %p50, %p51
    %p54 = scmp.ne.s32.totalorder %s37, %s53
    %p55 = scmp.eq.s32.totalorder %s15, 0
    %p56 = por %p54, %p55
    %s57 = ssub.s32 %s16, %s28
    %s58 = ssub.s32 %s17, %s24
    %s59 = sor.u32 %s57, %s58
    %p60 = scmp.eq.s32.totalorder %s59, 0
    %s62 = sadd.s32 %s61, 1
    %s63 = scalar_select %p60, %s61, %s62
    %p66 = pneg %p60
    %p67 = scmp.eq.s32.totalorder %s9, 3
    %p68 = por %p66, %p67
    %p69 = scmp.ne.s32.totalorder %s61, %s64
    %p70 = scmp.eq.s32.totalorder %s9, 0
    %p71 = por %p69, %p70
    %p72 = scmp.ne.s32.totalorder %s61, %s64
    %p73 = scmp.eq.s32.totalorder %s14, 3
    %p74 = por %p72, %p73
    %p75 = scmp.ne.s32.totalorder %s64, %s65
    %p76 = scmp.eq.s32.totalorder %s14, 0
    %p77 = por %p75, %p76
    %p78 = scmp.ne.s32.totalorder %s64, %s65
    %p79 = scmp.eq.s32.totalorder %s15, 3
    %p80 = por %p78, %p79
    %p82 = scmp.ne.s32.totalorder %s65, %s81
    %p83 = scmp.eq.s32.totalorder %s15, 0
    %p84 = por %p82, %p83
    %s85 = ssub.s32 %s16, %s28
    %s86 = ssub.s32 %s17, %s24
    %s87 = sor.u32 %s85, %s86
    %p88 = scmp.eq.s32.totalorder %s87, 0
    %s90 = sadd.s32 %s89, 1
    %s91 = scalar_select %p88, %s89, %s90
    %p94 = pneg %p88
    %p95 = scmp.eq.s32.totalorder %s9, 3
    %p96 = por %p94, %p95
    %p97 = scmp.ne.s32.totalorder %s89, %s92
    %p98 = scmp.eq.s32.totalorder %s9, 0
    %p99 = por %p97, %p98
    %p100 = scmp.ne.s32.totalorder %s89, %s92
    %p101 = scmp.eq.s32.totalorder %s14, 3
    %p102 = por %p100, %p101
    %p103 = scmp.ne.s32.totalorder %s92, %s93
    %p104 = scmp.eq.s32.totalorder %s14, 0
    %p105 = por %p103, %p104
    %p106 = scmp.ne.s32.totalorder %s92, %s93
    %p107 = scmp.eq.s32.totalorder %s15, 3
    %p108 = por %p106, %p107
    %p110 = scmp.ne.s32.totalorder %s93, %s109
    %p111 = scmp.eq.s32.totalorder %s15, 0
    %p112 = por %p110, %p111
    %s113 = ssub.s32 %s16, %s28
    %s114 = ssub.s32 %s17, %s24
    %s115 = sor.u32 %s113, %s114
    %p116 = scmp.eq.s32.totalorder %s115, 0
    %s118 = sadd.s32 %s117, 1
    %s119 = scalar_select %p116, %s117, %s118
    %p122 = pneg %p116
    %p123 = scmp.eq.s32.totalorder %s9, 3
    %p124 = por %p122, %p123
    %p125 = scmp.ne.s32.totalorder %s117, %s120
    %p126 = scmp.eq.s32.totalorder %s9, 0
    %p127 = por %p125, %p126
    %p128 = scmp.ne.s32.totalorder %s117, %s120
    %p129 = scmp.eq.s32.totalorder %s14, 3
    %p130 = por %p128, %p129
    %p131 = scmp.ne.s32.totalorder %s120, %s121
    %p132 = scmp.eq.s32.totalorder %s14, 0
    %p133 = por %p131, %p132
    %p134 = scmp.ne.s32.totalorder %s120, %s121
    %p135 = scmp.eq.s32.totalorder %s15, 3
    %p136 = por %p134, %p135
    %p138 = scmp.ne.s32.totalorder %s121, %s137
    %p139 = scmp.eq.s32.totalorder %s15, 0
    %p140 = por %p138, %p139
    %p141 = scmp.le.s32.totalorder 1, %s9
    %p142 = scmp.lt.s32.totalorder %s9, 5
    %p143 = pnand %p141, %p142
    %p144 = pneg %p143
    // Predicated region
    $region9: #{transformer_forward.58} parent=5 // pred_check
      _
    $region10: #{transformer_forward.58} parent=5 // pred_check_branch
      %146 = sbr.rel (%p143) target = $region12
    $region11: #{transformer_forward.58} parent=5 // pred_region
      %s147 = ssub.s32 %s9, 1
    $region12: #{transformer_forward.58} parent=5 // pred_fallthru
      _
    %p148 = scmp.lt.s32.totalorder %s9, 4
    // Predicated region
    $region13: #{transformer_forward.58} parent=5 // pred_check
      %p149 = pneg %p148
    $region14: #{transformer_forward.58} parent=5 // pred_check_branch
      %151 = sbr.rel (%p149) target = $region16
    $region15: #{transformer_forward.58} parent=5 // pred_region
      // Predicated region
      $region17: #{transformer_forward.58} parent=15 // pred_check
        %p152 = pneg %p43
      $region18: #{transformer_forward.58} parent=15 // pred_check_branch
        %154 = sbr.rel (%p152) target = $region20
      $region19: #{transformer_forward.58} parent=15 // pred_region
        %p155 = scmp.lt.s32.totalorder %s16, 1
        %s156 = scalar_select %p155, %s16, 1
        %p157 = scmp.lt.s32.totalorder %s17, 1
        %s158 = scalar_select %p157, %s17, 1
        %s159 = smul.addr %s156, 2
        %s160 = sadd.s32 %s158, %s159
        %s161 = smul.addr %s160, 8
        %s162 = scalar_lea.vmem %s0, %s161
      $region20: #{transformer_forward.58} parent=15 // pred_fallthru
        _
      // Predicated region
      $region21: #{transformer_forward.58} parent=15 // pred_check
        %p163 = pneg %p71
      $region22: #{transformer_forward.58} parent=15 // pred_check_branch
        %165 = sbr.rel (%p163) target = $region24
      $region23: #{transformer_forward.58} parent=15 // pred_region
        %p166 = scmp.lt.s32.totalorder %s16, 1
        %s167 = scalar_select %p166, %s16, 1
        %p168 = scmp.lt.s32.totalorder %s17, 1
        %s169 = scalar_select %p168, %s17, 1
        %s170 = smul.addr %s167, 2
        %s171 = sadd.s32 %s169, %s170
        %s172 = smul.addr %s171, 8
        %s173 = scalar_lea.vmem %s1, %s172
      $region24: #{transformer_forward.58} parent=15 // pred_fallthru
        _
      // Predicated region
      $region25: #{transformer_forward.58} parent=15 // pred_check
        %p174 = pneg %p99
      $region26: #{transformer_forward.58} parent=15 // pred_check_branch
        %176 = sbr.rel (%p174) target = $region28
      $region27: #{transformer_forward.58} parent=15 // pred_region
        %p177 = scmp.lt.s32.totalorder %s16, 1
        %s178 = scalar_select %p177, %s16, 1
        %p179 = scmp.lt.s32.totalorder %s17, 1
        %s180 = scalar_select %p179, %s17, 1
        %s181 = smul.addr %s178, 2
        %s182 = sadd.s32 %s180, %s181
        %s183 = smul.addr %s182, 8
        %s184 = scalar_lea.vmem %s2, %s183
      $region28: #{transformer_forward.58} parent=15 // pred_fallthru
        _
    $region16: #{transformer_forward.58} parent=5 // pred_fallthru
      _
    %p185 = scmp.le.s32.totalorder 1, %s9
    %p186 = scmp.lt.s32.totalorder %s9, 5
    %p187 = pnand %p185, %p186
    %p188 = pneg %p187
    // Predicated region
    $region29: #{transformer_forward.58} parent=5 // pred_check
      _
    $region30: #{transformer_forward.58} parent=5 // pred_check_branch
      %190 = sbr.rel (%p187) target = $region32
    $region31: #{transformer_forward.58} parent=5 // pred_region
      %s191 = ssub.s32 %s9, 1
      %p192 = scmp.lt.s32.totalorder %s18, 1
      %s193 = scalar_select %p192, %s18, 1
      %p194 = scmp.lt.s32.totalorder %s19, 1
      %s195 = scalar_select %p194, %s19, 1
      %s196 = smul.addr %s193, 2
      %s197 = sadd.s32 %s195, %s196
      %s198 = smul.addr %s197, 8
      %s199 = scalar_lea.vmem %s0, %s198
      %p200 = pneg %p49
      %p201 = pneg %p46
      %p202 = scmp.lt.s32.totalorder %s18, 1
      %s203 = scalar_select %p202, %s18, 1
      %p204 = scmp.lt.s32.totalorder %s19, 1
      %s205 = scalar_select %p204, %s19, 1
      %s206 = smul.addr %s203, 2
      %s207 = sadd.s32 %s205, %s206
      %s208 = smul.addr %s207, 8
      %s209 = scalar_lea.vmem %s1, %s208
      %p210 = pneg %p77
      %p211 = pneg %p74
      %p212 = scmp.lt.s32.totalorder %s18, 1
      %s213 = scalar_select %p212, %s18, 1
      %p214 = scmp.lt.s32.totalorder %s19, 1
      %s215 = scalar_select %p214, %s19, 1
      %s216 = smul.addr %s213, 2
      %s217 = sadd.s32 %s215, %s216
      %s218 = smul.addr %s217, 8
      %s219 = scalar_lea.vmem %s2, %s218
      %p220 = pneg %p105
      %p221 = pneg %p102
      %p222 = pneg %p133
      %p223 = pneg %p130
      %p224 = scmp.lt.s32.totalorder %s18, 1
      %s225 = scalar_select %p224, %s18, 1
      %p226 = scmp.lt.s32.totalorder %s19, 1
      %s227 = scalar_select %p226, %s19, 1
      %s228 = smul.addr %s225, 2
      %s229 = sadd.s32 %s227, %s228
      %s230 = smul.addr %s229, 8
      %s231 = scalar_lea.vmem %s3, %s230
      %p232 = scmp.lt.s32.totalorder %s18, 1
      %s233 = scalar_select %p232, %s18, 1
      %p234 = scmp.lt.s32.totalorder %s19, 1
      %s235 = scalar_select %p234, %s19, 1
      %s236 = smul.addr %s233, 2
      %s237 = sadd.s32 %s235, %s236
      %s238 = smul.addr %s237, 8
      %s239 = scalar_lea.vmem %s0, %s238
      %p240 = scmp.lt.s32.totalorder %s18, 1
      %s241 = scalar_select %p240, %s18, 1
      %p242 = scmp.lt.s32.totalorder %s19, 1
      %s243 = scalar_select %p242, %s19, 1
      %s244 = smul.addr %s241, 2
      %s245 = sadd.s32 %s243, %s244
      %s246 = smul.addr %s245, 8
      %s247 = scalar_lea.vmem %s1, %s246
      %p248 = scmp.lt.s32.totalorder %s18, 1
      %s249 = scalar_select %p248, %s18, 1
      %p250 = scmp.lt.s32.totalorder %s19, 1
      %s251 = scalar_select %p250, %s19, 1
      %s252 = smul.addr %s249, 2
      %s253 = sadd.s32 %s251, %s252
      %s254 = smul.addr %s253, 8
      %s255 = scalar_lea.vmem %s2, %s254
      %p256 = scmp.lt.s32.totalorder %s18, 1
      %s257 = scalar_select %p256, %s18, 1
      %p258 = scmp.lt.s32.totalorder %s19, 1
      %s259 = scalar_select %p258, %s19, 1
      %s260 = smul.addr %s257, 2
      %s261 = sadd.s32 %s259, %s260
      %s262 = smul.addr %s261, 8
      %s263 = scalar_lea.vmem %s3, %s262
      %v265 = vld [vmem:[%s239] sm:$0xff]
      %v266 = vld [vmem:[%s247] sm:$0xff]
      %v267 = vld [vmem:[%s255] sm:$0xff]
      %v268 = vpack.c.bf16 %v265, %v265
      %v269 = vpack.c.bf16 %v266, %v266
      %vm270 = vcmask 130048
      %v272 = vsel %vm270, %v268, 0
      %v275 = vsel %vm270, %v269, 0
      %277 = vmatprep.subr.bf16.mxu0 0
      %278 = vmatpush1.bf16.xpose.msra.mxu0 0
      %279 = vmatprep.subr.bf16.mxu0 0
      %280 = vmatpush1.bf16.xpose.msra.mxu0 0
      %281 = vmatprep.subr.bf16.mxu0 0
      %282 = vmatpush1.bf16.xpose.msra.mxu0 0
      %283 = vmatprep.subr.bf16.mxu0 0
      %284 = vmatpush1.bf16.xpose.msra.mxu0 0
      %285 = vmatprep.subr.bf16.mxu0 0
      %286 = vmatpush1.bf16.xpose.msra.mxu0 0
      %287 = vmatprep.subr.bf16.mxu0 0
      %288 = vmatpush1.bf16.xpose.msra.mxu0 0
      %289 = vmatprep.subr.bf16.mxu0 0
      %290 = vmatpush1.bf16.xpose.msra.mxu0 0
      %291 = vmatprep.subr.bf16.mxu0 0
      %292 = vmatpush1.bf16.xpose.msra.mxu0 %v275
      %293 = vmatprep.subr.bf16.mxu0 0
      %294 = vmatpush2.bf16.xpose.msra.mxu0 0
      %295 = vmatprep.subr.bf16.mxu0 0
      %296 = vmatpush2.bf16.xpose.msra.mxu0 0
      %297 = vmatprep.subr.bf16.mxu0 0
      %298 = vmatpush2.bf16.xpose.msra.mxu0 0
      %299 = vmatprep.subr.bf16.mxu0 0
      %300 = vmatpush2.bf16.xpose.msra.mxu0 0
      %301 = vmatprep.subr.bf16.mxu0 0
      %302 = vmatpush2.bf16.xpose.msra.mxu0 0
      %303 = vmatprep.subr.bf16.mxu0 0
      %304 = vmatpush2.bf16.xpose.msra.mxu0 0
      %305 = vmatprep.subr.bf16.mxu0 0
      %306 = vmatpush2.bf16.xpose.msra.mxu0 0
      %307 = vmatprep.subr.bf16.mxu0 0
      %308 = vmatpush2.bf16.xpose.msra.mxu0 0
      %309 = vmatprep.mubr.bf16.mxu0 0
      %310 = vmatmul.mubr.bf16.gmra.mxu0 %v272
      %v311 = vpop.f32.mrf.mxu0
      %v312 = vadd.f32 0.0, %v311
      %v313 = vpop.f32.mrf.mxu0
      %v314 = vpop.f32.mrf.mxu0
      %v315 = vpop.f32.mrf.mxu0
      %316 = vdwg.mxu0
      %v317 = vmul.f32 %v312, 0.25
      %vm318 = vcmask 64512
      %v319 = vsel %vm318, %v317, -inf
      %320 = vmax.xlane.f32.xlu0 %v319
      %v321 = vpop.xlane.xlu0 %320
      %v322 = vsub.f32 %v317, %v321
      %v323 = vmul.f32 %v322, 1.442695
      %v324 = vpow.pop %v323
      %v325 = vsel %vm318, %v324, 0.0
      %326 = vadd.xlane.f32.xlu0 %v325
      %v327 = vpop.xlane.xlu0 %326
      %v328 = vrcp.pop %v327
      %v329 = vmul.f32 %v324, %v328
      %v330 = vpack.c.bf16 %v329, %v329
      %v331 = vpack.c.bf16 %v267, %v267
      %v333 = vsel %vm318, %v330, 0
      %vm335 = vcmask 1043456
      %v337 = vsel %vm335, %v331, 0
      %339 = vmatprep.subr.bf16.mxu0 0
      %340 = vmatpush1.bf16.msra.mxu0 0
      %341 = vmatprep.subr.bf16.mxu0 0
      %342 = vmatpush1.bf16.msra.mxu0 0
      %343 = vmatprep.subr.bf16.mxu0 0
      %344 = vmatpush1.bf16.msra.mxu0 0
      %345 = vmatprep.subr.bf16.mxu0 0
      %346 = vmatpush1.bf16.msra.mxu0 0
      %347 = vmatprep.subr.bf16.mxu0 0
      %348 = vmatpush1.bf16.msra.mxu0 0
      %349 = vmatprep.subr.bf16.mxu0 0
      %350 = vmatpush1.bf16.msra.mxu0 0
      %351 = vmatprep.subr.bf16.mxu0 0
      %352 = vmatpush1.bf16.msra.mxu0 0
      %353 = vmatprep.subr.bf16.mxu0 0
      %354 = vmatpush1.bf16.msra.mxu0 %v337
      %355 = vmatprep.subr.bf16.mxu0 0
      %356 = vmatpush2.bf16.msra.mxu0 0
      %357 = vmatprep.subr.bf16.mxu0 0
      %358 = vmatpush2.bf16.msra.mxu0 0
      %359 = vmatprep.subr.bf16.mxu0 0
      %360 = vmatpush2.bf16.msra.mxu0 0
      %361 = vmatprep.subr.bf16.mxu0 0
      %362 = vmatpush2.bf16.msra.mxu0 0
      %363 = vmatprep.subr.bf16.mxu0 0
      %364 = vmatpush2.bf16.msra.mxu0 0
      %365 = vmatprep.subr.bf16.mxu0 0
      %366 = vmatpush2.bf16.msra.mxu0 0
      %367 = vmatprep.subr.bf16.mxu0 0
      %368 = vmatpush2.bf16.msra.mxu0 0
      %369 = vmatprep.subr.bf16.mxu0 0
      %370 = vmatpush2.bf16.msra.mxu0 0
      %371 = vmatprep.mubr.bf16.mxu0 0
      %372 = vmatmul.mubr.bf16.gmra.mxu0 %v333
      %v373 = vpop.f32.mrf.mxu0
      %v374 = vadd.f32 0.0, %v373
      %v375 = vpop.f32.mrf.mxu0
      %v376 = vpop.f32.mrf.mxu0
      %v377 = vpop.f32.mrf.mxu0
      %378 = vdwg.mxu0
      %379 = vst.msk [vmem:[%s263] sm:$0xff] %vm270, %v374
      %p380 = scmp.lt.s32.totalorder %s18, 1
      %s381 = scalar_select %p380, %s18, 1
      %p382 = scmp.lt.s32.totalorder %s19, 1
      %s383 = scalar_select %p382, %s19, 1
      %s384 = smul.addr %s381, 2
      %s385 = sadd.s32 %s383, %s384
      %s386 = smul.addr %s385, 8
      %s387 = scalar_lea.vmem %s3, %s386
      // Predicated region
      $region33: #{transformer_forward.58} parent=31 // pred_check
        %p388 = pneg %p130
      $region34: #{transformer_forward.58} parent=31 // pred_check_branch
        %390 = sbr.rel (%p388) target = $region36
      $region35: #{transformer_forward.58} parent=31 // pred_region
        _
      $region36: #{transformer_forward.58} parent=31 // pred_fallthru
        _
    $region32: #{transformer_forward.58} parent=5 // pred_fallthru
      _
    %p391 = scmp.le.s32.totalorder 2, %s9
    // Predicated region
    $region37: #{transformer_forward.58} parent=5 // pred_check
      %p392 = pneg %p391
    $region38: #{transformer_forward.58} parent=5 // pred_check_branch
      %394 = sbr.rel (%p392) target = $region40
    $region39: #{transformer_forward.58} parent=5 // pred_region
      %s395 = ssub.s32 %s9, 2
      // Predicated region
      $region41: #{transformer_forward.58} parent=39 // pred_check
        %p396 = pneg %p136
      $region42: #{transformer_forward.58} parent=39 // pred_check_branch
        %398 = sbr.rel (%p396) target = $region44
      $region43: #{transformer_forward.58} parent=39 // pred_region
        %p399 = scmp.lt.s32.totalorder %s20, 1
        %s400 = scalar_select %p399, %s20, 1
        %p401 = scmp.lt.s32.totalorder %s21, 1
        %s402 = scalar_select %p401, %s21, 1
        %s403 = smul.addr %s400, 2
        %s404 = sadd.s32 %s402, %s403
        %s405 = smul.addr %s404, 8
        %s406 = scalar_lea.vmem %s3, %s405
      $region44: #{transformer_forward.58} parent=39 // pred_fallthru
        _
    $region40: #{transformer_forward.58} parent=5 // pred_fallthru
      _
  $region6: #{transformer_forward.58} parent=0 // loop_footer
    %s13 = sadd.s32 1, %s9
  $region7: #{transformer_forward.58} parent=0 // loop_footer_branch
    %8 = sbr.rel target = $region3
  $region8: #{transformer_forward.58} parent=0 // loop_exit
    _

// kernel: transformer_forward.75
$region0: #{transformer_forward.75}
  #allocation0 [shape = 'u32[]', space=smem, size = 0x4, offset = 0x4, fixed_abs, tag = 'smem constant byte address 0x4 - core index']
  #allocation1 [shape = 'u32[144,128]{1,0:T(1,128)}', space=vmem, size = 0x12000, scoped, tag = 'internal scratch']
  #allocation2 [shape = 'f32[16,16]{1,0:T(8,128)}', space=vmem, size = 0x2000, scoped, tag = 'scratch operand']
  %s0 = inlined_call_operand.vmem [shape: f32[16,32], index: 0, kind: input, shape index: {}]
  %s1 = inlined_call_operand.vmem [shape: f32[32,16], index: 1, kind: input, shape index: {}]
  %s2 = inlined_call_operand.vmem [shape: f32[1,16], index: 2, kind: input, shape index: {}]
  %s3 = inlined_call_operand.hbm [shape: f32[16,16], index: 3, kind: output, shape index: {}]
  %s4 = sld [smem:[#allocation0]]
  $region30: #{transformer_forward.75} parent=0
    _
  %s6 = ssub.s32 1, %s4
  %s7 = scalar_select 0, %s6, %s4
  $region1: #{transformer_forward.75} parent=0
    #allocation3 [shape = 'u8[8192]{0}', space=vmem, size = 0x2000, scoped, tag = 'output window, operand 0, single buffered']
    #allocation4 [shape = 's32[1]{0}', space=sflag, size = 0x4, scoped, tag = 'scoped memory for transformer_forward.75']
    %8 = vsyncpa [#allocation4], 0
    // Predicated region
    $region2: #{transformer_forward.75} parent=1 // pred_check
      _
    $region3: #{transformer_forward.75} parent=1 // pred_check_branch
      %10 = sbr.rel (0) target = $region5
    $region4: #{transformer_forward.75} parent=1 // pred_region
      _
    $region5: #{transformer_forward.75} parent=1 // pred_fallthru
      _
    // Predicated region
    $region6: #{transformer_forward.75} parent=1 // pred_check
      _
    $region7: #{transformer_forward.75} parent=1 // pred_check_branch
      %12 = sbr.rel (0) target = $region9
    $region8: #{transformer_forward.75} parent=1 // pred_region
      _
    $region9: #{transformer_forward.75} parent=1 // pred_fallthru
      _
    // Predicated region
    $region10: #{transformer_forward.75} parent=1 // pred_check
      _
    $region11: #{transformer_forward.75} parent=1 // pred_check_branch
      %14 = sbr.rel (0) target = $region13
    $region12: #{transformer_forward.75} parent=1 // pred_region
      _
    $region13: #{transformer_forward.75} parent=1 // pred_fallthru
      _
    %p16 = scmp.eq.s32.totalorder 0, 0
    // Predicated region
    $region14: #{transformer_forward.75} parent=1 // pred_check
      %p17 = pneg %p16
    $region15: #{transformer_forward.75} parent=1 // pred_check_branch
      %19 = sbr.rel (%p17) target = $region17
    $region16: #{transformer_forward.75} parent=1 // pred_region
      %vm20 = vcmask 130048
      %21 = vst.msk [vmem:[#allocation2] sm:$0xff] %vm20, 0.0
      %22 = vst.msk [vmem:[#allocation2 + $0x8] sm:$0xff] %vm20, 0.0
    $region17: #{transformer_forward.75} parent=1 // pred_fallthru
      _
    %v23 = vld [vmem:[#allocation2] sm:$0xff]
    %v24 = vld [vmem:[#allocation2 + $0x8] sm:$0xff]
    %v25 = vld [vmem:[%s0] sm:$0xff]
    %v26 = vld [vmem:[%s0 + $0x8] sm:$0xff]
    %v27 = vpack.c.bf16 %v26, %v25
    %v28 = vld [vmem:[%s1] sm:$0xff]
    %v29 = vld [vmem:[%s1 + $0x8] sm:$0xff]
    %v30 = vld [vmem:[%s1 + $0x10] sm:$0xff]
    %v31 = vld [vmem:[%s1 + $0x18] sm:$0xff]
    %v32 = vpack.c.bf16 %v29, %v28
    %v33 = vpack.c.bf16 %v31, %v30
    %vm34 = vcmask 261120
    %v36 = vsel %vm34, %v27, 0
    %38 = vmatprep.subr.bf16.mxu0 0
    %39 = vmatpush1.bf16.msra.mxu0 0
    %40 = vmatprep.subr.bf16.mxu0 0
    %41 = vmatpush1.bf16.msra.mxu0 0
    %42 = vmatprep.subr.bf16.mxu0 0
    %43 = vmatpush1.bf16.msra.mxu0 0
    %44 = vmatprep.subr.bf16.mxu0 0
    %45 = vmatpush1.bf16.msra.mxu0 0
    %46 = vmatprep.subr.bf16.mxu0 0
    %47 = vmatpush1.bf16.msra.mxu0 0
    %48 = vmatprep.subr.bf16.mxu0 0
    %49 = vmatpush1.bf16.msra.mxu0 0
    %50 = vmatprep.subr.bf16.mxu0 0
    %51 = vmatpush1.bf16.msra.mxu0 %v33
    %52 = vmatprep.subr.bf16.mxu0 0
    %53 = vmatpush1.bf16.msra.mxu0 %v32
    %54 = vmatprep.subr.bf16.mxu0 0
    %55 = vmatpush2.bf16.msra.mxu0 0
    %56 = vmatprep.subr.bf16.mxu0 0
    %57 = vmatpush2.bf16.msra.mxu0 0
    %58 = vmatprep.subr.bf16.mxu0 0
    %59 = vmatpush2.bf16.msra.mxu0 0
    %60 = vmatprep.subr.bf16.mxu0 0
    %61 = vmatpush2.bf16.msra.mxu0 0
    %62 = vmatprep.subr.bf16.mxu0 0
    %63 = vmatpush2.bf16.msra.mxu0 0
    %64 = vmatprep.subr.bf16.mxu0 0
    %65 = vmatpush2.bf16.msra.mxu0 0
    %66 = vmatprep.subr.bf16.mxu0 0
    %67 = vmatpush2.bf16.msra.mxu0 0
    %68 = vmatprep.subr.bf16.mxu0 0
    %69 = vmatpush2.bf16.msra.mxu0 0
    %70 = vmatprep.mubr.bf16.mxu0 0
    %71 = vmatmul.mubr.bf16.gmra.mxu0 %v36
    %v72 = vpop.f32.mrf.mxu0
    %v73 = vadd.f32 0.0, %v72
    %v74 = vpop.f32.mrf.mxu0
    %v75 = vpop.f32.mrf.mxu0
    %v76 = vadd.f32 0.0, %v75
    %v77 = vpop.f32.mrf.mxu0
    %78 = vdwg.mxu0
    %v79 = vadd.f32 %v23, %v73
    %v80 = vadd.f32 %v24, %v76
    %vm81 = vcmask 130048
    %82 = vst.msk [vmem:[#allocation2] sm:$0xff] %vm81, %v79
    %83 = vst.msk [vmem:[#allocation2 + $0x8] sm:$0xff] %vm81, %v80
    // Predicated region
    $region18: #{transformer_forward.75} parent=1 // pred_check
      %p84 = pneg %p16
    $region19: #{transformer_forward.75} parent=1 // pred_check_branch
      %86 = sbr.rel (%p84) target = $region21
    $region20: #{transformer_forward.75} parent=1 // pred_region
      %v87 = vld [vmem:[#allocation2] sm:$0xff]
      %v88 = vld [vmem:[#allocation2 + $0x8] sm:$0xff]
      %v89 = vld [vmem:[%s2] sm:$0x1]
      %v91 = vlaneseq
      %v92 = vshrl.u32 %v91, 7
      %v93 = vsub.s32 0, %v92
      %v94 = vrot.slane %v89, %v93
      %v96 = vadd.f32 %v87, %v94
      %v97 = vadd.f32 %v88, %v94
      %98 = vst.msk [vmem:[#allocation3] sm:$0xff] %vm81, %v96
      %99 = vst.msk [vmem:[#allocation3 + $0x8] sm:$0xff] %vm81, %v97
    $region21: #{transformer_forward.75} parent=1 // pred_fallthru
      _
    // Predicated region
    $region22: #{transformer_forward.75} parent=1 // pred_check
      _
    $region23: #{transformer_forward.75} parent=1 // pred_check_branch
      %101 = sbr.rel (0) target = $region25
    $region24: #{transformer_forward.75} parent=1 // pred_region
      %s103 = ssub.s32 256, 256
      %104 = vsyncadd [#allocation4], %s103
      %s105 = sshll.u32 [#allocation3], 4
      %s106 = int_to_ptr.vmem [resolvable:$true] %s105
      %111 = dma.vmem_to_hbm [thread:$0]  %s106, 256, %s3, [#allocation4], 128, 128, 8
    $region25: #{transformer_forward.75} parent=1 // pred_fallthru
      _
    // Predicated region
    $region26: #{transformer_forward.75} parent=1 // pred_check
      _
    $region27: #{transformer_forward.75} parent=1 // pred_check_branch
      %113 = sbr.rel (0) target = $region29
    $region28: #{transformer_forward.75} parent=1 // pred_region
      %114 = dma.done [#allocation4], 256
    $region29: #{transformer_forward.75} parent=1 // pred_fallthru
      _
    %115 = vsyncpa [#allocation4], 1

</llo_original>
